<compile_context>
chip_gen: v7x
topology: tpu7x:2x2x1
jax: 0.10.0
libtpu: 0.0.40
codegen_flags: <defaults>
</compile_context>

<pallas_src>
import functools

import jax
import jax.numpy as jnp
import numpy as np
from jax.experimental import pallas as pl
from jax.experimental.pallas import tpu as pltpu


# --------------------------------------------------------------------------
# small helpers
# --------------------------------------------------------------------------
def _round_up(n, m):
    return ((n + m - 1) // m) * m


def _sigmoid(x):
    # Single EUP push (tanh) instead of exp + reciprocal.
    return 0.5 * jnp.tanh(0.5 * x) + 0.5


def _vmem_capacity_bytes():
    """Physical VMEM per TensorCore; conservative fallback if unknown."""
    try:
        info = pltpu.get_tpu_info()
        cap = getattr(info, "vmem_capacity_bytes", None)
        if cap:
            return int(cap)
    except Exception:
        pass
    return 64 * 1024 * 1024          # v7x per-TC (the smallest of v5e/v6e/v7x)


def _num_tensorcores():
    try:
        return max(1, int(getattr(jax.devices()[0], "num_cores", 1) or 1))
    except Exception:
        return 1


def _const_spec(shape):
    """Constant-index BlockSpec, single-buffered when supported."""
    idx = lambda *_: tuple(0 for _ in shape)
    try:
        return pl.BlockSpec(shape, idx, pipeline_mode=pl.Buffered(1))
    except Exception:                 # older jax: no pipeline_mode kwarg
        return pl.BlockSpec(shape, idx)


# ---- weight packing: PyTorch gate order (i,f,g,o) -> (i,f,o,g), lane-pad ----
def _reorder_pad_w(w, H, Hp, in_dim, in_pad):
    """w: (4H, in).  Returns (in_pad, 4Hp) with zero padding per gate."""
    gates = (w[0 * H:1 * H], w[1 * H:2 * H], w[3 * H:4 * H], w[2 * H:3 * H])
    gates = [jnp.pad(g, ((0, Hp - H), (0, in_pad - in_dim))) for g in gates]
    return jnp.concatenate(gates, axis=0).T


def _reorder_pad_b(b, H, Hp):
    gates = (b[0 * H:1 * H], b[1 * H:2 * H], b[3 * H:4 * H], b[2 * H:3 * H])
    gates = [jnp.pad(g, (0, Hp - H)) for g in gates]
    return jnp.concatenate(gates).reshape(1, 4 * Hp)


# --------------------------------------------------------------------------
# Kernel 1: hoisted layer-1 input projection  pre_x1 = x @ W_ih1^T + b1
# (one big GEMM over all timesteps, row-tiled "parallel" grid)
# --------------------------------------------------------------------------
def _input_proj_kernel(x_ref, w_ref, b_ref, o_ref):
    o_ref[...] = (jnp.dot(x_ref[...], w_ref[...],
                          preferred_element_type=jnp.float32)
                  + b_ref[...]).astype(o_ref.dtype)


# --------------------------------------------------------------------------
# Kernel 2: the serial 2-layer LSTM recurrence.
# grid = (batch_blocks [parallel], time_chunks [arbitrary]); hidden/cell
# state lives in VMEM scratch and persists across time chunks.
# --------------------------------------------------------------------------
def _lstm_recurrence_kernel(px_ref, whh1_ref, w2i_ref, w2h_ref, b2_ref,
                            out_ref, h1_sc, c1_sc, h2_sc, c2_sc,
                            *, t_chunk, h1p, h2p, seq_len, mask_tail):
    t = pl.program_id(1)

    # -- init hidden / cell state at the first time chunk (PyTorch: zeros) --
    @pl.when(t == 0)
    def _():
        h1_sc[...] = jnp.zeros_like(h1_sc)
        c1_sc[...] = jnp.zeros_like(c1_sc)
        h2_sc[...] = jnp.zeros_like(h2_sc)
        c2_sc[...] = jnp.zeros_like(c2_sc)

    cdt = whh1_ref.dtype
    b2v = b2_ref[...]                 # hoisted out of the unrolled loop
    t0 = t * t_chunk                  # global index of this chunk's first step

    def step(j, carry):
        h1, c1, h2, c2 = carry

        # ---------------- LSTM layer 1 ----------------
        # input projection + bias were precomputed; only recurrent matmul left
        pre1 = (px_ref[j].astype(jnp.float32)
                + jnp.dot(h1.astype(cdt), whh1_ref[...],
                          preferred_element_type=jnp.float32))
        # gate order packed as (i, f, o, g): sigmoids contiguous, 128-aligned
        s1 = _sigmoid(pre1[:, :3 * h1p])
        g1 = jnp.tanh(pre1[:, 3 * h1p:])
        c1n = s1[:, h1p:2 * h1p] * c1 + s1[:, :h1p] * g1
        h1n = s1[:, 2 * h1p:3 * h1p] * jnp.tanh(c1n)

        # ---------------- LSTM layer 2 ----------------
        # two dots on separate weights (no VMEM pack on the critical path)
        pre2 = (jnp.dot(h1n.astype(cdt), w2i_ref[...],
                        preferred_element_type=jnp.float32)
                + jnp.dot(h2.astype(cdt), w2h_ref[...],
                          preferred_element_type=jnp.float32)
                + b2v)
        s2 = _sigmoid(pre2[:, :3 * h2p])
        g2 = jnp.tanh(pre2[:, 3 * h2p:])
        c2n = s2[:, h2p:2 * h2p] * c2 + s2[:, :h2p] * g2
        h2n = s2[:, 2 * h2p:3 * h2p] * jnp.tanh(c2n)

        if mask_tail:                 # static: only when T % T_CHUNK != 0
            valid = (t0 + j) < seq_len
            h1n = jnp.where(valid, h1n, h1)
            c1n = jnp.where(valid, c1n, c1)
            h2n = jnp.where(valid, h2n, h2)
            c2n = jnp.where(valid, c2n, c2)
        return h1n, c1n, h2n, c2n

    carry0 = (h1_sc[...], c1_sc[...], h2_sc[...], c2_sc[...])
    unroll = True if t_chunk <= 8 else 4
    h1, c1, h2, c2 = jax.lax.fori_loop(0, t_chunk, step, carry0, unroll=unroll)

    h1_sc[...] = h1
    c1_sc[...] = c1
    h2_sc[...] = h2
    c2_sc[...] = c2

    # -- emit final hidden state of layer 2 (== encoded_x) on the last chunk --
    @pl.when(t == pl.num_programs(1) - 1)
    def _():
        out_ref[...] = h2.astype(out_ref.dtype)


# --------------------------------------------------------------------------
# Wrapper
# --------------------------------------------------------------------------
@functools.partial(jax.jit, static_argnames=("compute_dtype",))
def encoder_forward(x, w_ih1, w_hh1, b_ih1, b_hh1,
                    w_ih2, w_hh2, b_ih2, b_hh2, *,
                    compute_dtype=jnp.bfloat16):
    """x: (B, T, D) float32 (batch_first, like PyTorch).

    Weights are in PyTorch nn.LSTM layout: w_ih* (4H, in), w_hh* (4H, H),
    biases (4H,), gate order (i, f, g, o).  Returns encoded_x (1, B, hidden).
    Matmul operands / streamed activations use `compute_dtype` (bf16 default);
    accumulation, gate math and cell state stay f32.
    """
    B, T, D = x.shape
    assert T >= 1, "Encoder requires at least one timestep"
    H1 = w_hh1.shape[1]                    # 2 * hidden_size
    H2 = w_hh2.shape[1]                    # hidden_size
    # Lane-align each gate so per-gate slices in the serial loop are aligned.
    # Padded channels stay exactly zero (zero weights/bias), so this is exact.
    H1p = _round_up(H1, 128)
    H2p = _round_up(H2, 128)
    G1p, G2p = 4 * H1p, 4 * H2p
    itemsize = jnp.dtype(compute_dtype).itemsize

    # ---- pack weights: gate reorder (i,f,o,g), per-gate padding, transpose ----
    wih1_p = _reorder_pad_w(w_ih1, H1, H1p, D, D).astype(compute_dtype)    # (D,   G1p)
    whh1_p = _reorder_pad_w(w_hh1, H1, H1p, H1, H1p).astype(compute_dtype) # (H1p, G1p)
    b1_p = _reorder_pad_b(b_ih1 + b_hh1, H1, H1p).astype(jnp.float32)      # (1,   G1p)
    w2i_p = _reorder_pad_w(w_ih2, H2, H2p, H1, H1p).astype(compute_dtype)  # (H1p, G2p)
    w2h_p = _reorder_pad_w(w_hh2, H2, H2p, H2, H2p).astype(compute_dtype)  # (H2p, G2p)
    b2_p = _reorder_pad_b(b_ih2 + b_hh2, H2, H2p).astype(jnp.float32)      # (1,   G2p)

    # ---- batch blocking: >=2 "parallel" blocks on multi-TensorCore parts ----
    vmem_cap = _vmem_capacity_bytes()
    n_cores = _num_tensorcores()
    B_pad0 = _round_up(B, 8)
    n_blocks = n_cores if (n_cores > 1 and B_pad0 >= 8 * n_cores) else 1
    B_BLK = min(256, _round_up(-(-B_pad0 // n_blocks), 8))
    B_pad = _round_up(B_pad0, B_BLK)

    # ---- VMEM-budgeted time chunk (px block is double-buffered) ----
    budget = int(vmem_cap * 0.6)
    fixed = ((H1p * G1p + H1p * G2p + H2p * G2p) * itemsize   # single-buffered weights
             + (G1p + G2p) * 4                                # biases
             + B_BLK * (2 * H1p + 2 * H2p) * 4                # f32 state scratch
             + 2 * B_BLK * H2p * 4)                           # double-buffered output
    px_step = 2 * B_BLK * G1p * itemsize                      # per-timestep px footprint
    T_CHUNK = int(max(1, min(T, 64, (budget - fixed) // max(px_step, 1))))
    T_pad = _round_up(T, T_CHUNK)
    n_t = T_pad // T_CHUNK
    n_b = B_pad // B_BLK
    vmem_limit = int(vmem_cap * 0.85)

    # ---- time-major, batch/time padded input ----
    x_tm = jnp.transpose(x, (1, 0, 2)).astype(compute_dtype)     # (T, B, D)
    x_tm = jnp.pad(x_tm, ((0, T_pad - T), (0, B_pad - B), (0, 0)))

    # ---- phase 1: hoisted layer-1 input projection (one big GEMM) ----
    rows = T_pad * B_pad
    x2d = x_tm.reshape(rows, D)

    # row tile that divides `rows` and fits the VMEM budget
    k = min(T_pad, max(1, 512 // B_pad))
    while T_pad % k:
        k -= 1
    while k > 1 and 2 * B_pad * k * G1p * itemsize > budget:
        k -= 1
        while T_pad % k:
            k -= 1
    TM = B_pad * k

    pre_x1 = pl.pallas_call(
        _input_proj_kernel,
        out_shape=jax.ShapeDtypeStruct((rows, G1p), compute_dtype),
        grid_spec=pltpu.PrefetchScalarGridSpec(
            num_scalar_prefetch=0,
            grid=(rows // TM,),
            in_specs=[
                pl.BlockSpec((TM, D), lambda r: (r, 0)),
                _const_spec((D, G1p)),           # W_ih1^T  (single-buffered)
                _const_spec((1, G1p)),           # b1
            ],
            out_specs=pl.BlockSpec((TM, G1p), lambda r: (r, 0)),
        ),
        compiler_params=pltpu.CompilerParams(
            dimension_semantics=("parallel",),
            vmem_limit_bytes=vmem_limit),
    )(x2d, wih1_p, b1_p)
    pre_x1 = pre_x1.reshape(T_pad, B_pad, G1p)

    # ---- phase 2: serial recurrence (time-chunked, batch-parallel) ----
    kernel2 = functools.partial(
        _lstm_recurrence_kernel,
        t_chunk=T_CHUNK, h1p=H1p, h2p=H2p,
        seq_len=T, mask_tail=(T_pad != T))

    encoded = pl.pallas_call(
        kernel2,
        out_shape=jax.ShapeDtypeStruct((B_pad, H2p), jnp.float32),
        grid_spec=pltpu.PrefetchScalarGridSpec(
            num_scalar_prefetch=0,
            grid=(n_b, n_t),
            in_specs=[
                pl.BlockSpec((T_CHUNK, B_BLK, G1p), lambda b, t: (t, b, 0)),
                _const_spec((H1p, G1p)),         # W_hh1^T  (single-buffered)
                _const_spec((H1p, G2p)),         # W_ih2^T
                _const_spec((H2p, G2p)),         # W_hh2^T
                _const_spec((1, G2p)),           # b2
            ],
            out_specs=pl.BlockSpec((B_BLK, H2p), lambda b, t: (b, 0)),
            scratch_shapes=[
                pltpu.VMEM((B_BLK, H1p), jnp.float32),   # h1
                pltpu.VMEM((B_BLK, H1p), jnp.float32),   # c1
                pltpu.VMEM((B_BLK, H2p), jnp.float32),   # h2
                pltpu.VMEM((B_BLK, H2p), jnp.float32),   # c2
            ],
        ),
        compiler_params=pltpu.CompilerParams(
            dimension_semantics=("parallel", "arbitrary"),
            vmem_limit_bytes=vmem_limit),
    )(pre_x1, whh1_p, w2i_p, w2h_p, b2_p)

    # (1, B, hidden_size) -- matches PyTorch h_n layout of LSTM2
    return encoded[:B, :H2][None, :, :]


# --------------------- pure-JAX reference (PyTorch semantics) ---------------------
def _lstm_layer_ref(x, w_ih, w_hh, b_ih, b_hh):
    B, T, D = x.shape
    H = w_hh.shape[1]

    def step(carry, x_t):
        h, c = carry
        pre = x_t @ w_ih.T + h @ w_hh.T + b_ih + b_hh
        i = jax.nn.sigmoid(pre[:, 0 * H:1 * H])
        f = jax.nn.sigmoid(pre[:, 1 * H:2 * H])
        g = jnp.tanh(pre[:, 2 * H:3 * H])
        o = jax.nn.sigmoid(pre[:, 3 * H:4 * H])
        c = f * c + i * g
        h = o * jnp.tanh(c)
        return (h, c), h

    init = (jnp.zeros((B, H), jnp.float32), jnp.zeros((B, H), jnp.float32))
    (h_n, _), ys = jax.lax.scan(step, init, jnp.transpose(x, (1, 0, 2)))
    return jnp.transpose(ys, (1, 0, 2)), h_n


def encoder_forward_ref(x, w_ih1, w_hh1, b_ih1, b_hh1,
                        w_ih2, w_hh2, b_ih2, b_hh2):
    y1, _ = _lstm_layer_ref(x, w_ih1, w_hh1, b_ih1, b_hh1)
    _, h_n2 = _lstm_layer_ref(y1, w_ih2, w_hh2, b_ih2, b_hh2)
    return h_n2[None, :, :]


if __name__ == "__main__":
    # Small shapes consistent with the module: (batch, seq, input_size)
    B, T, input_size, hidden_size = 2, 8, 8, 16
    H1, H2 = 2 * hidden_size, hidden_size       # LSTM1 hidden, LSTM2 hidden

    key = jax.random.PRNGKey(0)
    ks = jax.random.split(key, 9)
    s1 = 1.0 / np.sqrt(H1)
    s2 = 1.0 / np.sqrt(H2)

    # PyTorch nn.LSTM parameter layout: w_ih (4H, in), w_hh (4H, H), b (4H,),
    # gate order (i, f, g, o) along the 4H axis.
    w_ih1 = jax.random.uniform(ks[0], (4 * H1, input_size), jnp.float32, -s1, s1)
    w_hh1 = jax.random.uniform(ks[1], (4 * H1, H1), jnp.float32, -s1, s1)
    b_ih1 = jax.random.uniform(ks[2], (4 * H1,), jnp.float32, -s1, s1)
    b_hh1 = jax.random.uniform(ks[3], (4 * H1,), jnp.float32, -s1, s1)
    w_ih2 = jax.random.uniform(ks[4], (4 * H2, H1), jnp.float32, -s2, s2)
    w_hh2 = jax.random.uniform(ks[5], (4 * H2, H2), jnp.float32, -s2, s2)
    b_ih2 = jax.random.uniform(ks[6], (4 * H2,), jnp.float32, -s2, s2)
    b_hh2 = jax.random.uniform(ks[7], (4 * H2,), jnp.float32, -s2, s2)

    x = jax.random.normal(ks[8], (B, T, input_size), jnp.float32)

    ref = encoder_forward_ref(x, w_ih1, w_hh1, b_ih1, b_hh1,
                              w_ih2, w_hh2, b_ih2, b_hh2)

    # Exact path (f32 operands everywhere) -- tight check vs reference.
    out_f32 = encoder_forward(x, w_ih1, w_hh1, b_ih1, b_hh1,
                              w_ih2, w_hh2, b_ih2, b_hh2,
                              compute_dtype=jnp.float32)
    out_f32 = jax.block_until_ready(out_f32)
    assert out_f32.shape == (1, B, hidden_size)
    np.testing.assert_allclose(np.asarray(out_f32), np.asarray(ref),
                               rtol=1e-4, atol=1e-5)

    # Default production path (bf16 matmul operands / streamed activations,
    # f32 accumulation and gate/cell math) -- loose check.
    out_bf16 = jax.block_until_ready(
        encoder_forward(x, w_ih1, w_hh1, b_ih1, b_hh1,
                        w_ih2, w_hh2, b_ih2, b_hh2))
    assert out_bf16.shape == (1, B, hidden_size)
    np.testing.assert_allclose(np.asarray(out_bf16), np.asarray(ref),
                               rtol=1e-1, atol=1e-1)

    print("KERNEL_OK")
</pallas_src>

<mosaic_0001>
module attributes {stable_mosaic.version = 11 : i64} {
  func.func @_input_proj_kernel(%arg0: i32, %arg1: memref<64x8xf32, #tpu.memory_space<vmem>>, %arg2: memref<8x512xf32, #tpu.memory_space<vmem>>, %arg3: memref<1x512xf32, #tpu.memory_space<vmem>>, %arg4: memref<64x512xf32, #tpu.memory_space<vmem>>) attributes {dimension_semantics = [#tpu.dimension_semantics<parallel>], iteration_bounds = array<i64: 1>, scalar_prefetch = 0 : i64, scratch_operands = 0 : i64, tpu.core_type = #tpu.core_type<tc>, window_params = [{transform_indices = @transform_0, window_bounds = array<i64: 64, 8>}, {pipeline_mode = #tpu.pipeline_mode<synchronous>, transform_indices = @transform_1, window_bounds = array<i64: 8, 512>}, {pipeline_mode = #tpu.pipeline_mode<synchronous>, transform_indices = @transform_2, window_bounds = array<i64: 1, 512>}, {transform_indices = @transform_3, window_bounds = array<i64: 64, 512>}]} {
    %c0 = arith.constant 0 : index
    %c0_0 = arith.constant 0 : index
    %0 = vector.load %arg1[%c0, %c0_0] : memref<64x8xf32, #tpu.memory_space<vmem>>, vector<64x8xf32>
    %c0_1 = arith.constant 0 : index
    %c0_2 = arith.constant 0 : index
    %1 = vector.load %arg2[%c0_1, %c0_2] : memref<8x512xf32, #tpu.memory_space<vmem>>, vector<8x512xf32>
    %cst = arith.constant dense<0.000000e+00> : vector<64x512xf32>
    %2 = tpu.matmul %0, %1, %cst {dimension_numbers = #tpu.dot_dimension_numbers<[1], [0], [0], [1], [0, 0, 1, 1], [], []>} : vector<64x8xf32>, vector<8x512xf32>, vector<64x512xf32> -> vector<64x512xf32>
    %c0_3 = arith.constant 0 : index
    %c0_4 = arith.constant 0 : index
    %3 = vector.load %arg3[%c0_3, %c0_4] : memref<1x512xf32, #tpu.memory_space<vmem>>, vector<1x512xf32>
    %4 = vector.broadcast %3 : vector<1x512xf32> to vector<64x512xf32>
    %5 = arith.addf %2, %4 : vector<64x512xf32>
    %c0_5 = arith.constant 0 : index
    %c0_6 = arith.constant 0 : index
    %6 = vector.load %arg4[%c0_5, %c0_6] : memref<64x512xf32, #tpu.memory_space<vmem>>, vector<64x512xf32>
    tpu.vector_store %arg4[%c0_5, %c0_6], %5 {strides = array<i32>} : memref<64x512xf32, #tpu.memory_space<vmem>>, vector<64x512xf32>,
    return
  }
  func.func @transform_0(%arg0: i32) -> (i32, i32) {
    %c0_i32 = arith.constant 0 : i32
    %c0_i32_0 = arith.constant 0 : i32
    return %arg0, %c0_i32 : i32, i32
  }
  func.func @transform_1(%arg0: i32) -> (i32, i32) {
    %c0_i32 = arith.constant 0 : i32
    %c0_i32_0 = arith.constant 0 : i32
    %c0_i32_1 = arith.constant 0 : i32
    return %c0_i32, %c0_i32_0 : i32, i32
  }
  func.func @transform_2(%arg0: i32) -> (i32, i32) {
    %c0_i32 = arith.constant 0 : i32
    %c0_i32_0 = arith.constant 0 : i32
    %c0_i32_1 = arith.constant 0 : i32
    return %c0_i32, %c0_i32_0 : i32, i32
  }
  func.func @transform_3(%arg0: i32) -> (i32, i32) {
    %c0_i32 = arith.constant 0 : i32
    %c0_i32_0 = arith.constant 0 : i32
    return %arg0, %c0_i32 : i32, i32
  }
}

module attributes {stable_mosaic.version = 11 : i64} {
  func.func @_lstm_recurrence_kernel(%arg0: i32, %arg1: i32, %arg2: memref<8x8x512xf32, #tpu.memory_space<vmem>>, %arg3: memref<128x512xf32, #tpu.memory_space<vmem>>, %arg4: memref<128x512xf32, #tpu.memory_space<vmem>>, %arg5: memref<128x512xf32, #tpu.memory_space<vmem>>, %arg6: memref<1x512xf32, #tpu.memory_space<vmem>>, %arg7: memref<8x128xf32, #tpu.memory_space<vmem>>, %arg8: memref<8x128xf32, #tpu.memory_space<vmem>>, %arg9: memref<8x128xf32, #tpu.memory_space<vmem>>, %arg10: memref<8x128xf32, #tpu.memory_space<vmem>>, %arg11: memref<8x128xf32, #tpu.memory_space<vmem>>) attributes {dimension_semantics = [#tpu.dimension_semantics<parallel>, #tpu.dimension_semantics<arbitrary>], iteration_bounds = array<i64: 1, 1>, scalar_prefetch = 0 : i64, scratch_operands = 4 : i64, tpu.core_type = #tpu.core_type<tc>, window_params = [{transform_indices = @transform_0, window_bounds = array<i64: 8, 8, 512>}, {pipeline_mode = #tpu.pipeline_mode<synchronous>, transform_indices = @transform_1, window_bounds = array<i64: 128, 512>}, {pipeline_mode = #tpu.pipeline_mode<synchronous>, transform_indices = @transform_2, window_bounds = array<i64: 128, 512>}, {pipeline_mode = #tpu.pipeline_mode<synchronous>, transform_indices = @transform_3, window_bounds = array<i64: 128, 512>}, {pipeline_mode = #tpu.pipeline_mode<synchronous>, transform_indices = @transform_4, window_bounds = array<i64: 1, 512>}, {transform_indices = @transform_5, window_bounds = array<i64: 8, 128>}]} {
    %c0_i32 = arith.constant 0 : i32
    %0 = arith.cmpi eq, %arg1, %c0_i32 : i32
    %1 = arith.extui %0 : i1 to i32
    %c0_i32_0 = arith.constant 0 : i32
    %2 = arith.cmpi ne, %1, %c0_i32_0 : i32
    scf.if %2 {
      %cst_156 = arith.constant 0.000000e+00 : f32
      %407 = vector.broadcast %cst_156 : f32 to vector<8x128xf32>
      %c0_157 = arith.constant 0 : index
      %c0_158 = arith.constant 0 : index
      %408 = vector.load %arg8[%c0_157, %c0_158] : memref<8x128xf32, #tpu.memory_space<vmem>>, vector<8x128xf32>
      tpu.vector_store %arg8[%c0_157, %c0_158], %407 {strides = array<i32>} : memref<8x128xf32, #tpu.memory_space<vmem>>, vector<8x128xf32>,
      %cst_159 = arith.constant 0.000000e+00 : f32
      %409 = vector.broadcast %cst_159 : f32 to vector<8x128xf32>
      %c0_160 = arith.constant 0 : index
      %c0_161 = arith.constant 0 : index
      %410 = vector.load %arg9[%c0_160, %c0_161] : memref<8x128xf32, #tpu.memory_space<vmem>>, vector<8x128xf32>
      tpu.vector_store %arg9[%c0_160, %c0_161], %409 {strides = array<i32>} : memref<8x128xf32, #tpu.memory_space<vmem>>, vector<8x128xf32>,
      %cst_162 = arith.constant 0.000000e+00 : f32
      %411 = vector.broadcast %cst_162 : f32 to vector<8x128xf32>
      %c0_163 = arith.constant 0 : index
      %c0_164 = arith.constant 0 : index
      %412 = vector.load %arg10[%c0_163, %c0_164] : memref<8x128xf32, #tpu.memory_space<vmem>>, vector<8x128xf32>
      tpu.vector_store %arg10[%c0_163, %c0_164], %411 {strides = array<i32>} : memref<8x128xf32, #tpu.memory_space<vmem>>, vector<8x128xf32>,
      %cst_165 = arith.constant 0.000000e+00 : f32
      %413 = vector.broadcast %cst_165 : f32 to vector<8x128xf32>
      %c0_166 = arith.constant 0 : index
      %c0_167 = arith.constant 0 : index
      %414 = vector.load %arg11[%c0_166, %c0_167] : memref<8x128xf32, #tpu.memory_space<vmem>>, vector<8x128xf32>
      tpu.vector_store %arg11[%c0_166, %c0_167], %413 {strides = array<i32>} : memref<8x128xf32, #tpu.memory_space<vmem>>, vector<8x128xf32>,
    } else {
    }
    %c0 = arith.constant 0 : index
    %c0_1 = arith.constant 0 : index
    %3 = vector.load %arg6[%c0, %c0_1] : memref<1x512xf32, #tpu.memory_space<vmem>>, vector<1x512xf32>
    %c0_2 = arith.constant 0 : index
    %c0_3 = arith.constant 0 : index
    %4 = vector.load %arg8[%c0_2, %c0_3] : memref<8x128xf32, #tpu.memory_space<vmem>>, vector<8x128xf32>
    %c0_4 = arith.constant 0 : index
    %c0_5 = arith.constant 0 : index
    %5 = vector.load %arg9[%c0_4, %c0_5] : memref<8x128xf32, #tpu.memory_space<vmem>>, vector<8x128xf32>
    %c0_6 = arith.constant 0 : index
    %c0_7 = arith.constant 0 : index
    %6 = vector.load %arg10[%c0_6, %c0_7] : memref<8x128xf32, #tpu.memory_space<vmem>>, vector<8x128xf32>
    %c0_8 = arith.constant 0 : index
    %c0_9 = arith.constant 0 : index
    %7 = vector.load %arg11[%c0_8, %c0_9] : memref<8x128xf32, #tpu.memory_space<vmem>>, vector<8x128xf32>
    %c0_i32_10 = arith.constant 0 : i32
    %8 = arith.index_cast %c0_i32_10 : i32 to index
    %c0_11 = arith.constant 0 : index
    %c0_12 = arith.constant 0 : index
    %9 = vector.load %arg2[%8, %c0_11, %c0_12] : memref<8x8x512xf32, #tpu.memory_space<vmem>>, vector<1x8x512xf32>
    %10 = vector.shape_cast %9 : vector<1x8x512xf32> to vector<8x512xf32>
    %c0_13 = arith.constant 0 : index
    %c0_14 = arith.constant 0 : index
    %11 = vector.load %arg3[%c0_13, %c0_14] : memref<128x512xf32, #tpu.memory_space<vmem>>, vector<128x512xf32>
    %cst = arith.constant dense<0.000000e+00> : vector<8x512xf32>
    %12 = tpu.matmul %4, %11, %cst {dimension_numbers = #tpu.dot_dimension_numbers<[1], [0], [0], [1], [0, 0, 1, 1], [], []>} : vector<8x128xf32>, vector<128x512xf32>, vector<8x512xf32> -> vector<8x512xf32>
    %13 = arith.addf %10, %12 : vector<8x512xf32>
    %14 = vector.extract_strided_slice %13 {offsets = [0, 0], sizes = [8, 384], strides = [1, 1]} : vector<8x512xf32> to vector<8x384xf32>
    %cst_15 = arith.constant 5.000000e-01 : f32
    %15 = vector.broadcast %cst_15 : f32 to vector<8x384xf32>
    %16 = arith.mulf %15, %14 : vector<8x384xf32>
    %17 = math.tanh %16 : vector<8x384xf32>
    %cst_16 = arith.constant 5.000000e-01 : f32
    %18 = vector.broadcast %cst_16 : f32 to vector<8x384xf32>
    %19 = arith.mulf %18, %17 : vector<8x384xf32>
    %cst_17 = arith.constant 5.000000e-01 : f32
    %20 = vector.broadcast %cst_17 : f32 to vector<8x384xf32>
    %21 = arith.addf %19, %20 : vector<8x384xf32>
    %22 = vector.extract_strided_slice %13 {offsets = [0, 384], sizes = [8, 128], strides = [1, 1]} : vector<8x512xf32> to vector<8x128xf32>
    %23 = math.tanh %22 : vector<8x128xf32>
    %24 = vector.extract_strided_slice %21 {offsets = [0, 128], sizes = [8, 128], strides = [1, 1]} : vector<8x384xf32> to vector<8x128xf32>
    %25 = arith.mulf %24, %5 : vector<8x128xf32>
    %26 = vector.extract_strided_slice %21 {offsets = [0, 0], sizes = [8, 128], strides = [1, 1]} : vector<8x384xf32> to vector<8x128xf32>
    %27 = arith.mulf %26, %23 : vector<8x128xf32>
    %28 = arith.addf %25, %27 : vector<8x128xf32>
    %29 = vector.extract_strided_slice %21 {offsets = [0, 256], sizes = [8, 128], strides = [1, 1]} : vector<8x384xf32> to vector<8x128xf32>
    %30 = math.tanh %28 : vector<8x128xf32>
    %31 = arith.mulf %29, %30 : vector<8x128xf32>
    %c0_18 = arith.constant 0 : index
    %c0_19 = arith.constant 0 : index
    %32 = vector.load %arg4[%c0_18, %c0_19] : memref<128x512xf32, #tpu.memory_space<vmem>>, vector<128x512xf32>
    %cst_20 = arith.constant dense<0.000000e+00> : vector<8x512xf32>
    %33 = tpu.matmul %31, %32, %cst_20 {dimension_numbers = #tpu.dot_dimension_numbers<[1], [0], [0], [1], [0, 0, 1, 1], [], []>} : vector<8x128xf32>, vector<128x512xf32>, vector<8x512xf32> -> vector<8x512xf32>
    %c0_21 = arith.constant 0 : index
    %c0_22 = arith.constant 0 : index
    %34 = vector.load %arg5[%c0_21, %c0_22] : memref<128x512xf32, #tpu.memory_space<vmem>>, vector<128x512xf32>
    %cst_23 = arith.constant dense<0.000000e+00> : vector<8x512xf32>
    %35 = tpu.matmul %6, %34, %cst_23 {dimension_numbers = #tpu.dot_dimension_numbers<[1], [0], [0], [1], [0, 0, 1, 1], [], []>} : vector<8x128xf32>, vector<128x512xf32>, vector<8x512xf32> -> vector<8x512xf32>
    %36 = arith.addf %33, %35 : vector<8x512xf32>
    %37 = vector.broadcast %3 : vector<1x512xf32> to vector<8x512xf32>
    %38 = arith.addf %36, %37 : vector<8x512xf32>
    %39 = vector.extract_strided_slice %38 {offsets = [0, 0], sizes = [8, 384], strides = [1, 1]} : vector<8x512xf32> to vector<8x384xf32>
    %cst_24 = arith.constant 5.000000e-01 : f32
    %40 = vector.broadcast %cst_24 : f32 to vector<8x384xf32>
    %41 = arith.mulf %40, %39 : vector<8x384xf32>
    %42 = math.tanh %41 : vector<8x384xf32>
    %cst_25 = arith.constant 5.000000e-01 : f32
    %43 = vector.broadcast %cst_25 : f32 to vector<8x384xf32>
    %44 = arith.mulf %43, %42 : vector<8x384xf32>
    %cst_26 = arith.constant 5.000000e-01 : f32
    %45 = vector.broadcast %cst_26 : f32 to vector<8x384xf32>
    %46 = arith.addf %44, %45 : vector<8x384xf32>
    %47 = vector.extract_strided_slice %38 {offsets = [0, 384], sizes = [8, 128], strides = [1, 1]} : vector<8x512xf32> to vector<8x128xf32>
    %48 = math.tanh %47 : vector<8x128xf32>
    %49 = vector.extract_strided_slice %46 {offsets = [0, 128], sizes = [8, 128], strides = [1, 1]} : vector<8x384xf32> to vector<8x128xf32>
    %50 = arith.mulf %49, %7 : vector<8x128xf32>
    %51 = vector.extract_strided_slice %46 {offsets = [0, 0], sizes = [8, 128], strides = [1, 1]} : vector<8x384xf32> to vector<8x128xf32>
    %52 = arith.mulf %51, %48 : vector<8x128xf32>
    %53 = arith.addf %50, %52 : vector<8x128xf32>
    %54 = vector.extract_strided_slice %46 {offsets = [0, 256], sizes = [8, 128], strides = [1, 1]} : vector<8x384xf32> to vector<8x128xf32>
    %55 = math.tanh %53 : vector<8x128xf32>
    %56 = arith.mulf %54, %55 : vector<8x128xf32>
    %c1_i32 = arith.constant 1 : i32
    %57 = arith.index_cast %c1_i32 : i32 to index
    %c0_27 = arith.constant 0 : index
    %c0_28 = arith.constant 0 : index
    %58 = vector.load %arg2[%57, %c0_27, %c0_28] : memref<8x8x512xf32, #tpu.memory_space<vmem>>, vector<1x8x512xf32>
    %59 = vector.shape_cast %58 : vector<1x8x512xf32> to vector<8x512xf32>
    %c0_29 = arith.constant 0 : index
    %c0_30 = arith.constant 0 : index
    %60 = vector.load %arg3[%c0_29, %c0_30] : memref<128x512xf32, #tpu.memory_space<vmem>>, vector<128x512xf32>
    %cst_31 = arith.constant dense<0.000000e+00> : vector<8x512xf32>
    %61 = tpu.matmul %31, %60, %cst_31 {dimension_numbers = #tpu.dot_dimension_numbers<[1], [0], [0], [1], [0, 0, 1, 1], [], []>} : vector<8x128xf32>, vector<128x512xf32>, vector<8x512xf32> -> vector<8x512xf32>
    %62 = arith.addf %59, %61 : vector<8x512xf32>
    %63 = vector.extract_strided_slice %62 {offsets = [0, 0], sizes = [8, 384], strides = [1, 1]} : vector<8x512xf32> to vector<8x384xf32>
    %cst_32 = arith.constant 5.000000e-01 : f32
    %64 = vector.broadcast %cst_32 : f32 to vector<8x384xf32>
    %65 = arith.mulf %64, %63 : vector<8x384xf32>
    %66 = math.tanh %65 : vector<8x384xf32>
    %cst_33 = arith.constant 5.000000e-01 : f32
    %67 = vector.broadcast %cst_33 : f32 to vector<8x384xf32>
    %68 = arith.mulf %67, %66 : vector<8x384xf32>
    %cst_34 = arith.constant 5.000000e-01 : f32
    %69 = vector.broadcast %cst_34 : f32 to vector<8x384xf32>
    %70 = arith.addf %68, %69 : vector<8x384xf32>
    %71 = vector.extract_strided_slice %62 {offsets = [0, 384], sizes = [8, 128], strides = [1, 1]} : vector<8x512xf32> to vector<8x128xf32>
    %72 = math.tanh %71 : vector<8x128xf32>
    %73 = vector.extract_strided_slice %70 {offsets = [0, 128], sizes = [8, 128], strides = [1, 1]} : vector<8x384xf32> to vector<8x128xf32>
    %74 = arith.mulf %73, %28 : vector<8x128xf32>
    %75 = vector.extract_strided_slice %70 {offsets = [0, 0], sizes = [8, 128], strides = [1, 1]} : vector<8x384xf32> to vector<8x128xf32>
    %76 = arith.mulf %75, %72 : vector<8x128xf32>
    %77 = arith.addf %74, %76 : vector<8x128xf32>
    %78 = vector.extract_strided_slice %70 {offsets = [0, 256], sizes = [8, 128], strides = [1, 1]} : vector<8x384xf32> to vector<8x128xf32>
    %79 = math.tanh %77 : vector<8x128xf32>
    %80 = arith.mulf %78, %79 : vector<8x128xf32>
    %c0_35 = arith.constant 0 : index
    %c0_36 = arith.constant 0 : index
    %81 = vector.load %arg4[%c0_35, %c0_36] : memref<128x512xf32, #tpu.memory_space<vmem>>, vector<128x512xf32>
    %cst_37 = arith.constant dense<0.000000e+00> : vector<8x512xf32>
    %82 = tpu.matmul %80, %81, %cst_37 {dimension_numbers = #tpu.dot_dimension_numbers<[1], [0], [0], [1], [0, 0, 1, 1], [], []>} : vector<8x128xf32>, vector<128x512xf32>, vector<8x512xf32> -> vector<8x512xf32>
    %c0_38 = arith.constant 0 : index
    %c0_39 = arith.constant 0 : index
    %83 = vector.load %arg5[%c0_38, %c0_39] : memref<128x512xf32, #tpu.memory_space<vmem>>, vector<128x512xf32>
    %cst_40 = arith.constant dense<0.000000e+00> : vector<8x512xf32>
    %84 = tpu.matmul %56, %83, %cst_40 {dimension_numbers = #tpu.dot_dimension_numbers<[1], [0], [0], [1], [0, 0, 1, 1], [], []>} : vector<8x128xf32>, vector<128x512xf32>, vector<8x512xf32> -> vector<8x512xf32>
    %85 = arith.addf %82, %84 : vector<8x512xf32>
    %86 = vector.broadcast %3 : vector<1x512xf32> to vector<8x512xf32>
    %87 = arith.addf %85, %86 : vector<8x512xf32>
    %88 = vector.extract_strided_slice %87 {offsets = [0, 0], sizes = [8, 384], strides = [1, 1]} : vector<8x512xf32> to vector<8x384xf32>
    %cst_41 = arith.constant 5.000000e-01 : f32
    %89 = vector.broadcast %cst_41 : f32 to vector<8x384xf32>
    %90 = arith.mulf %89, %88 : vector<8x384xf32>
    %91 = math.tanh %90 : vector<8x384xf32>
    %cst_42 = arith.constant 5.000000e-01 : f32
    %92 = vector.broadcast %cst_42 : f32 to vector<8x384xf32>
    %93 = arith.mulf %92, %91 : vector<8x384xf32>
    %cst_43 = arith.constant 5.000000e-01 : f32
    %94 = vector.broadcast %cst_43 : f32 to vector<8x384xf32>
    %95 = arith.addf %93, %94 : vector<8x384xf32>
    %96 = vector.extract_strided_slice %87 {offsets = [0, 384], sizes = [8, 128], strides = [1, 1]} : vector<8x512xf32> to vector<8x128xf32>
    %97 = math.tanh %96 : vector<8x128xf32>
    %98 = vector.extract_strided_slice %95 {offsets = [0, 128], sizes = [8, 128], strides = [1, 1]} : vector<8x384xf32> to vector<8x128xf32>
    %99 = arith.mulf %98, %53 : vector<8x128xf32>
    %100 = vector.extract_strided_slice %95 {offsets = [0, 0], sizes = [8, 128], strides = [1, 1]} : vector<8x384xf32> to vector<8x128xf32>
    %101 = arith.mulf %100, %97 : vector<8x128xf32>
    %102 = arith.addf %99, %101 : vector<8x128xf32>
    %103 = vector.extract_strided_slice %95 {offsets = [0, 256], sizes = [8, 128], strides = [1, 1]} : vector<8x384xf32> to vector<8x128xf32>
    %104 = math.tanh %102 : vector<8x128xf32>
    %105 = arith.mulf %103, %104 : vector<8x128xf32>
    %c2_i32 = arith.constant 2 : i32
    %106 = arith.index_cast %c2_i32 : i32 to index
    %c0_44 = arith.constant 0 : index
    %c0_45 = arith.constant 0 : index
    %107 = vector.load %arg2[%106, %c0_44, %c0_45] : memref<8x8x512xf32, #tpu.memory_space<vmem>>, vector<1x8x512xf32>
    %108 = vector.shape_cast %107 : vector<1x8x512xf32> to vector<8x512xf32>
    %c0_46 = arith.constant 0 : index
    %c0_47 = arith.constant 0 : index
    %109 = vector.load %arg3[%c0_46, %c0_47] : memref<128x512xf32, #tpu.memory_space<vmem>>, vector<128x512xf32>
    %cst_48 = arith.constant dense<0.000000e+00> : vector<8x512xf32>
    %110 = tpu.matmul %80, %109, %cst_48 {dimension_numbers = #tpu.dot_dimension_numbers<[1], [0], [0], [1], [0, 0, 1, 1], [], []>} : vector<8x128xf32>, vector<128x512xf32>, vector<8x512xf32> -> vector<8x512xf32>
    %111 = arith.addf %108, %110 : vector<8x512xf32>
    %112 = vector.extract_strided_slice %111 {offsets = [0, 0], sizes = [8, 384], strides = [1, 1]} : vector<8x512xf32> to vector<8x384xf32>
    %cst_49 = arith.constant 5.000000e-01 : f32
    %113 = vector.broadcast %cst_49 : f32 to vector<8x384xf32>
    %114 = arith.mulf %113, %112 : vector<8x384xf32>
    %115 = math.tanh %114 : vector<8x384xf32>
    %cst_50 = arith.constant 5.000000e-01 : f32
    %116 = vector.broadcast %cst_50 : f32 to vector<8x384xf32>
    %117 = arith.mulf %116, %115 : vector<8x384xf32>
    %cst_51 = arith.constant 5.000000e-01 : f32
    %118 = vector.broadcast %cst_51 : f32 to vector<8x384xf32>
    %119 = arith.addf %117, %118 : vector<8x384xf32>
    %120 = vector.extract_strided_slice %111 {offsets = [0, 384], sizes = [8, 128], strides = [1, 1]} : vector<8x512xf32> to vector<8x128xf32>
    %121 = math.tanh %120 : vector<8x128xf32>
    %122 = vector.extract_strided_slice %119 {offsets = [0, 128], sizes = [8, 128], strides = [1, 1]} : vector<8x384xf32> to vector<8x128xf32>
    %123 = arith.mulf %122, %77 : vector<8x128xf32>
    %124 = vector.extract_strided_slice %119 {offsets = [0, 0], sizes = [8, 128], strides = [1, 1]} : vector<8x384xf32> to vector<8x128xf32>
    %125 = arith.mulf %124, %121 : vector<8x128xf32>
    %126 = arith.addf %123, %125 : vector<8x128xf32>
    %127 = vector.extract_strided_slice %119 {offsets = [0, 256], sizes = [8, 128], strides = [1, 1]} : vector<8x384xf32> to vector<8x128xf32>
    %128 = math.tanh %126 : vector<8x128xf32>
    %129 = arith.mulf %127, %128 : vector<8x128xf32>
    %c0_52 = arith.constant 0 : index
    %c0_53 = arith.constant 0 : index
    %130 = vector.load %arg4[%c0_52, %c0_53] : memref<128x512xf32, #tpu.memory_space<vmem>>, vector<128x512xf32>
    %cst_54 = arith.constant dense<0.000000e+00> : vector<8x512xf32>
    %131 = tpu.matmul %129, %130, %cst_54 {dimension_numbers = #tpu.dot_dimension_numbers<[1], [0], [0], [1], [0, 0, 1, 1], [], []>} : vector<8x128xf32>, vector<128x512xf32>, vector<8x512xf32> -> vector<8x512xf32>
    %c0_55 = arith.constant 0 : index
    %c0_56 = arith.constant 0 : index
    %132 = vector.load %arg5[%c0_55, %c0_56] : memref<128x512xf32, #tpu.memory_space<vmem>>, vector<128x512xf32>
    %cst_57 = arith.constant dense<0.000000e+00> : vector<8x512xf32>
    %133 = tpu.matmul %105, %132, %cst_57 {dimension_numbers = #tpu.dot_dimension_numbers<[1], [0], [0], [1], [0, 0, 1, 1], [], []>} : vector<8x128xf32>, vector<128x512xf32>, vector<8x512xf32> -> vector<8x512xf32>
    %134 = arith.addf %131, %133 : vector<8x512xf32>
    %135 = vector.broadcast %3 : vector<1x512xf32> to vector<8x512xf32>
    %136 = arith.addf %134, %135 : vector<8x512xf32>
    %137 = vector.extract_strided_slice %136 {offsets = [0, 0], sizes = [8, 384], strides = [1, 1]} : vector<8x512xf32> to vector<8x384xf32>
    %cst_58 = arith.constant 5.000000e-01 : f32
    %138 = vector.broadcast %cst_58 : f32 to vector<8x384xf32>
    %139 = arith.mulf %138, %137 : vector<8x384xf32>
    %140 = math.tanh %139 : vector<8x384xf32>
    %cst_59 = arith.constant 5.000000e-01 : f32
    %141 = vector.broadcast %cst_59 : f32 to vector<8x384xf32>
    %142 = arith.mulf %141, %140 : vector<8x384xf32>
    %cst_60 = arith.constant 5.000000e-01 : f32
    %143 = vector.broadcast %cst_60 : f32 to vector<8x384xf32>
    %144 = arith.addf %142, %143 : vector<8x384xf32>
    %145 = vector.extract_strided_slice %136 {offsets = [0, 384], sizes = [8, 128], strides = [1, 1]} : vector<8x512xf32> to vector<8x128xf32>
    %146 = math.tanh %145 : vector<8x128xf32>
    %147 = vector.extract_strided_slice %144 {offsets = [0, 128], sizes = [8, 128], strides = [1, 1]} : vector<8x384xf32> to vector<8x128xf32>
    %148 = arith.mulf %147, %102 : vector<8x128xf32>
    %149 = vector.extract_strided_slice %144 {offsets = [0, 0], sizes = [8, 128], strides = [1, 1]} : vector<8x384xf32> to vector<8x128xf32>
    %150 = arith.mulf %149, %146 : vector<8x128xf32>
    %151 = arith.addf %148, %150 : vector<8x128xf32>
    %152 = vector.extract_strided_slice %144 {offsets = [0, 256], sizes = [8, 128], strides = [1, 1]} : vector<8x384xf32> to vector<8x128xf32>
    %153 = math.tanh %151 : vector<8x128xf32>
    %154 = arith.mulf %152, %153 : vector<8x128xf32>
    %c3_i32 = arith.constant 3 : i32
    %155 = arith.index_cast %c3_i32 : i32 to index
    %c0_61 = arith.constant 0 : index
    %c0_62 = arith.constant 0 : index
    %156 = vector.load %arg2[%155, %c0_61, %c0_62] : memref<8x8x512xf32, #tpu.memory_space<vmem>>, vector<1x8x512xf32>
    %157 = vector.shape_cast %156 : vector<1x8x512xf32> to vector<8x512xf32>
    %c0_63 = arith.constant 0 : index
    %c0_64 = arith.constant 0 : index
    %158 = vector.load %arg3[%c0_63, %c0_64] : memref<128x512xf32, #tpu.memory_space<vmem>>, vector<128x512xf32>
    %cst_65 = arith.constant dense<0.000000e+00> : vector<8x512xf32>
    %159 = tpu.matmul %129, %158, %cst_65 {dimension_numbers = #tpu.dot_dimension_numbers<[1], [0], [0], [1], [0, 0, 1, 1], [], []>} : vector<8x128xf32>, vector<128x512xf32>, vector<8x512xf32> -> vector<8x512xf32>
    %160 = arith.addf %157, %159 : vector<8x512xf32>
    %161 = vector.extract_strided_slice %160 {offsets = [0, 0], sizes = [8, 384], strides = [1, 1]} : vector<8x512xf32> to vector<8x384xf32>
    %cst_66 = arith.constant 5.000000e-01 : f32
    %162 = vector.broadcast %cst_66 : f32 to vector<8x384xf32>
    %163 = arith.mulf %162, %161 : vector<8x384xf32>
    %164 = math.tanh %163 : vector<8x384xf32>
    %cst_67 = arith.constant 5.000000e-01 : f32
    %165 = vector.broadcast %cst_67 : f32 to vector<8x384xf32>
    %166 = arith.mulf %165, %164 : vector<8x384xf32>
    %cst_68 = arith.constant 5.000000e-01 : f32
    %167 = vector.broadcast %cst_68 : f32 to vector<8x384xf32>
    %168 = arith.addf %166, %167 : vector<8x384xf32>
    %169 = vector.extract_strided_slice %160 {offsets = [0, 384], sizes = [8, 128], strides = [1, 1]} : vector<8x512xf32> to vector<8x128xf32>
    %170 = math.tanh %169 : vector<8x128xf32>
    %171 = vector.extract_strided_slice %168 {offsets = [0, 128], sizes = [8, 128], strides = [1, 1]} : vector<8x384xf32> to vector<8x128xf32>
    %172 = arith.mulf %171, %126 : vector<8x128xf32>
    %173 = vector.extract_strided_slice %168 {offsets = [0, 0], sizes = [8, 128], strides = [1, 1]} : vector<8x384xf32> to vector<8x128xf32>
    %174 = arith.mulf %173, %170 : vector<8x128xf32>
    %175 = arith.addf %172, %174 : vector<8x128xf32>
    %176 = vector.extract_strided_slice %168 {offsets = [0, 256], sizes = [8, 128], strides = [1, 1]} : vector<8x384xf32> to vector<8x128xf32>
    %177 = math.tanh %175 : vector<8x128xf32>
    %178 = arith.mulf %176, %177 : vector<8x128xf32>
    %c0_69 = arith.constant 0 : index
    %c0_70 = arith.constant 0 : index
    %179 = vector.load %arg4[%c0_69, %c0_70] : memref<128x512xf32, #tpu.memory_space<vmem>>, vector<128x512xf32>
    %cst_71 = arith.constant dense<0.000000e+00> : vector<8x512xf32>
    %180 = tpu.matmul %178, %179, %cst_71 {dimension_numbers = #tpu.dot_dimension_numbers<[1], [0], [0], [1], [0, 0, 1, 1], [], []>} : vector<8x128xf32>, vector<128x512xf32>, vector<8x512xf32> -> vector<8x512xf32>
    %c0_72 = arith.constant 0 : index
    %c0_73 = arith.constant 0 : index
    %181 = vector.load %arg5[%c0_72, %c0_73] : memref<128x512xf32, #tpu.memory_space<vmem>>, vector<128x512xf32>
    %cst_74 = arith.constant dense<0.000000e+00> : vector<8x512xf32>
    %182 = tpu.matmul %154, %181, %cst_74 {dimension_numbers = #tpu.dot_dimension_numbers<[1], [0], [0], [1], [0, 0, 1, 1], [], []>} : vector<8x128xf32>, vector<128x512xf32>, vector<8x512xf32> -> vector<8x512xf32>
    %183 = arith.addf %180, %182 : vector<8x512xf32>
    %184 = vector.broadcast %3 : vector<1x512xf32> to vector<8x512xf32>
    %185 = arith.addf %183, %184 : vector<8x512xf32>
    %186 = vector.extract_strided_slice %185 {offsets = [0, 0], sizes = [8, 384], strides = [1, 1]} : vector<8x512xf32> to vector<8x384xf32>
    %cst_75 = arith.constant 5.000000e-01 : f32
    %187 = vector.broadcast %cst_75 : f32 to vector<8x384xf32>
    %188 = arith.mulf %187, %186 : vector<8x384xf32>
    %189 = math.tanh %188 : vector<8x384xf32>
    %cst_76 = arith.constant 5.000000e-01 : f32
    %190 = vector.broadcast %cst_76 : f32 to vector<8x384xf32>
    %191 = arith.mulf %190, %189 : vector<8x384xf32>
    %cst_77 = arith.constant 5.000000e-01 : f32
    %192 = vector.broadcast %cst_77 : f32 to vector<8x384xf32>
    %193 = arith.addf %191, %192 : vector<8x384xf32>
    %194 = vector.extract_strided_slice %185 {offsets = [0, 384], sizes = [8, 128], strides = [1, 1]} : vector<8x512xf32> to vector<8x128xf32>
    %195 = math.tanh %194 : vector<8x128xf32>
    %196 = vector.extract_strided_slice %193 {offsets = [0, 128], sizes = [8, 128], strides = [1, 1]} : vector<8x384xf32> to vector<8x128xf32>
    %197 = arith.mulf %196, %151 : vector<8x128xf32>
    %198 = vector.extract_strided_slice %193 {offsets = [0, 0], sizes = [8, 128], strides = [1, 1]} : vector<8x384xf32> to vector<8x128xf32>
    %199 = arith.mulf %198, %195 : vector<8x128xf32>
    %200 = arith.addf %197, %199 : vector<8x128xf32>
    %201 = vector.extract_strided_slice %193 {offsets = [0, 256], sizes = [8, 128], strides = [1, 1]} : vector<8x384xf32> to vector<8x128xf32>
    %202 = math.tanh %200 : vector<8x128xf32>
    %203 = arith.mulf %201, %202 : vector<8x128xf32>
    %c4_i32 = arith.constant 4 : i32
    %204 = arith.index_cast %c4_i32 : i32 to index
    %c0_78 = arith.constant 0 : index
    %c0_79 = arith.constant 0 : index
    %205 = vector.load %arg2[%204, %c0_78, %c0_79] : memref<8x8x512xf32, #tpu.memory_space<vmem>>, vector<1x8x512xf32>
    %206 = vector.shape_cast %205 : vector<1x8x512xf32> to vector<8x512xf32>
    %c0_80 = arith.constant 0 : index
    %c0_81 = arith.constant 0 : index
    %207 = vector.load %arg3[%c0_80, %c0_81] : memref<128x512xf32, #tpu.memory_space<vmem>>, vector<128x512xf32>
    %cst_82 = arith.constant dense<0.000000e+00> : vector<8x512xf32>
    %208 = tpu.matmul %178, %207, %cst_82 {dimension_numbers = #tpu.dot_dimension_numbers<[1], [0], [0], [1], [0, 0, 1, 1], [], []>} : vector<8x128xf32>, vector<128x512xf32>, vector<8x512xf32> -> vector<8x512xf32>
    %209 = arith.addf %206, %208 : vector<8x512xf32>
    %210 = vector.extract_strided_slice %209 {offsets = [0, 0], sizes = [8, 384], strides = [1, 1]} : vector<8x512xf32> to vector<8x384xf32>
    %cst_83 = arith.constant 5.000000e-01 : f32
    %211 = vector.broadcast %cst_83 : f32 to vector<8x384xf32>
    %212 = arith.mulf %211, %210 : vector<8x384xf32>
    %213 = math.tanh %212 : vector<8x384xf32>
    %cst_84 = arith.constant 5.000000e-01 : f32
    %214 = vector.broadcast %cst_84 : f32 to vector<8x384xf32>
    %215 = arith.mulf %214, %213 : vector<8x384xf32>
    %cst_85 = arith.constant 5.000000e-01 : f32
    %216 = vector.broadcast %cst_85 : f32 to vector<8x384xf32>
    %217 = arith.addf %215, %216 : vector<8x384xf32>
    %218 = vector.extract_strided_slice %209 {offsets = [0, 384], sizes = [8, 128], strides = [1, 1]} : vector<8x512xf32> to vector<8x128xf32>
    %219 = math.tanh %218 : vector<8x128xf32>
    %220 = vector.extract_strided_slice %217 {offsets = [0, 128], sizes = [8, 128], strides = [1, 1]} : vector<8x384xf32> to vector<8x128xf32>
    %221 = arith.mulf %220, %175 : vector<8x128xf32>
    %222 = vector.extract_strided_slice %217 {offsets = [0, 0], sizes = [8, 128], strides = [1, 1]} : vector<8x384xf32> to vector<8x128xf32>
    %223 = arith.mulf %222, %219 : vector<8x128xf32>
    %224 = arith.addf %221, %223 : vector<8x128xf32>
    %225 = vector.extract_strided_slice %217 {offsets = [0, 256], sizes = [8, 128], strides = [1, 1]} : vector<8x384xf32> to vector<8x128xf32>
    %226 = math.tanh %224 : vector<8x128xf32>
    %227 = arith.mulf %225, %226 : vector<8x128xf32>
    %c0_86 = arith.constant 0 : index
    %c0_87 = arith.constant 0 : index
    %228 = vector.load %arg4[%c0_86, %c0_87] : memref<128x512xf32, #tpu.memory_space<vmem>>, vector<128x512xf32>
    %cst_88 = arith.constant dense<0.000000e+00> : vector<8x512xf32>
    %229 = tpu.matmul %227, %228, %cst_88 {dimension_numbers = #tpu.dot_dimension_numbers<[1], [0], [0], [1], [0, 0, 1, 1], [], []>} : vector<8x128xf32>, vector<128x512xf32>, vector<8x512xf32> -> vector<8x512xf32>
    %c0_89 = arith.constant 0 : index
    %c0_90 = arith.constant 0 : index
    %230 = vector.load %arg5[%c0_89, %c0_90] : memref<128x512xf32, #tpu.memory_space<vmem>>, vector<128x512xf32>
    %cst_91 = arith.constant dense<0.000000e+00> : vector<8x512xf32>
    %231 = tpu.matmul %203, %230, %cst_91 {dimension_numbers = #tpu.dot_dimension_numbers<[1], [0], [0], [1], [0, 0, 1, 1], [], []>} : vector<8x128xf32>, vector<128x512xf32>, vector<8x512xf32> -> vector<8x512xf32>
    %232 = arith.addf %229, %231 : vector<8x512xf32>
    %233 = vector.broadcast %3 : vector<1x512xf32> to vector<8x512xf32>
    %234 = arith.addf %232, %233 : vector<8x512xf32>
    %235 = vector.extract_strided_slice %234 {offsets = [0, 0], sizes = [8, 384], strides = [1, 1]} : vector<8x512xf32> to vector<8x384xf32>
    %cst_92 = arith.constant 5.000000e-01 : f32
    %236 = vector.broadcast %cst_92 : f32 to vector<8x384xf32>
    %237 = arith.mulf %236, %235 : vector<8x384xf32>
    %238 = math.tanh %237 : vector<8x384xf32>
    %cst_93 = arith.constant 5.000000e-01 : f32
    %239 = vector.broadcast %cst_93 : f32 to vector<8x384xf32>
    %240 = arith.mulf %239, %238 : vector<8x384xf32>
    %cst_94 = arith.constant 5.000000e-01 : f32
    %241 = vector.broadcast %cst_94 : f32 to vector<8x384xf32>
    %242 = arith.addf %240, %241 : vector<8x384xf32>
    %243 = vector.extract_strided_slice %234 {offsets = [0, 384], sizes = [8, 128], strides = [1, 1]} : vector<8x512xf32> to vector<8x128xf32>
    %244 = math.tanh %243 : vector<8x128xf32>
    %245 = vector.extract_strided_slice %242 {offsets = [0, 128], sizes = [8, 128], strides = [1, 1]} : vector<8x384xf32> to vector<8x128xf32>
    %246 = arith.mulf %245, %200 : vector<8x128xf32>
    %247 = vector.extract_strided_slice %242 {offsets = [0, 0], sizes = [8, 128], strides = [1, 1]} : vector<8x384xf32> to vector<8x128xf32>
    %248 = arith.mulf %247, %244 : vector<8x128xf32>
    %249 = arith.addf %246, %248 : vector<8x128xf32>
    %250 = vector.extract_strided_slice %242 {offsets = [0, 256], sizes = [8, 128], strides = [1, 1]} : vector<8x384xf32> to vector<8x128xf32>
    %251 = math.tanh %249 : vector<8x128xf32>
    %252 = arith.mulf %250, %251 : vector<8x128xf32>
    %c5_i32 = arith.constant 5 : i32
    %253 = arith.index_cast %c5_i32 : i32 to index
    %c0_95 = arith.constant 0 : index
    %c0_96 = arith.constant 0 : index
    %254 = vector.load %arg2[%253, %c0_95, %c0_96] : memref<8x8x512xf32, #tpu.memory_space<vmem>>, vector<1x8x512xf32>
    %255 = vector.shape_cast %254 : vector<1x8x512xf32> to vector<8x512xf32>
    %c0_97 = arith.constant 0 : index
    %c0_98 = arith.constant 0 : index
    %256 = vector.load %arg3[%c0_97, %c0_98] : memref<128x512xf32, #tpu.memory_space<vmem>>, vector<128x512xf32>
    %cst_99 = arith.constant dense<0.000000e+00> : vector<8x512xf32>
    %257 = tpu.matmul %227, %256, %cst_99 {dimension_numbers = #tpu.dot_dimension_numbers<[1], [0], [0], [1], [0, 0, 1, 1], [], []>} : vector<8x128xf32>, vector<128x512xf32>, vector<8x512xf32> -> vector<8x512xf32>
    %258 = arith.addf %255, %257 : vector<8x512xf32>
    %259 = vector.extract_strided_slice %258 {offsets = [0, 0], sizes = [8, 384], strides = [1, 1]} : vector<8x512xf32> to vector<8x384xf32>
    %cst_100 = arith.constant 5.000000e-01 : f32
    %260 = vector.broadcast %cst_100 : f32 to vector<8x384xf32>
    %261 = arith.mulf %260, %259 : vector<8x384xf32>
    %262 = math.tanh %261 : vector<8x384xf32>
    %cst_101 = arith.constant 5.000000e-01 : f32
    %263 = vector.broadcast %cst_101 : f32 to vector<8x384xf32>
    %264 = arith.mulf %263, %262 : vector<8x384xf32>
    %cst_102 = arith.constant 5.000000e-01 : f32
    %265 = vector.broadcast %cst_102 : f32 to vector<8x384xf32>
    %266 = arith.addf %264, %265 : vector<8x384xf32>
    %267 = vector.extract_strided_slice %258 {offsets = [0, 384], sizes = [8, 128], strides = [1, 1]} : vector<8x512xf32> to vector<8x128xf32>
    %268 = math.tanh %267 : vector<8x128xf32>
    %269 = vector.extract_strided_slice %266 {offsets = [0, 128], sizes = [8, 128], strides = [1, 1]} : vector<8x384xf32> to vector<8x128xf32>
    %270 = arith.mulf %269, %224 : vector<8x128xf32>
    %271 = vector.extract_strided_slice %266 {offsets = [0, 0], sizes = [8, 128], strides = [1, 1]} : vector<8x384xf32> to vector<8x128xf32>
    %272 = arith.mulf %271, %268 : vector<8x128xf32>
    %273 = arith.addf %270, %272 : vector<8x128xf32>
    %274 = vector.extract_strided_slice %266 {offsets = [0, 256], sizes = [8, 128], strides = [1, 1]} : vector<8x384xf32> to vector<8x128xf32>
    %275 = math.tanh %273 : vector<8x128xf32>
    %276 = arith.mulf %274, %275 : vector<8x128xf32>
    %c0_103 = arith.constant 0 : index
    %c0_104 = arith.constant 0 : index
    %277 = vector.load %arg4[%c0_103, %c0_104] : memref<128x512xf32, #tpu.memory_space<vmem>>, vector<128x512xf32>
    %cst_105 = arith.constant dense<0.000000e+00> : vector<8x512xf32>
    %278 = tpu.matmul %276, %277, %cst_105 {dimension_numbers = #tpu.dot_dimension_numbers<[1], [0], [0], [1], [0, 0, 1, 1], [], []>} : vector<8x128xf32>, vector<128x512xf32>, vector<8x512xf32> -> vector<8x512xf32>
    %c0_106 = arith.constant 0 : index
    %c0_107 = arith.constant 0 : index
    %279 = vector.load %arg5[%c0_106, %c0_107] : memref<128x512xf32, #tpu.memory_space<vmem>>, vector<128x512xf32>
    %cst_108 = arith.constant dense<0.000000e+00> : vector<8x512xf32>
    %280 = tpu.matmul %252, %279, %cst_108 {dimension_numbers = #tpu.dot_dimension_numbers<[1], [0], [0], [1], [0, 0, 1, 1], [], []>} : vector<8x128xf32>, vector<128x512xf32>, vector<8x512xf32> -> vector<8x512xf32>
    %281 = arith.addf %278, %280 : vector<8x512xf32>
    %282 = vector.broadcast %3 : vector<1x512xf32> to vector<8x512xf32>
    %283 = arith.addf %281, %282 : vector<8x512xf32>
    %284 = vector.extract_strided_slice %283 {offsets = [0, 0], sizes = [8, 384], strides = [1, 1]} : vector<8x512xf32> to vector<8x384xf32>
    %cst_109 = arith.constant 5.000000e-01 : f32
    %285 = vector.broadcast %cst_109 : f32 to vector<8x384xf32>
    %286 = arith.mulf %285, %284 : vector<8x384xf32>
    %287 = math.tanh %286 : vector<8x384xf32>
    %cst_110 = arith.constant 5.000000e-01 : f32
    %288 = vector.broadcast %cst_110 : f32 to vector<8x384xf32>
    %289 = arith.mulf %288, %287 : vector<8x384xf32>
    %cst_111 = arith.constant 5.000000e-01 : f32
    %290 = vector.broadcast %cst_111 : f32 to vector<8x384xf32>
    %291 = arith.addf %289, %290 : vector<8x384xf32>
    %292 = vector.extract_strided_slice %283 {offsets = [0, 384], sizes = [8, 128], strides = [1, 1]} : vector<8x512xf32> to vector<8x128xf32>
    %293 = math.tanh %292 : vector<8x128xf32>
    %294 = vector.extract_strided_slice %291 {offsets = [0, 128], sizes = [8, 128], strides = [1, 1]} : vector<8x384xf32> to vector<8x128xf32>
    %295 = arith.mulf %294, %249 : vector<8x128xf32>
    %296 = vector.extract_strided_slice %291 {offsets = [0, 0], sizes = [8, 128], strides = [1, 1]} : vector<8x384xf32> to vector<8x128xf32>
    %297 = arith.mulf %296, %293 : vector<8x128xf32>
    %298 = arith.addf %295, %297 : vector<8x128xf32>
    %299 = vector.extract_strided_slice %291 {offsets = [0, 256], sizes = [8, 128], strides = [1, 1]} : vector<8x384xf32> to vector<8x128xf32>
    %300 = math.tanh %298 : vector<8x128xf32>
    %301 = arith.mulf %299, %300 : vector<8x128xf32>
    %c6_i32 = arith.constant 6 : i32
    %302 = arith.index_cast %c6_i32 : i32 to index
    %c0_112 = arith.constant 0 : index
    %c0_113 = arith.constant 0 : index
    %303 = vector.load %arg2[%302, %c0_112, %c0_113] : memref<8x8x512xf32, #tpu.memory_space<vmem>>, vector<1x8x512xf32>
    %304 = vector.shape_cast %303 : vector<1x8x512xf32> to vector<8x512xf32>
    %c0_114 = arith.constant 0 : index
    %c0_115 = arith.constant 0 : index
    %305 = vector.load %arg3[%c0_114, %c0_115] : memref<128x512xf32, #tpu.memory_space<vmem>>, vector<128x512xf32>
    %cst_116 = arith.constant dense<0.000000e+00> : vector<8x512xf32>
    %306 = tpu.matmul %276, %305, %cst_116 {dimension_numbers = #tpu.dot_dimension_numbers<[1], [0], [0], [1], [0, 0, 1, 1], [], []>} : vector<8x128xf32>, vector<128x512xf32>, vector<8x512xf32> -> vector<8x512xf32>
    %307 = arith.addf %304, %306 : vector<8x512xf32>
    %308 = vector.extract_strided_slice %307 {offsets = [0, 0], sizes = [8, 384], strides = [1, 1]} : vector<8x512xf32> to vector<8x384xf32>
    %cst_117 = arith.constant 5.000000e-01 : f32
    %309 = vector.broadcast %cst_117 : f32 to vector<8x384xf32>
    %310 = arith.mulf %309, %308 : vector<8x384xf32>
    %311 = math.tanh %310 : vector<8x384xf32>
    %cst_118 = arith.constant 5.000000e-01 : f32
    %312 = vector.broadcast %cst_118 : f32 to vector<8x384xf32>
    %313 = arith.mulf %312, %311 : vector<8x384xf32>
    %cst_119 = arith.constant 5.000000e-01 : f32
    %314 = vector.broadcast %cst_119 : f32 to vector<8x384xf32>
    %315 = arith.addf %313, %314 : vector<8x384xf32>
    %316 = vector.extract_strided_slice %307 {offsets = [0, 384], sizes = [8, 128], strides = [1, 1]} : vector<8x512xf32> to vector<8x128xf32>
    %317 = math.tanh %316 : vector<8x128xf32>
    %318 = vector.extract_strided_slice %315 {offsets = [0, 128], sizes = [8, 128], strides = [1, 1]} : vector<8x384xf32> to vector<8x128xf32>
    %319 = arith.mulf %318, %273 : vector<8x128xf32>
    %320 = vector.extract_strided_slice %315 {offsets = [0, 0], sizes = [8, 128], strides = [1, 1]} : vector<8x384xf32> to vector<8x128xf32>
    %321 = arith.mulf %320, %317 : vector<8x128xf32>
    %322 = arith.addf %319, %321 : vector<8x128xf32>
    %323 = vector.extract_strided_slice %315 {offsets = [0, 256], sizes = [8, 128], strides = [1, 1]} : vector<8x384xf32> to vector<8x128xf32>
    %324 = math.tanh %322 : vector<8x128xf32>
    %325 = arith.mulf %323, %324 : vector<8x128xf32>
    %c0_120 = arith.constant 0 : index
    %c0_121 = arith.constant 0 : index
    %326 = vector.load %arg4[%c0_120, %c0_121] : memref<128x512xf32, #tpu.memory_space<vmem>>, vector<128x512xf32>
    %cst_122 = arith.constant dense<0.000000e+00> : vector<8x512xf32>
    %327 = tpu.matmul %325, %326, %cst_122 {dimension_numbers = #tpu.dot_dimension_numbers<[1], [0], [0], [1], [0, 0, 1, 1], [], []>} : vector<8x128xf32>, vector<128x512xf32>, vector<8x512xf32> -> vector<8x512xf32>
    %c0_123 = arith.constant 0 : index
    %c0_124 = arith.constant 0 : index
    %328 = vector.load %arg5[%c0_123, %c0_124] : memref<128x512xf32, #tpu.memory_space<vmem>>, vector<128x512xf32>
    %cst_125 = arith.constant dense<0.000000e+00> : vector<8x512xf32>
    %329 = tpu.matmul %301, %328, %cst_125 {dimension_numbers = #tpu.dot_dimension_numbers<[1], [0], [0], [1], [0, 0, 1, 1], [], []>} : vector<8x128xf32>, vector<128x512xf32>, vector<8x512xf32> -> vector<8x512xf32>
    %330 = arith.addf %327, %329 : vector<8x512xf32>
    %331 = vector.broadcast %3 : vector<1x512xf32> to vector<8x512xf32>
    %332 = arith.addf %330, %331 : vector<8x512xf32>
    %333 = vector.extract_strided_slice %332 {offsets = [0, 0], sizes = [8, 384], strides = [1, 1]} : vector<8x512xf32> to vector<8x384xf32>
    %cst_126 = arith.constant 5.000000e-01 : f32
    %334 = vector.broadcast %cst_126 : f32 to vector<8x384xf32>
    %335 = arith.mulf %334, %333 : vector<8x384xf32>
    %336 = math.tanh %335 : vector<8x384xf32>
    %cst_127 = arith.constant 5.000000e-01 : f32
    %337 = vector.broadcast %cst_127 : f32 to vector<8x384xf32>
    %338 = arith.mulf %337, %336 : vector<8x384xf32>
    %cst_128 = arith.constant 5.000000e-01 : f32
    %339 = vector.broadcast %cst_128 : f32 to vector<8x384xf32>
    %340 = arith.addf %338, %339 : vector<8x384xf32>
    %341 = vector.extract_strided_slice %332 {offsets = [0, 384], sizes = [8, 128], strides = [1, 1]} : vector<8x512xf32> to vector<8x128xf32>
    %342 = math.tanh %341 : vector<8x128xf32>
    %343 = vector.extract_strided_slice %340 {offsets = [0, 128], sizes = [8, 128], strides = [1, 1]} : vector<8x384xf32> to vector<8x128xf32>
    %344 = arith.mulf %343, %298 : vector<8x128xf32>
    %345 = vector.extract_strided_slice %340 {offsets = [0, 0], sizes = [8, 128], strides = [1, 1]} : vector<8x384xf32> to vector<8x128xf32>
    %346 = arith.mulf %345, %342 : vector<8x128xf32>
    %347 = arith.addf %344, %346 : vector<8x128xf32>
    %348 = vector.extract_strided_slice %340 {offsets = [0, 256], sizes = [8, 128], strides = [1, 1]} : vector<8x384xf32> to vector<8x128xf32>
    %349 = math.tanh %347 : vector<8x128xf32>
    %350 = arith.mulf %348, %349 : vector<8x128xf32>
    %c7_i32 = arith.constant 7 : i32
    %351 = arith.index_cast %c7_i32 : i32 to index
    %c0_129 = arith.constant 0 : index
    %c0_130 = arith.constant 0 : index
    %352 = vector.load %arg2[%351, %c0_129, %c0_130] : memref<8x8x512xf32, #tpu.memory_space<vmem>>, vector<1x8x512xf32>
    %353 = vector.shape_cast %352 : vector<1x8x512xf32> to vector<8x512xf32>
    %c0_131 = arith.constant 0 : index
    %c0_132 = arith.constant 0 : index
    %354 = vector.load %arg3[%c0_131, %c0_132] : memref<128x512xf32, #tpu.memory_space<vmem>>, vector<128x512xf32>
    %cst_133 = arith.constant dense<0.000000e+00> : vector<8x512xf32>
    %355 = tpu.matmul %325, %354, %cst_133 {dimension_numbers = #tpu.dot_dimension_numbers<[1], [0], [0], [1], [0, 0, 1, 1], [], []>} : vector<8x128xf32>, vector<128x512xf32>, vector<8x512xf32> -> vector<8x512xf32>
    %356 = arith.addf %353, %355 : vector<8x512xf32>
    %357 = vector.extract_strided_slice %356 {offsets = [0, 0], sizes = [8, 384], strides = [1, 1]} : vector<8x512xf32> to vector<8x384xf32>
    %cst_134 = arith.constant 5.000000e-01 : f32
    %358 = vector.broadcast %cst_134 : f32 to vector<8x384xf32>
    %359 = arith.mulf %358, %357 : vector<8x384xf32>
    %360 = math.tanh %359 : vector<8x384xf32>
    %cst_135 = arith.constant 5.000000e-01 : f32
    %361 = vector.broadcast %cst_135 : f32 to vector<8x384xf32>
    %362 = arith.mulf %361, %360 : vector<8x384xf32>
    %cst_136 = arith.constant 5.000000e-01 : f32
    %363 = vector.broadcast %cst_136 : f32 to vector<8x384xf32>
    %364 = arith.addf %362, %363 : vector<8x384xf32>
    %365 = vector.extract_strided_slice %356 {offsets = [0, 384], sizes = [8, 128], strides = [1, 1]} : vector<8x512xf32> to vector<8x128xf32>
    %366 = math.tanh %365 : vector<8x128xf32>
    %367 = vector.extract_strided_slice %364 {offsets = [0, 128], sizes = [8, 128], strides = [1, 1]} : vector<8x384xf32> to vector<8x128xf32>
    %368 = arith.mulf %367, %322 : vector<8x128xf32>
    %369 = vector.extract_strided_slice %364 {offsets = [0, 0], sizes = [8, 128], strides = [1, 1]} : vector<8x384xf32> to vector<8x128xf32>
    %370 = arith.mulf %369, %366 : vector<8x128xf32>
    %371 = arith.addf %368, %370 : vector<8x128xf32>
    %372 = vector.extract_strided_slice %364 {offsets = [0, 256], sizes = [8, 128], strides = [1, 1]} : vector<8x384xf32> to vector<8x128xf32>
    %373 = math.tanh %371 : vector<8x128xf32>
    %374 = arith.mulf %372, %373 : vector<8x128xf32>
    %c0_137 = arith.constant 0 : index
    %c0_138 = arith.constant 0 : index
    %375 = vector.load %arg4[%c0_137, %c0_138] : memref<128x512xf32, #tpu.memory_space<vmem>>, vector<128x512xf32>
    %cst_139 = arith.constant dense<0.000000e+00> : vector<8x512xf32>
    %376 = tpu.matmul %374, %375, %cst_139 {dimension_numbers = #tpu.dot_dimension_numbers<[1], [0], [0], [1], [0, 0, 1, 1], [], []>} : vector<8x128xf32>, vector<128x512xf32>, vector<8x512xf32> -> vector<8x512xf32>
    %c0_140 = arith.constant 0 : index
    %c0_141 = arith.constant 0 : index
    %377 = vector.load %arg5[%c0_140, %c0_141] : memref<128x512xf32, #tpu.memory_space<vmem>>, vector<128x512xf32>
    %cst_142 = arith.constant dense<0.000000e+00> : vector<8x512xf32>
    %378 = tpu.matmul %350, %377, %cst_142 {dimension_numbers = #tpu.dot_dimension_numbers<[1], [0], [0], [1], [0, 0, 1, 1], [], []>} : vector<8x128xf32>, vector<128x512xf32>, vector<8x512xf32> -> vector<8x512xf32>
    %379 = arith.addf %376, %378 : vector<8x512xf32>
    %380 = vector.broadcast %3 : vector<1x512xf32> to vector<8x512xf32>
    %381 = arith.addf %379, %380 : vector<8x512xf32>
    %382 = vector.extract_strided_slice %381 {offsets = [0, 0], sizes = [8, 384], strides = [1, 1]} : vector<8x512xf32> to vector<8x384xf32>
    %cst_143 = arith.constant 5.000000e-01 : f32
    %383 = vector.broadcast %cst_143 : f32 to vector<8x384xf32>
    %384 = arith.mulf %383, %382 : vector<8x384xf32>
    %385 = math.tanh %384 : vector<8x384xf32>
    %cst_144 = arith.constant 5.000000e-01 : f32
    %386 = vector.broadcast %cst_144 : f32 to vector<8x384xf32>
    %387 = arith.mulf %386, %385 : vector<8x384xf32>
    %cst_145 = arith.constant 5.000000e-01 : f32
    %388 = vector.broadcast %cst_145 : f32 to vector<8x384xf32>
    %389 = arith.addf %387, %388 : vector<8x384xf32>
    %390 = vector.extract_strided_slice %381 {offsets = [0, 384], sizes = [8, 128], strides = [1, 1]} : vector<8x512xf32> to vector<8x128xf32>
    %391 = math.tanh %390 : vector<8x128xf32>
    %392 = vector.extract_strided_slice %389 {offsets = [0, 128], sizes = [8, 128], strides = [1, 1]} : vector<8x384xf32> to vector<8x128xf32>
    %393 = arith.mulf %392, %347 : vector<8x128xf32>
    %394 = vector.extract_strided_slice %389 {offsets = [0, 0], sizes = [8, 128], strides = [1, 1]} : vector<8x384xf32> to vector<8x128xf32>
    %395 = arith.mulf %394, %391 : vector<8x128xf32>
    %396 = arith.addf %393, %395 : vector<8x128xf32>
    %397 = vector.extract_strided_slice %389 {offsets = [0, 256], sizes = [8, 128], strides = [1, 1]} : vector<8x384xf32> to vector<8x128xf32>
    %398 = math.tanh %396 : vector<8x128xf32>
    %399 = arith.mulf %397, %398 : vector<8x128xf32>
    %c8_i32 = arith.constant 8 : i32
    %c0_146 = arith.constant 0 : index
    %c0_147 = arith.constant 0 : index
    %400 = vector.load %arg8[%c0_146, %c0_147] : memref<8x128xf32, #tpu.memory_space<vmem>>, vector<8x128xf32>
    tpu.vector_store %arg8[%c0_146, %c0_147], %374 {strides = array<i32>} : memref<8x128xf32, #tpu.memory_space<vmem>>, vector<8x128xf32>,
    %c0_148 = arith.constant 0 : index
    %c0_149 = arith.constant 0 : index
    %401 = vector.load %arg9[%c0_148, %c0_149] : memref<8x128xf32, #tpu.memory_space<vmem>>, vector<8x128xf32>
    tpu.vector_store %arg9[%c0_148, %c0_149], %371 {strides = array<i32>} : memref<8x128xf32, #tpu.memory_space<vmem>>, vector<8x128xf32>,
    %c0_150 = arith.constant 0 : index
    %c0_151 = arith.constant 0 : index
    %402 = vector.load %arg10[%c0_150, %c0_151] : memref<8x128xf32, #tpu.memory_space<vmem>>, vector<8x128xf32>
    tpu.vector_store %arg10[%c0_150, %c0_151], %399 {strides = array<i32>} : memref<8x128xf32, #tpu.memory_space<vmem>>, vector<8x128xf32>,
    %c0_152 = arith.constant 0 : index
    %c0_153 = arith.constant 0 : index
    %403 = vector.load %arg11[%c0_152, %c0_153] : memref<8x128xf32, #tpu.memory_space<vmem>>, vector<8x128xf32>
    tpu.vector_store %arg11[%c0_152, %c0_153], %396 {strides = array<i32>} : memref<8x128xf32, #tpu.memory_space<vmem>>, vector<8x128xf32>,
    %c0_i32_154 = arith.constant 0 : i32
    %404 = arith.cmpi eq, %arg1, %c0_i32_154 : i32
    %405 = arith.extui %404 : i1 to i32
    %c0_i32_155 = arith.constant 0 : i32
    %406 = arith.cmpi ne, %405, %c0_i32_155 : i32
    scf.if %406 {
      %c0_156 = arith.constant 0 : index
      %c0_157 = arith.constant 0 : index
      %407 = vector.load %arg7[%c0_156, %c0_157] : memref<8x128xf32, #tpu.memory_space<vmem>>, vector<8x128xf32>
      tpu.vector_store %arg7[%c0_156, %c0_157], %399 {strides = array<i32>} : memref<8x128xf32, #tpu.memory_space<vmem>>, vector<8x128xf32>,
    } else {
    }
    return
  }
  func.func @transform_0(%arg0: i32, %arg1: i32) -> (i32, i32, i32) {
    %c0_i32 = arith.constant 0 : i32
    %c0_i32_0 = arith.constant 0 : i32
    return %arg1, %arg0, %c0_i32 : i32, i32, i32
  }
  func.func @transform_1(%arg0: i32, %arg1: i32) -> (i32, i32) {
    %c0_i32 = arith.constant 0 : i32
    %c0_i32_0 = arith.constant 0 : i32
    %c0_i32_1 = arith.constant 0 : i32
    return %c0_i32, %c0_i32_0 : i32, i32
  }
  func.func @transform_2(%arg0: i32, %arg1: i32) -> (i32, i32) {
    %c0_i32 = arith.constant 0 : i32
    %c0_i32_0 = arith.constant 0 : i32
    %c0_i32_1 = arith.constant 0 : i32
    return %c0_i32, %c0_i32_0 : i32, i32
  }
  func.func @transform_3(%arg0: i32, %arg1: i32) -> (i32, i32) {
    %c0_i32 = arith.constant 0 : i32
    %c0_i32_0 = arith.constant 0 : i32
    %c0_i32_1 = arith.constant 0 : i32
    return %c0_i32, %c0_i32_0 : i32, i32
  }
  func.func @transform_4(%arg0: i32, %arg1: i32) -> (i32, i32) {
    %c0_i32 = arith.constant 0 : i32
    %c0_i32_0 = arith.constant 0 : i32
    %c0_i32_1 = arith.constant 0 : i32
    return %c0_i32, %c0_i32_0 : i32, i32
  }
  func.func @transform_5(%arg0: i32, %arg1: i32) -> (i32, i32) {
    %c0_i32 = arith.constant 0 : i32
    %c0_i32_0 = arith.constant 0 : i32
    return %arg0, %c0_i32 : i32, i32
  }
}

</mosaic_0001>

<llo_original>
// kernel: encoder_forward.2
$region0: #{encoder_forward.2}
  #allocation0 [shape = 'u32[]', space=smem, size = 0x4, offset = 0x4, fixed_abs, tag = 'smem constant byte address 0x4 - core index']
  #allocation1 [shape = 'u32[144,128]{1,0:T(1,128)}', space=vmem, size = 0x12000, scoped, tag = 'internal scratch']
  %s0 = inlined_call_operand.vmem [shape: f32[64,8], index: 0, kind: input, shape index: {}]
  %s1 = inlined_call_operand.vmem [shape: f32[8,512], index: 1, kind: input, shape index: {}]
  %s2 = inlined_call_operand.vmem [shape: f32[1,512], index: 2, kind: input, shape index: {}]
  %s3 = inlined_call_operand.vmem [shape: f32[64,512], index: 3, kind: output, shape index: {}]
  %s4 = sld [smem:[#allocation0]]
  $region22: #{encoder_forward.2} parent=0
    _
  %s6 = ssub.s32 1, %s4
  %s7 = scalar_select 0, %s6, %s4
  // Predicated region
  $region2: #{encoder_forward.2} parent=0 // pred_check
    _
  $region3: #{encoder_forward.2} parent=0 // pred_check_branch
    %9 = sbr.rel (0) target = $region5
  $region4: #{encoder_forward.2} parent=0 // pred_region
    _
  $region5: #{encoder_forward.2} parent=0 // pred_fallthru
    _
  // Predicated region
  $region6: #{encoder_forward.2} parent=0 // pred_check
    _
  $region7: #{encoder_forward.2} parent=0 // pred_check_branch
    %11 = sbr.rel (0) target = $region9
  $region8: #{encoder_forward.2} parent=0 // pred_region
    _
  $region9: #{encoder_forward.2} parent=0 // pred_fallthru
    _
  // Predicated region
  $region10: #{encoder_forward.2} parent=0 // pred_check
    _
  $region11: #{encoder_forward.2} parent=0 // pred_check_branch
    %13 = sbr.rel (0) target = $region13
  $region12: #{encoder_forward.2} parent=0 // pred_region
    _
  $region13: #{encoder_forward.2} parent=0 // pred_fallthru
    _
  %v14 = vld [vmem:[%s0] sm:$0xff]
  %v15 = vld [vmem:[%s0 + $0x8] sm:$0xff]
  %v16 = vld [vmem:[%s0 + $0x10] sm:$0xff]
  %v17 = vld [vmem:[%s0 + $0x18] sm:$0xff]
  %v18 = vld [vmem:[%s0 + $0x20] sm:$0xff]
  %v19 = vld [vmem:[%s0 + $0x28] sm:$0xff]
  %v20 = vld [vmem:[%s0 + $0x30] sm:$0xff]
  %v21 = vld [vmem:[%s0 + $0x38] sm:$0xff]
  %v22 = vld [vmem:[%s1] sm:$0xff]
  %v23 = vld [vmem:[%s1 + $0x8] sm:$0xff]
  %v24 = vld [vmem:[%s1 + $0x10] sm:$0xff]
  %v25 = vld [vmem:[%s1 + $0x18] sm:$0xff]
  %v26 = vld [vmem:[%s2] sm:$0xf]
  %v28 = vlaneseq
  %v29 = vshrl.u32 %v28, 7
  %v30 = vsub.s32 0, %v29
  %v31 = vrot.slane %v26, %v30
  %v32 = vlaneseq
  %v33 = vshrl.u32 %v32, 7
  %v34 = vsub.s32 1, %v33
  %v35 = vrot.slane %v26, %v34
  %v36 = vlaneseq
  %v37 = vshrl.u32 %v36, 7
  %v38 = vsub.s32 2, %v37
  %v39 = vrot.slane %v26, %v38
  %v40 = vlaneseq
  %v41 = vshrl.u32 %v40, 7
  %v42 = vsub.s32 3, %v41
  %v43 = vrot.slane %v26, %v42
  %vm48 = vcmask 64512
  %v50 = vsel %vm48, %v14, 0
  %v53 = vsel %vm48, %v15, 0
  %v56 = vsel %vm48, %v16, 0
  %v59 = vsel %vm48, %v17, 0
  %v62 = vsel %vm48, %v18, 0
  %v65 = vsel %vm48, %v19, 0
  %v68 = vsel %vm48, %v20, 0
  %v71 = vsel %vm48, %v21, 0
  %73 = vmatprep.subr.mxu0 %v23
  %74 = vmatpush1.msra.mxu0 %v22
  %75 = vmatprep.subr.mxu0 0.0
  %76 = vmatpush1.msra.mxu0 0.0
  %77 = vmatprep.subr.mxu0 0.0
  %78 = vmatpush1.msra.mxu0 0.0
  %79 = vmatprep.subr.mxu0 0.0
  %80 = vmatpush1.msra.mxu0 0.0
  %81 = vmatprep.subr.mxu0 0.0
  %82 = vmatpush1.msra.mxu0 0.0
  %83 = vmatprep.subr.mxu0 0.0
  %84 = vmatpush1.msra.mxu0 0.0
  %85 = vmatprep.subr.mxu0 0.0
  %86 = vmatpush1.msra.mxu0 0.0
  %87 = vmatprep.subr.mxu0 0.0
  %88 = vmatpush1.msra.mxu0 0.0
  %89 = vmatprep.subr.mxu0 0.0
  %90 = vmatpush1.msra.mxu0 0.0
  %91 = vmatprep.subr.mxu0 0.0
  %92 = vmatpush1.msra.mxu0 0.0
  %93 = vmatprep.subr.mxu0 0.0
  %94 = vmatpush1.msra.mxu0 0.0
  %95 = vmatprep.subr.mxu0 0.0
  %96 = vmatpush1.msra.mxu0 0.0
  %97 = vmatprep.subr.mxu0 0.0
  %98 = vmatpush1.msra.mxu0 0.0
  %99 = vmatprep.subr.mxu0 0.0
  %100 = vmatpush1.msra.mxu0 0.0
  %101 = vmatprep.subr.mxu0 0.0
  %102 = vmatpush1.msra.mxu0 0.0
  %103 = vmatprep.subr.mxu0 0.0
  %104 = vmatpush1.msra.mxu0 0.0
  %105 = vmatprep.subr.mxu0 0.0
  %106 = vmatpush1.msra.mxu0 0.0
  %107 = vmatprep.subr.mxu0 0.0
  %108 = vmatpush1.msra.mxu0 0.0
  %109 = vmatprep.subr.mxu0 0.0
  %110 = vmatpush1.msra.mxu0 0.0
  %111 = vmatprep.subr.mxu0 0.0
  %112 = vmatpush1.msra.mxu0 0.0
  %113 = vmatprep.subr.mxu0 0.0
  %114 = vmatpush1.msra.mxu0 0.0
  %115 = vmatprep.subr.mxu0 0.0
  %116 = vmatpush1.msra.mxu0 0.0
  %117 = vmatprep.subr.mxu0 0.0
  %118 = vmatpush1.msra.mxu0 0.0
  %119 = vmatprep.subr.mxu0 0.0
  %120 = vmatpush1.msra.mxu0 0.0
  %121 = vmatprep.subr.mxu0 0.0
  %122 = vmatpush1.msra.mxu0 0.0
  %123 = vmatprep.subr.mxu0 0.0
  %124 = vmatpush1.msra.mxu0 0.0
  %125 = vmatprep.subr.mxu0 0.0
  %126 = vmatpush1.msra.mxu0 0.0
  %127 = vmatprep.subr.mxu0 0.0
  %128 = vmatpush1.msra.mxu0 0.0
  %129 = vmatprep.subr.mxu0 0.0
  %130 = vmatpush1.msra.mxu0 0.0
  %131 = vmatprep.subr.mxu0 0.0
  %132 = vmatpush1.msra.mxu0 0.0
  %133 = vmatprep.subr.mxu0 0.0
  %134 = vmatpush1.msra.mxu0 0.0
  %135 = vmatprep.subr.mxu0 0.0
  %136 = vmatpush1.msra.mxu0 0.0
  %137 = vmatprep.mubr.f32.mxu0 0.0
  %138 = vmatmul.mubr.f32.gmra.mrb[0].mxu0 %v50
  %v139 = vpop.f32.mrb[0].mxu0
  %v140 = vadd.f32 %v31, %v139
  %v141 = vpop.f32.mrb[0].mxu0
  %v142 = vadd.f32 %v35, %v141
  %143 = vmatprep.mubr.f32.mxu0 0.0
  %144 = vmatmul.mubr.f32.gmra.mrb[0].mxu0 %v53
  %v145 = vpop.f32.mrb[0].mxu0
  %v146 = vadd.f32 %v31, %v145
  %v147 = vpop.f32.mrb[0].mxu0
  %v148 = vadd.f32 %v35, %v147
  %149 = vmatprep.mubr.f32.mxu0 0.0
  %150 = vmatmul.mubr.f32.gmra.mrb[0].mxu0 %v56
  %v151 = vpop.f32.mrb[0].mxu0
  %v152 = vadd.f32 %v31, %v151
  %v153 = vpop.f32.mrb[0].mxu0
  %v154 = vadd.f32 %v35, %v153
  %155 = vmatprep.mubr.f32.mxu0 0.0
  %156 = vmatmul.mubr.f32.gmra.mrb[0].mxu0 %v59
  %v157 = vpop.f32.mrb[0].mxu0
  %v158 = vadd.f32 %v31, %v157
  %v159 = vpop.f32.mrb[0].mxu0
  %v160 = vadd.f32 %v35, %v159
  %161 = vmatprep.mubr.f32.mxu0 0.0
  %162 = vmatmul.mubr.f32.gmra.mrb[0].mxu0 %v62
  %v163 = vpop.f32.mrb[0].mxu0
  %v164 = vadd.f32 %v31, %v163
  %v165 = vpop.f32.mrb[0].mxu0
  %v166 = vadd.f32 %v35, %v165
  %167 = vmatprep.mubr.f32.mxu0 0.0
  %168 = vmatmul.mubr.f32.gmra.mrb[0].mxu0 %v65
  %v169 = vpop.f32.mrb[0].mxu0
  %v170 = vadd.f32 %v31, %v169
  %v171 = vpop.f32.mrb[0].mxu0
  %v172 = vadd.f32 %v35, %v171
  %173 = vmatprep.mubr.f32.mxu0 0.0
  %174 = vmatmul.mubr.f32.gmra.mrb[0].mxu0 %v68
  %v175 = vpop.f32.mrb[0].mxu0
  %v176 = vadd.f32 %v31, %v175
  %v177 = vpop.f32.mrb[0].mxu0
  %v178 = vadd.f32 %v35, %v177
  %179 = vmatprep.mubr.f32.mxu0 0.0
  %180 = vmatmul.mubr.f32.gmra.mrb[0].mxu0 %v71
  %v181 = vpop.f32.mrb[0].mxu0
  %v182 = vadd.f32 %v31, %v181
  %v183 = vpop.f32.mrb[0].mxu0
  %v184 = vadd.f32 %v35, %v183
  %185 = vdwg.mxu0
  %186 = vmatprep.subr.mxu0 %v25
  %187 = vmatpush1.msra.mxu0 %v24
  %188 = vmatprep.subr.mxu0 0.0
  %189 = vmatpush1.msra.mxu0 0.0
  %190 = vmatprep.subr.mxu0 0.0
  %191 = vmatpush1.msra.mxu0 0.0
  %192 = vmatprep.subr.mxu0 0.0
  %193 = vmatpush1.msra.mxu0 0.0
  %194 = vmatprep.subr.mxu0 0.0
  %195 = vmatpush1.msra.mxu0 0.0
  %196 = vmatprep.subr.mxu0 0.0
  %197 = vmatpush1.msra.mxu0 0.0
  %198 = vmatprep.subr.mxu0 0.0
  %199 = vmatpush1.msra.mxu0 0.0
  %200 = vmatprep.subr.mxu0 0.0
  %201 = vmatpush1.msra.mxu0 0.0
  %202 = vmatprep.subr.mxu0 0.0
  %203 = vmatpush1.msra.mxu0 0.0
  %204 = vmatprep.subr.mxu0 0.0
  %205 = vmatpush1.msra.mxu0 0.0
  %206 = vmatprep.subr.mxu0 0.0
  %207 = vmatpush1.msra.mxu0 0.0
  %208 = vmatprep.subr.mxu0 0.0
  %209 = vmatpush1.msra.mxu0 0.0
  %210 = vmatprep.subr.mxu0 0.0
  %211 = vmatpush1.msra.mxu0 0.0
  %212 = vmatprep.subr.mxu0 0.0
  %213 = vmatpush1.msra.mxu0 0.0
  %214 = vmatprep.subr.mxu0 0.0
  %215 = vmatpush1.msra.mxu0 0.0
  %216 = vmatprep.subr.mxu0 0.0
  %217 = vmatpush1.msra.mxu0 0.0
  %218 = vmatprep.subr.mxu0 0.0
  %219 = vmatpush1.msra.mxu0 0.0
  %220 = vmatprep.subr.mxu0 0.0
  %221 = vmatpush1.msra.mxu0 0.0
  %222 = vmatprep.subr.mxu0 0.0
  %223 = vmatpush1.msra.mxu0 0.0
  %224 = vmatprep.subr.mxu0 0.0
  %225 = vmatpush1.msra.mxu0 0.0
  %226 = vmatprep.subr.mxu0 0.0
  %227 = vmatpush1.msra.mxu0 0.0
  %228 = vmatprep.subr.mxu0 0.0
  %229 = vmatpush1.msra.mxu0 0.0
  %230 = vmatprep.subr.mxu0 0.0
  %231 = vmatpush1.msra.mxu0 0.0
  %232 = vmatprep.subr.mxu0 0.0
  %233 = vmatpush1.msra.mxu0 0.0
  %234 = vmatprep.subr.mxu0 0.0
  %235 = vmatpush1.msra.mxu0 0.0
  %236 = vmatprep.subr.mxu0 0.0
  %237 = vmatpush1.msra.mxu0 0.0
  %238 = vmatprep.subr.mxu0 0.0
  %239 = vmatpush1.msra.mxu0 0.0
  %240 = vmatprep.subr.mxu0 0.0
  %241 = vmatpush1.msra.mxu0 0.0
  %242 = vmatprep.subr.mxu0 0.0
  %243 = vmatpush1.msra.mxu0 0.0
  %244 = vmatprep.subr.mxu0 0.0
  %245 = vmatpush1.msra.mxu0 0.0
  %246 = vmatprep.subr.mxu0 0.0
  %247 = vmatpush1.msra.mxu0 0.0
  %248 = vmatprep.subr.mxu0 0.0
  %249 = vmatpush1.msra.mxu0 0.0
  %250 = vmatprep.mubr.f32.mxu0 0.0
  %251 = vmatmul.mubr.f32.gmra.mrb[0].mxu0 %v50
  %v252 = vpop.f32.mrb[0].mxu0
  %v253 = vadd.f32 %v39, %v252
  %v254 = vpop.f32.mrb[0].mxu0
  %v255 = vadd.f32 %v43, %v254
  %256 = vmatprep.mubr.f32.mxu0 0.0
  %257 = vmatmul.mubr.f32.gmra.mrb[0].mxu0 %v53
  %v258 = vpop.f32.mrb[0].mxu0
  %v259 = vadd.f32 %v39, %v258
  %v260 = vpop.f32.mrb[0].mxu0
  %v261 = vadd.f32 %v43, %v260
  %262 = vmatprep.mubr.f32.mxu0 0.0
  %263 = vmatmul.mubr.f32.gmra.mrb[0].mxu0 %v56
  %v264 = vpop.f32.mrb[0].mxu0
  %v265 = vadd.f32 %v39, %v264
  %v266 = vpop.f32.mrb[0].mxu0
  %v267 = vadd.f32 %v43, %v266
  %268 = vmatprep.mubr.f32.mxu0 0.0
  %269 = vmatmul.mubr.f32.gmra.mrb[0].mxu0 %v59
  %v270 = vpop.f32.mrb[0].mxu0
  %v271 = vadd.f32 %v39, %v270
  %v272 = vpop.f32.mrb[0].mxu0
  %v273 = vadd.f32 %v43, %v272
  %274 = vmatprep.mubr.f32.mxu0 0.0
  %275 = vmatmul.mubr.f32.gmra.mrb[0].mxu0 %v62
  %v276 = vpop.f32.mrb[0].mxu0
  %v277 = vadd.f32 %v39, %v276
  %v278 = vpop.f32.mrb[0].mxu0
  %v279 = vadd.f32 %v43, %v278
  %280 = vmatprep.mubr.f32.mxu0 0.0
  %281 = vmatmul.mubr.f32.gmra.mrb[0].mxu0 %v65
  %v282 = vpop.f32.mrb[0].mxu0
  %v283 = vadd.f32 %v39, %v282
  %v284 = vpop.f32.mrb[0].mxu0
  %v285 = vadd.f32 %v43, %v284
  %286 = vmatprep.mubr.f32.mxu0 0.0
  %287 = vmatmul.mubr.f32.gmra.mrb[0].mxu0 %v68
  %v288 = vpop.f32.mrb[0].mxu0
  %v289 = vadd.f32 %v39, %v288
  %v290 = vpop.f32.mrb[0].mxu0
  %v291 = vadd.f32 %v43, %v290
  %292 = vmatprep.mubr.f32.mxu0 0.0
  %293 = vmatmul.mubr.f32.gmra.mrb[0].mxu0 %v71
  %v294 = vpop.f32.mrb[0].mxu0
  %v295 = vadd.f32 %v39, %v294
  %v296 = vpop.f32.mrb[0].mxu0
  %v297 = vadd.f32 %v43, %v296
  %298 = vdwg.mxu0
  %299 = vst [vmem:[%s3] sm:$0xff] %v140
  %300 = vst [vmem:[%s3 + $0x8] sm:$0xff] %v142
  %301 = vst [vmem:[%s3 + $0x10] sm:$0xff] %v253
  %302 = vst [vmem:[%s3 + $0x18] sm:$0xff] %v255
  %303 = vst [vmem:[%s3 + $0x20] sm:$0xff] %v146
  %304 = vst [vmem:[%s3 + $0x28] sm:$0xff] %v148
  %305 = vst [vmem:[%s3 + $0x30] sm:$0xff] %v259
  %306 = vst [vmem:[%s3 + $0x38] sm:$0xff] %v261
  %307 = vst [vmem:[%s3 + $0x40] sm:$0xff] %v152
  %308 = vst [vmem:[%s3 + $0x48] sm:$0xff] %v154
  %309 = vst [vmem:[%s3 + $0x50] sm:$0xff] %v265
  %310 = vst [vmem:[%s3 + $0x58] sm:$0xff] %v267
  %311 = vst [vmem:[%s3 + $0x60] sm:$0xff] %v158
  %312 = vst [vmem:[%s3 + $0x68] sm:$0xff] %v160
  %313 = vst [vmem:[%s3 + $0x70] sm:$0xff] %v271
  %314 = vst [vmem:[%s3 + $0x78] sm:$0xff] %v273
  %315 = vst [vmem:[%s3 + $0x80] sm:$0xff] %v164
  %316 = vst [vmem:[%s3 + $0x88] sm:$0xff] %v166
  %317 = vst [vmem:[%s3 + $0x90] sm:$0xff] %v277
  %318 = vst [vmem:[%s3 + $0x98] sm:$0xff] %v279
  %319 = vst [vmem:[%s3 + $0xa0] sm:$0xff] %v170
  %320 = vst [vmem:[%s3 + $0xa8] sm:$0xff] %v172
  %321 = vst [vmem:[%s3 + $0xb0] sm:$0xff] %v283
  %322 = vst [vmem:[%s3 + $0xb8] sm:$0xff] %v285
  %323 = vst [vmem:[%s3 + $0xc0] sm:$0xff] %v176
  %324 = vst [vmem:[%s3 + $0xc8] sm:$0xff] %v178
  %325 = vst [vmem:[%s3 + $0xd0] sm:$0xff] %v289
  %326 = vst [vmem:[%s3 + $0xd8] sm:$0xff] %v291
  %327 = vst [vmem:[%s3 + $0xe0] sm:$0xff] %v182
  %328 = vst [vmem:[%s3 + $0xe8] sm:$0xff] %v184
  %329 = vst [vmem:[%s3 + $0xf0] sm:$0xff] %v295
  %330 = vst [vmem:[%s3 + $0xf8] sm:$0xff] %v297
  // Predicated region
  $region14: #{encoder_forward.2} parent=0 // pred_check
    _
  $region15: #{encoder_forward.2} parent=0 // pred_check_branch
    %332 = sbr.rel (0) target = $region17
  $region16: #{encoder_forward.2} parent=0 // pred_region
    _
  $region17: #{encoder_forward.2} parent=0 // pred_fallthru
    _
  // Predicated region
  $region18: #{encoder_forward.2} parent=0 // pred_check
    _
  $region19: #{encoder_forward.2} parent=0 // pred_check_branch
    %334 = sbr.rel (0) target = $region21
  $region20: #{encoder_forward.2} parent=0 // pred_region
    _
  $region21: #{encoder_forward.2} parent=0 // pred_fallthru
    _

// kernel: encoder_forward.3
$region0: #{encoder_forward.3}
  #allocation0 [shape = 'u32[]', space=smem, size = 0x4, offset = 0x4, fixed_abs, tag = 'smem constant byte address 0x4 - core index']
  #allocation1 [shape = 'u32[144,128]{1,0:T(1,128)}', space=vmem, size = 0x12000, scoped, tag = 'internal scratch']
  #allocation2 [shape = 'f32[8,128]{1,0:T(8,128)}', space=vmem, size = 0x1000, scoped, tag = 'scratch operand']
  #allocation3 [shape = 'f32[8,128]{1,0:T(8,128)}', space=vmem, size = 0x1000, scoped, tag = 'scratch operand']
  #allocation4 [shape = 'f32[8,128]{1,0:T(8,128)}', space=vmem, size = 0x1000, scoped, tag = 'scratch operand']
  #allocation5 [shape = 'f32[8,128]{1,0:T(8,128)}', space=vmem, size = 0x1000, scoped, tag = 'scratch operand']
  %s0 = inlined_call_operand.vmem [shape: f32[8,8,512], index: 0, kind: input, shape index: {}]
  %s1 = inlined_call_operand.vmem [shape: f32[128,512], index: 1, kind: input, shape index: {}]
  %s2 = inlined_call_operand.vmem [shape: f32[128,512], index: 2, kind: input, shape index: {}]
  %s3 = inlined_call_operand.vmem [shape: f32[128,512], index: 3, kind: input, shape index: {}]
  %s4 = inlined_call_operand.vmem [shape: f32[1,512], index: 4, kind: input, shape index: {}]
  %s5 = inlined_call_operand.vmem [shape: f32[8,128], index: 5, kind: output, shape index: {}]
  %s6 = sld [smem:[#allocation0]]
  $region38: #{encoder_forward.3} parent=0
    _
  %s8 = ssub.s32 1, %s6
  %s9 = scalar_select 0, %s8, %s6
  // Predicated region
  $region2: #{encoder_forward.3} parent=0 // pred_check
    _
  $region3: #{encoder_forward.3} parent=0 // pred_check_branch
    %11 = sbr.rel (0) target = $region5
  $region4: #{encoder_forward.3} parent=0 // pred_region
    _
  $region5: #{encoder_forward.3} parent=0 // pred_fallthru
    _
  // Predicated region
  $region6: #{encoder_forward.3} parent=0 // pred_check
    _
  $region7: #{encoder_forward.3} parent=0 // pred_check_branch
    %13 = sbr.rel (0) target = $region9
  $region8: #{encoder_forward.3} parent=0 // pred_region
    _
  $region9: #{encoder_forward.3} parent=0 // pred_fallthru
    _
  // Predicated region
  $region10: #{encoder_forward.3} parent=0 // pred_check
    _
  $region11: #{encoder_forward.3} parent=0 // pred_check_branch
    %15 = sbr.rel (0) target = $region13
  $region12: #{encoder_forward.3} parent=0 // pred_region
    _
  $region13: #{encoder_forward.3} parent=0 // pred_fallthru
    _
  // Predicated region
  $region14: #{encoder_forward.3} parent=0 // pred_check
    _
  $region15: #{encoder_forward.3} parent=0 // pred_check_branch
    %17 = sbr.rel (0) target = $region17
  $region16: #{encoder_forward.3} parent=0 // pred_region
    _
  $region17: #{encoder_forward.3} parent=0 // pred_fallthru
    _
  // Predicated region
  $region18: #{encoder_forward.3} parent=0 // pred_check
    _
  $region19: #{encoder_forward.3} parent=0 // pred_check_branch
    %19 = sbr.rel (0) target = $region21
  $region20: #{encoder_forward.3} parent=0 // pred_region
    _
  $region21: #{encoder_forward.3} parent=0 // pred_fallthru
    _
  %p20 = scmp.eq.s32.totalorder 0, 0
  // Predicated region
  $region22: #{encoder_forward.3} parent=0 // pred_check
    %p21 = pneg %p20
  $region23: #{encoder_forward.3} parent=0 // pred_check_branch
    %23 = sbr.rel (%p21) target = $region25
  $region24: #{encoder_forward.3} parent=0 // pred_region
    %24 = vst [vmem:[#allocation2] sm:$0xff] 0.0
    %25 = vst [vmem:[#allocation3] sm:$0xff] 0.0
    %26 = vst [vmem:[#allocation4] sm:$0xff] 0.0
    %27 = vst [vmem:[#allocation5] sm:$0xff] 0.0
  $region25: #{encoder_forward.3} parent=0 // pred_fallthru
    _
  %v28 = vld [vmem:[%s4] sm:$0xf]
  %v29 = vld [vmem:[#allocation2] sm:$0xff]
  %v30 = vld [vmem:[#allocation3] sm:$0xff]
  %v31 = vld [vmem:[#allocation4] sm:$0xff]
  %v32 = vld [vmem:[#allocation5] sm:$0xff]
  %v33 = vld [vmem:[%s0] sm:$0xff]
  %v34 = vld [vmem:[%s0 + $0x8] sm:$0xff]
  %v35 = vld [vmem:[%s0 + $0x10] sm:$0xff]
  %v36 = vld [vmem:[%s0 + $0x18] sm:$0xff]
  %v37 = vld [vmem:[%s1] sm:$0xff]
  %v38 = vld [vmem:[%s1 + $0x8] sm:$0xff]
  %v39 = vld [vmem:[%s1 + $0x10] sm:$0xff]
  %v40 = vld [vmem:[%s1 + $0x18] sm:$0xff]
  %v41 = vld [vmem:[%s1 + $0x20] sm:$0xff]
  %v42 = vld [vmem:[%s1 + $0x28] sm:$0xff]
  %v43 = vld [vmem:[%s1 + $0x30] sm:$0xff]
  %v44 = vld [vmem:[%s1 + $0x38] sm:$0xff]
  %v45 = vld [vmem:[%s1 + $0x40] sm:$0xff]
  %v46 = vld [vmem:[%s1 + $0x48] sm:$0xff]
  %v47 = vld [vmem:[%s1 + $0x50] sm:$0xff]
  %v48 = vld [vmem:[%s1 + $0x58] sm:$0xff]
  %v49 = vld [vmem:[%s1 + $0x60] sm:$0xff]
  %v50 = vld [vmem:[%s1 + $0x68] sm:$0xff]
  %v51 = vld [vmem:[%s1 + $0x70] sm:$0xff]
  %v52 = vld [vmem:[%s1 + $0x78] sm:$0xff]
  %v53 = vld [vmem:[%s1 + $0x80] sm:$0xff]
  %v54 = vld [vmem:[%s1 + $0x88] sm:$0xff]
  %v55 = vld [vmem:[%s1 + $0x90] sm:$0xff]
  %v56 = vld [vmem:[%s1 + $0x98] sm:$0xff]
  %v57 = vld [vmem:[%s1 + $0xa0] sm:$0xff]
  %v58 = vld [vmem:[%s1 + $0xa8] sm:$0xff]
  %v59 = vld [vmem:[%s1 + $0xb0] sm:$0xff]
  %v60 = vld [vmem:[%s1 + $0xb8] sm:$0xff]
  %v61 = vld [vmem:[%s1 + $0xc0] sm:$0xff]
  %v62 = vld [vmem:[%s1 + $0xc8] sm:$0xff]
  %v63 = vld [vmem:[%s1 + $0xd0] sm:$0xff]
  %v64 = vld [vmem:[%s1 + $0xd8] sm:$0xff]
  %v65 = vld [vmem:[%s1 + $0xe0] sm:$0xff]
  %v66 = vld [vmem:[%s1 + $0xe8] sm:$0xff]
  %v67 = vld [vmem:[%s1 + $0xf0] sm:$0xff]
  %v68 = vld [vmem:[%s1 + $0xf8] sm:$0xff]
  %v69 = vld [vmem:[%s1 + $0x100] sm:$0xff]
  %v70 = vld [vmem:[%s1 + $0x108] sm:$0xff]
  %v71 = vld [vmem:[%s1 + $0x110] sm:$0xff]
  %v72 = vld [vmem:[%s1 + $0x118] sm:$0xff]
  %v73 = vld [vmem:[%s1 + $0x120] sm:$0xff]
  %v74 = vld [vmem:[%s1 + $0x128] sm:$0xff]
  %v75 = vld [vmem:[%s1 + $0x130] sm:$0xff]
  %v76 = vld [vmem:[%s1 + $0x138] sm:$0xff]
  %v77 = vld [vmem:[%s1 + $0x140] sm:$0xff]
  %v78 = vld [vmem:[%s1 + $0x148] sm:$0xff]
  %v79 = vld [vmem:[%s1 + $0x150] sm:$0xff]
  %v80 = vld [vmem:[%s1 + $0x158] sm:$0xff]
  %v81 = vld [vmem:[%s1 + $0x160] sm:$0xff]
  %v82 = vld [vmem:[%s1 + $0x168] sm:$0xff]
  %v83 = vld [vmem:[%s1 + $0x170] sm:$0xff]
  %v84 = vld [vmem:[%s1 + $0x178] sm:$0xff]
  %v85 = vld [vmem:[%s1 + $0x180] sm:$0xff]
  %v86 = vld [vmem:[%s1 + $0x188] sm:$0xff]
  %v87 = vld [vmem:[%s1 + $0x190] sm:$0xff]
  %v88 = vld [vmem:[%s1 + $0x198] sm:$0xff]
  %v89 = vld [vmem:[%s1 + $0x1a0] sm:$0xff]
  %v90 = vld [vmem:[%s1 + $0x1a8] sm:$0xff]
  %v91 = vld [vmem:[%s1 + $0x1b0] sm:$0xff]
  %v92 = vld [vmem:[%s1 + $0x1b8] sm:$0xff]
  %v93 = vld [vmem:[%s1 + $0x1c0] sm:$0xff]
  %v94 = vld [vmem:[%s1 + $0x1c8] sm:$0xff]
  %v95 = vld [vmem:[%s1 + $0x1d0] sm:$0xff]
  %v96 = vld [vmem:[%s1 + $0x1d8] sm:$0xff]
  %v97 = vld [vmem:[%s1 + $0x1e0] sm:$0xff]
  %v98 = vld [vmem:[%s1 + $0x1e8] sm:$0xff]
  %v99 = vld [vmem:[%s1 + $0x1f0] sm:$0xff]
  %v100 = vld [vmem:[%s1 + $0x1f8] sm:$0xff]
  %101 = vmatprep.subr.mxu0 %v38
  %102 = vmatpush1.msra.mxu0 %v37
  %103 = vmatprep.subr.mxu0 %v42
  %104 = vmatpush1.msra.mxu0 %v41
  %105 = vmatprep.subr.mxu0 %v46
  %106 = vmatpush1.msra.mxu0 %v45
  %107 = vmatprep.subr.mxu0 %v50
  %108 = vmatpush1.msra.mxu0 %v49
  %109 = vmatprep.subr.mxu0 %v54
  %110 = vmatpush1.msra.mxu0 %v53
  %111 = vmatprep.subr.mxu0 %v58
  %112 = vmatpush1.msra.mxu0 %v57
  %113 = vmatprep.subr.mxu0 %v62
  %114 = vmatpush1.msra.mxu0 %v61
  %115 = vmatprep.subr.mxu0 %v66
  %116 = vmatpush1.msra.mxu0 %v65
  %117 = vmatprep.subr.mxu0 %v70
  %118 = vmatpush1.msra.mxu0 %v69
  %119 = vmatprep.subr.mxu0 %v74
  %120 = vmatpush1.msra.mxu0 %v73
  %121 = vmatprep.subr.mxu0 %v78
  %122 = vmatpush1.msra.mxu0 %v77
  %123 = vmatprep.subr.mxu0 %v82
  %124 = vmatpush1.msra.mxu0 %v81
  %125 = vmatprep.subr.mxu0 %v86
  %126 = vmatpush1.msra.mxu0 %v85
  %127 = vmatprep.subr.mxu0 %v90
  %128 = vmatpush1.msra.mxu0 %v89
  %129 = vmatprep.subr.mxu0 %v94
  %130 = vmatpush1.msra.mxu0 %v93
  %131 = vmatprep.subr.mxu0 %v98
  %132 = vmatpush1.msra.mxu0 %v97
  %133 = vmatprep.subr.mxu0 0.0
  %134 = vmatpush1.msra.mxu0 0.0
  %135 = vmatprep.subr.mxu0 0.0
  %136 = vmatpush1.msra.mxu0 0.0
  %137 = vmatprep.subr.mxu0 0.0
  %138 = vmatpush1.msra.mxu0 0.0
  %139 = vmatprep.subr.mxu0 0.0
  %140 = vmatpush1.msra.mxu0 0.0
  %141 = vmatprep.subr.mxu0 0.0
  %142 = vmatpush1.msra.mxu0 0.0
  %143 = vmatprep.subr.mxu0 0.0
  %144 = vmatpush1.msra.mxu0 0.0
  %145 = vmatprep.subr.mxu0 0.0
  %146 = vmatpush1.msra.mxu0 0.0
  %147 = vmatprep.subr.mxu0 0.0
  %148 = vmatpush1.msra.mxu0 0.0
  %149 = vmatprep.subr.mxu0 0.0
  %150 = vmatpush1.msra.mxu0 0.0
  %151 = vmatprep.subr.mxu0 0.0
  %152 = vmatpush1.msra.mxu0 0.0
  %153 = vmatprep.subr.mxu0 0.0
  %154 = vmatpush1.msra.mxu0 0.0
  %155 = vmatprep.subr.mxu0 0.0
  %156 = vmatpush1.msra.mxu0 0.0
  %157 = vmatprep.subr.mxu0 0.0
  %158 = vmatpush1.msra.mxu0 0.0
  %159 = vmatprep.subr.mxu0 0.0
  %160 = vmatpush1.msra.mxu0 0.0
  %161 = vmatprep.subr.mxu0 0.0
  %162 = vmatpush1.msra.mxu0 0.0
  %163 = vmatprep.subr.mxu0 0.0
  %164 = vmatpush1.msra.mxu0 0.0
  %165 = vmatprep.mubr.f32.mxu0 0.0
  %166 = vmatmul.mubr.f32.gmra.mrb[0].mxu0 %v29
  %v167 = vpop.f32.mrb[0].mxu0
  %v168 = vadd.f32 0.0, %v167
  %v169 = vpop.f32.mrb[0].mxu0
  %v170 = vadd.f32 0.0, %v169
  %171 = vdwg.mxu0
  %172 = vmatprep.subr.mxu0 %v40
  %173 = vmatpush1.msra.mxu0 %v39
  %174 = vmatprep.subr.mxu0 %v44
  %175 = vmatpush1.msra.mxu0 %v43
  %176 = vmatprep.subr.mxu0 %v48
  %177 = vmatpush1.msra.mxu0 %v47
  %178 = vmatprep.subr.mxu0 %v52
  %179 = vmatpush1.msra.mxu0 %v51
  %180 = vmatprep.subr.mxu0 %v56
  %181 = vmatpush1.msra.mxu0 %v55
  %182 = vmatprep.subr.mxu0 %v60
  %183 = vmatpush1.msra.mxu0 %v59
  %184 = vmatprep.subr.mxu0 %v64
  %185 = vmatpush1.msra.mxu0 %v63
  %186 = vmatprep.subr.mxu0 %v68
  %187 = vmatpush1.msra.mxu0 %v67
  %188 = vmatprep.subr.mxu0 %v72
  %189 = vmatpush1.msra.mxu0 %v71
  %190 = vmatprep.subr.mxu0 %v76
  %191 = vmatpush1.msra.mxu0 %v75
  %192 = vmatprep.subr.mxu0 %v80
  %193 = vmatpush1.msra.mxu0 %v79
  %194 = vmatprep.subr.mxu0 %v84
  %195 = vmatpush1.msra.mxu0 %v83
  %196 = vmatprep.subr.mxu0 %v88
  %197 = vmatpush1.msra.mxu0 %v87
  %198 = vmatprep.subr.mxu0 %v92
  %199 = vmatpush1.msra.mxu0 %v91
  %200 = vmatprep.subr.mxu0 %v96
  %201 = vmatpush1.msra.mxu0 %v95
  %202 = vmatprep.subr.mxu0 %v100
  %203 = vmatpush1.msra.mxu0 %v99
  %204 = vmatprep.subr.mxu0 0.0
  %205 = vmatpush1.msra.mxu0 0.0
  %206 = vmatprep.subr.mxu0 0.0
  %207 = vmatpush1.msra.mxu0 0.0
  %208 = vmatprep.subr.mxu0 0.0
  %209 = vmatpush1.msra.mxu0 0.0
  %210 = vmatprep.subr.mxu0 0.0
  %211 = vmatpush1.msra.mxu0 0.0
  %212 = vmatprep.subr.mxu0 0.0
  %213 = vmatpush1.msra.mxu0 0.0
  %214 = vmatprep.subr.mxu0 0.0
  %215 = vmatpush1.msra.mxu0 0.0
  %216 = vmatprep.subr.mxu0 0.0
  %217 = vmatpush1.msra.mxu0 0.0
  %218 = vmatprep.subr.mxu0 0.0
  %219 = vmatpush1.msra.mxu0 0.0
  %220 = vmatprep.subr.mxu0 0.0
  %221 = vmatpush1.msra.mxu0 0.0
  %222 = vmatprep.subr.mxu0 0.0
  %223 = vmatpush1.msra.mxu0 0.0
  %224 = vmatprep.subr.mxu0 0.0
  %225 = vmatpush1.msra.mxu0 0.0
  %226 = vmatprep.subr.mxu0 0.0
  %227 = vmatpush1.msra.mxu0 0.0
  %228 = vmatprep.subr.mxu0 0.0
  %229 = vmatpush1.msra.mxu0 0.0
  %230 = vmatprep.subr.mxu0 0.0
  %231 = vmatpush1.msra.mxu0 0.0
  %232 = vmatprep.subr.mxu0 0.0
  %233 = vmatpush1.msra.mxu0 0.0
  %234 = vmatprep.subr.mxu0 0.0
  %235 = vmatpush1.msra.mxu0 0.0
  %236 = vmatprep.mubr.f32.mxu0 0.0
  %237 = vmatmul.mubr.f32.gmra.mrb[0].mxu0 %v29
  %v238 = vpop.f32.mrb[0].mxu0
  %v239 = vadd.f32 0.0, %v238
  %v240 = vpop.f32.mrb[0].mxu0
  %v241 = vadd.f32 0.0, %v240
  %242 = vdwg.mxu0
  %v243 = vadd.f32 %v33, %v168
  %v244 = vadd.f32 %v34, %v170
  %v245 = vadd.f32 %v35, %v239
  %v246 = vadd.f32 %v36, %v241
  %v247 = vmul.f32 %v243, 0.5
  %v248 = vmul.f32 %v244, 0.5
  %v249 = vmul.f32 %v245, 0.5
  %v250 = vtanh.pop %v247
  %v251 = vtanh.pop %v248
  %v252 = vtanh.pop %v249
  %v253 = vmul.f32 %v250, 0.5
  %v254 = vmul.f32 %v251, 0.5
  %v255 = vmul.f32 %v252, 0.5
  %v256 = vadd.f32 %v253, 0.5
  %v257 = vadd.f32 %v254, 0.5
  %v258 = vadd.f32 %v255, 0.5
  %v259 = vtanh.pop %v246
  %v260 = vmul.f32 %v257, %v30
  %v261 = vmul.f32 %v256, %v259
  %v262 = vadd.f32 %v260, %v261
  %v263 = vtanh.pop %v262
  %v264 = vmul.f32 %v258, %v263
  %v265 = vld [vmem:[%s2] sm:$0xff]
  %v266 = vld [vmem:[%s2 + $0x8] sm:$0xff]
  %v267 = vld [vmem:[%s2 + $0x10] sm:$0xff]
  %v268 = vld [vmem:[%s2 + $0x18] sm:$0xff]
  %v269 = vld [vmem:[%s2 + $0x20] sm:$0xff]
  %v270 = vld [vmem:[%s2 + $0x28] sm:$0xff]
  %v271 = vld [vmem:[%s2 + $0x30] sm:$0xff]
  %v272 = vld [vmem:[%s2 + $0x38] sm:$0xff]
  %v273 = vld [vmem:[%s2 + $0x40] sm:$0xff]
  %v274 = vld [vmem:[%s2 + $0x48] sm:$0xff]
  %v275 = vld [vmem:[%s2 + $0x50] sm:$0xff]
  %v276 = vld [vmem:[%s2 + $0x58] sm:$0xff]
  %v277 = vld [vmem:[%s2 + $0x60] sm:$0xff]
  %v278 = vld [vmem:[%s2 + $0x68] sm:$0xff]
  %v279 = vld [vmem:[%s2 + $0x70] sm:$0xff]
  %v280 = vld [vmem:[%s2 + $0x78] sm:$0xff]
  %v281 = vld [vmem:[%s2 + $0x80] sm:$0xff]
  %v282 = vld [vmem:[%s2 + $0x88] sm:$0xff]
  %v283 = vld [vmem:[%s2 + $0x90] sm:$0xff]
  %v284 = vld [vmem:[%s2 + $0x98] sm:$0xff]
  %v285 = vld [vmem:[%s2 + $0xa0] sm:$0xff]
  %v286 = vld [vmem:[%s2 + $0xa8] sm:$0xff]
  %v287 = vld [vmem:[%s2 + $0xb0] sm:$0xff]
  %v288 = vld [vmem:[%s2 + $0xb8] sm:$0xff]
  %v289 = vld [vmem:[%s2 + $0xc0] sm:$0xff]
  %v290 = vld [vmem:[%s2 + $0xc8] sm:$0xff]
  %v291 = vld [vmem:[%s2 + $0xd0] sm:$0xff]
  %v292 = vld [vmem:[%s2 + $0xd8] sm:$0xff]
  %v293 = vld [vmem:[%s2 + $0xe0] sm:$0xff]
  %v294 = vld [vmem:[%s2 + $0xe8] sm:$0xff]
  %v295 = vld [vmem:[%s2 + $0xf0] sm:$0xff]
  %v296 = vld [vmem:[%s2 + $0xf8] sm:$0xff]
  %v297 = vld [vmem:[%s2 + $0x100] sm:$0xff]
  %v298 = vld [vmem:[%s2 + $0x108] sm:$0xff]
  %v299 = vld [vmem:[%s2 + $0x110] sm:$0xff]
  %v300 = vld [vmem:[%s2 + $0x118] sm:$0xff]
  %v301 = vld [vmem:[%s2 + $0x120] sm:$0xff]
  %v302 = vld [vmem:[%s2 + $0x128] sm:$0xff]
  %v303 = vld [vmem:[%s2 + $0x130] sm:$0xff]
  %v304 = vld [vmem:[%s2 + $0x138] sm:$0xff]
  %v305 = vld [vmem:[%s2 + $0x140] sm:$0xff]
  %v306 = vld [vmem:[%s2 + $0x148] sm:$0xff]
  %v307 = vld [vmem:[%s2 + $0x150] sm:$0xff]
  %v308 = vld [vmem:[%s2 + $0x158] sm:$0xff]
  %v309 = vld [vmem:[%s2 + $0x160] sm:$0xff]
  %v310 = vld [vmem:[%s2 + $0x168] sm:$0xff]
  %v311 = vld [vmem:[%s2 + $0x170] sm:$0xff]
  %v312 = vld [vmem:[%s2 + $0x178] sm:$0xff]
  %v313 = vld [vmem:[%s2 + $0x180] sm:$0xff]
  %v314 = vld [vmem:[%s2 + $0x188] sm:$0xff]
  %v315 = vld [vmem:[%s2 + $0x190] sm:$0xff]
  %v316 = vld [vmem:[%s2 + $0x198] sm:$0xff]
  %v317 = vld [vmem:[%s2 + $0x1a0] sm:$0xff]
  %v318 = vld [vmem:[%s2 + $0x1a8] sm:$0xff]
  %v319 = vld [vmem:[%s2 + $0x1b0] sm:$0xff]
  %v320 = vld [vmem:[%s2 + $0x1b8] sm:$0xff]
  %v321 = vld [vmem:[%s2 + $0x1c0] sm:$0xff]
  %v322 = vld [vmem:[%s2 + $0x1c8] sm:$0xff]
  %v323 = vld [vmem:[%s2 + $0x1d0] sm:$0xff]
  %v324 = vld [vmem:[%s2 + $0x1d8] sm:$0xff]
  %v325 = vld [vmem:[%s2 + $0x1e0] sm:$0xff]
  %v326 = vld [vmem:[%s2 + $0x1e8] sm:$0xff]
  %v327 = vld [vmem:[%s2 + $0x1f0] sm:$0xff]
  %v328 = vld [vmem:[%s2 + $0x1f8] sm:$0xff]
  %v329 = vld [vmem:[%s3] sm:$0xff]
  %v330 = vld [vmem:[%s3 + $0x8] sm:$0xff]
  %v331 = vld [vmem:[%s3 + $0x10] sm:$0xff]
  %v332 = vld [vmem:[%s3 + $0x18] sm:$0xff]
  %v333 = vld [vmem:[%s3 + $0x20] sm:$0xff]
  %v334 = vld [vmem:[%s3 + $0x28] sm:$0xff]
  %v335 = vld [vmem:[%s3 + $0x30] sm:$0xff]
  %v336 = vld [vmem:[%s3 + $0x38] sm:$0xff]
  %v337 = vld [vmem:[%s3 + $0x40] sm:$0xff]
  %v338 = vld [vmem:[%s3 + $0x48] sm:$0xff]
  %v339 = vld [vmem:[%s3 + $0x50] sm:$0xff]
  %v340 = vld [vmem:[%s3 + $0x58] sm:$0xff]
  %v341 = vld [vmem:[%s3 + $0x60] sm:$0xff]
  %v342 = vld [vmem:[%s3 + $0x68] sm:$0xff]
  %v343 = vld [vmem:[%s3 + $0x70] sm:$0xff]
  %v344 = vld [vmem:[%s3 + $0x78] sm:$0xff]
  %v345 = vld [vmem:[%s3 + $0x80] sm:$0xff]
  %v346 = vld [vmem:[%s3 + $0x88] sm:$0xff]
  %v347 = vld [vmem:[%s3 + $0x90] sm:$0xff]
  %v348 = vld [vmem:[%s3 + $0x98] sm:$0xff]
  %v349 = vld [vmem:[%s3 + $0xa0] sm:$0xff]
  %v350 = vld [vmem:[%s3 + $0xa8] sm:$0xff]
  %v351 = vld [vmem:[%s3 + $0xb0] sm:$0xff]
  %v352 = vld [vmem:[%s3 + $0xb8] sm:$0xff]
  %v353 = vld [vmem:[%s3 + $0xc0] sm:$0xff]
  %v354 = vld [vmem:[%s3 + $0xc8] sm:$0xff]
  %v355 = vld [vmem:[%s3 + $0xd0] sm:$0xff]
  %v356 = vld [vmem:[%s3 + $0xd8] sm:$0xff]
  %v357 = vld [vmem:[%s3 + $0xe0] sm:$0xff]
  %v358 = vld [vmem:[%s3 + $0xe8] sm:$0xff]
  %v359 = vld [vmem:[%s3 + $0xf0] sm:$0xff]
  %v360 = vld [vmem:[%s3 + $0xf8] sm:$0xff]
  %v361 = vld [vmem:[%s3 + $0x100] sm:$0xff]
  %v362 = vld [vmem:[%s3 + $0x108] sm:$0xff]
  %v363 = vld [vmem:[%s3 + $0x110] sm:$0xff]
  %v364 = vld [vmem:[%s3 + $0x118] sm:$0xff]
  %v365 = vld [vmem:[%s3 + $0x120] sm:$0xff]
  %v366 = vld [vmem:[%s3 + $0x128] sm:$0xff]
  %v367 = vld [vmem:[%s3 + $0x130] sm:$0xff]
  %v368 = vld [vmem:[%s3 + $0x138] sm:$0xff]
  %v369 = vld [vmem:[%s3 + $0x140] sm:$0xff]
  %v370 = vld [vmem:[%s3 + $0x148] sm:$0xff]
  %v371 = vld [vmem:[%s3 + $0x150] sm:$0xff]
  %v372 = vld [vmem:[%s3 + $0x158] sm:$0xff]
  %v373 = vld [vmem:[%s3 + $0x160] sm:$0xff]
  %v374 = vld [vmem:[%s3 + $0x168] sm:$0xff]
  %v375 = vld [vmem:[%s3 + $0x170] sm:$0xff]
  %v376 = vld [vmem:[%s3 + $0x178] sm:$0xff]
  %v377 = vld [vmem:[%s3 + $0x180] sm:$0xff]
  %v378 = vld [vmem:[%s3 + $0x188] sm:$0xff]
  %v379 = vld [vmem:[%s3 + $0x190] sm:$0xff]
  %v380 = vld [vmem:[%s3 + $0x198] sm:$0xff]
  %v381 = vld [vmem:[%s3 + $0x1a0] sm:$0xff]
  %v382 = vld [vmem:[%s3 + $0x1a8] sm:$0xff]
  %v383 = vld [vmem:[%s3 + $0x1b0] sm:$0xff]
  %v384 = vld [vmem:[%s3 + $0x1b8] sm:$0xff]
  %v385 = vld [vmem:[%s3 + $0x1c0] sm:$0xff]
  %v386 = vld [vmem:[%s3 + $0x1c8] sm:$0xff]
  %v387 = vld [vmem:[%s3 + $0x1d0] sm:$0xff]
  %v388 = vld [vmem:[%s3 + $0x1d8] sm:$0xff]
  %v389 = vld [vmem:[%s3 + $0x1e0] sm:$0xff]
  %v390 = vld [vmem:[%s3 + $0x1e8] sm:$0xff]
  %v391 = vld [vmem:[%s3 + $0x1f0] sm:$0xff]
  %v392 = vld [vmem:[%s3 + $0x1f8] sm:$0xff]
  %393 = vmatprep.subr.mxu0 %v330
  %394 = vmatpush1.msra.mxu0 %v329
  %395 = vmatprep.subr.mxu0 %v334
  %396 = vmatpush1.msra.mxu0 %v333
  %397 = vmatprep.subr.mxu0 %v338
  %398 = vmatpush1.msra.mxu0 %v337
  %399 = vmatprep.subr.mxu0 %v342
  %400 = vmatpush1.msra.mxu0 %v341
  %401 = vmatprep.subr.mxu0 %v346
  %402 = vmatpush1.msra.mxu0 %v345
  %403 = vmatprep.subr.mxu0 %v350
  %404 = vmatpush1.msra.mxu0 %v349
  %405 = vmatprep.subr.mxu0 %v354
  %406 = vmatpush1.msra.mxu0 %v353
  %407 = vmatprep.subr.mxu0 %v358
  %408 = vmatpush1.msra.mxu0 %v357
  %409 = vmatprep.subr.mxu0 %v362
  %410 = vmatpush1.msra.mxu0 %v361
  %411 = vmatprep.subr.mxu0 %v366
  %412 = vmatpush1.msra.mxu0 %v365
  %413 = vmatprep.subr.mxu0 %v370
  %414 = vmatpush1.msra.mxu0 %v369
  %415 = vmatprep.subr.mxu0 %v374
  %416 = vmatpush1.msra.mxu0 %v373
  %417 = vmatprep.subr.mxu0 %v378
  %418 = vmatpush1.msra.mxu0 %v377
  %419 = vmatprep.subr.mxu0 %v382
  %420 = vmatpush1.msra.mxu0 %v381
  %421 = vmatprep.subr.mxu0 %v386
  %422 = vmatpush1.msra.mxu0 %v385
  %423 = vmatprep.subr.mxu0 %v390
  %424 = vmatpush1.msra.mxu0 %v389
  %425 = vmatprep.subr.mxu0 0.0
  %426 = vmatpush1.msra.mxu0 0.0
  %427 = vmatprep.subr.mxu0 0.0
  %428 = vmatpush1.msra.mxu0 0.0
  %429 = vmatprep.subr.mxu0 0.0
  %430 = vmatpush1.msra.mxu0 0.0
  %431 = vmatprep.subr.mxu0 0.0
  %432 = vmatpush1.msra.mxu0 0.0
  %433 = vmatprep.subr.mxu0 0.0
  %434 = vmatpush1.msra.mxu0 0.0
  %435 = vmatprep.subr.mxu0 0.0
  %436 = vmatpush1.msra.mxu0 0.0
  %437 = vmatprep.subr.mxu0 0.0
  %438 = vmatpush1.msra.mxu0 0.0
  %439 = vmatprep.subr.mxu0 0.0
  %440 = vmatpush1.msra.mxu0 0.0
  %441 = vmatprep.subr.mxu0 0.0
  %442 = vmatpush1.msra.mxu0 0.0
  %443 = vmatprep.subr.mxu0 0.0
  %444 = vmatpush1.msra.mxu0 0.0
  %445 = vmatprep.subr.mxu0 0.0
  %446 = vmatpush1.msra.mxu0 0.0
  %447 = vmatprep.subr.mxu0 0.0
  %448 = vmatpush1.msra.mxu0 0.0
  %449 = vmatprep.subr.mxu0 0.0
  %450 = vmatpush1.msra.mxu0 0.0
  %451 = vmatprep.subr.mxu0 0.0
  %452 = vmatpush1.msra.mxu0 0.0
  %453 = vmatprep.subr.mxu0 0.0
  %454 = vmatpush1.msra.mxu0 0.0
  %455 = vmatprep.subr.mxu0 0.0
  %456 = vmatpush1.msra.mxu0 0.0
  %457 = vmatprep.mubr.f32.mxu0 0.0
  %458 = vmatmul.mubr.f32.gmra.mrb[0].mxu0 %v31
  %v459 = vpop.f32.mrb[0].mxu0
  %v460 = vadd.f32 0.0, %v459
  %v461 = vpop.f32.mrb[0].mxu0
  %v462 = vadd.f32 0.0, %v461
  %463 = vdwg.mxu0
  %464 = vmatprep.subr.mxu0 %v332
  %465 = vmatpush1.msra.mxu0 %v331
  %466 = vmatprep.subr.mxu0 %v336
  %467 = vmatpush1.msra.mxu0 %v335
  %468 = vmatprep.subr.mxu0 %v340
  %469 = vmatpush1.msra.mxu0 %v339
  %470 = vmatprep.subr.mxu0 %v344
  %471 = vmatpush1.msra.mxu0 %v343
  %472 = vmatprep.subr.mxu0 %v348
  %473 = vmatpush1.msra.mxu0 %v347
  %474 = vmatprep.subr.mxu0 %v352
  %475 = vmatpush1.msra.mxu0 %v351
  %476 = vmatprep.subr.mxu0 %v356
  %477 = vmatpush1.msra.mxu0 %v355
  %478 = vmatprep.subr.mxu0 %v360
  %479 = vmatpush1.msra.mxu0 %v359
  %480 = vmatprep.subr.mxu0 %v364
  %481 = vmatpush1.msra.mxu0 %v363
  %482 = vmatprep.subr.mxu0 %v368
  %483 = vmatpush1.msra.mxu0 %v367
  %484 = vmatprep.subr.mxu0 %v372
  %485 = vmatpush1.msra.mxu0 %v371
  %486 = vmatprep.subr.mxu0 %v376
  %487 = vmatpush1.msra.mxu0 %v375
  %488 = vmatprep.subr.mxu0 %v380
  %489 = vmatpush1.msra.mxu0 %v379
  %490 = vmatprep.subr.mxu0 %v384
  %491 = vmatpush1.msra.mxu0 %v383
  %492 = vmatprep.subr.mxu0 %v388
  %493 = vmatpush1.msra.mxu0 %v387
  %494 = vmatprep.subr.mxu0 %v392
  %495 = vmatpush1.msra.mxu0 %v391
  %496 = vmatprep.subr.mxu0 0.0
  %497 = vmatpush1.msra.mxu0 0.0
  %498 = vmatprep.subr.mxu0 0.0
  %499 = vmatpush1.msra.mxu0 0.0
  %500 = vmatprep.subr.mxu0 0.0
  %501 = vmatpush1.msra.mxu0 0.0
  %502 = vmatprep.subr.mxu0 0.0
  %503 = vmatpush1.msra.mxu0 0.0
  %504 = vmatprep.subr.mxu0 0.0
  %505 = vmatpush1.msra.mxu0 0.0
  %506 = vmatprep.subr.mxu0 0.0
  %507 = vmatpush1.msra.mxu0 0.0
  %508 = vmatprep.subr.mxu0 0.0
  %509 = vmatpush1.msra.mxu0 0.0
  %510 = vmatprep.subr.mxu0 0.0
  %511 = vmatpush1.msra.mxu0 0.0
  %512 = vmatprep.subr.mxu0 0.0
  %513 = vmatpush1.msra.mxu0 0.0
  %514 = vmatprep.subr.mxu0 0.0
  %515 = vmatpush1.msra.mxu0 0.0
  %516 = vmatprep.subr.mxu0 0.0
  %517 = vmatpush1.msra.mxu0 0.0
  %518 = vmatprep.subr.mxu0 0.0
  %519 = vmatpush1.msra.mxu0 0.0
  %520 = vmatprep.subr.mxu0 0.0
  %521 = vmatpush1.msra.mxu0 0.0
  %522 = vmatprep.subr.mxu0 0.0
  %523 = vmatpush1.msra.mxu0 0.0
  %524 = vmatprep.subr.mxu0 0.0
  %525 = vmatpush1.msra.mxu0 0.0
  %526 = vmatprep.subr.mxu0 0.0
  %527 = vmatpush1.msra.mxu0 0.0
  %528 = vmatprep.mubr.f32.mxu0 0.0
  %529 = vmatmul.mubr.f32.gmra.mrb[0].mxu0 %v31
  %v530 = vpop.f32.mrb[0].mxu0
  %v531 = vadd.f32 0.0, %v530
  %v532 = vpop.f32.mrb[0].mxu0
  %v533 = vadd.f32 0.0, %v532
  %534 = vdwg.mxu0
  %535 = vmatprep.subr.mxu0 %v266
  %536 = vmatpush1.msra.mxu0 %v265
  %537 = vmatprep.subr.mxu0 %v270
  %538 = vmatpush1.msra.mxu0 %v269
  %539 = vmatprep.subr.mxu0 %v274
  %540 = vmatpush1.msra.mxu0 %v273
  %541 = vmatprep.subr.mxu0 %v278
  %542 = vmatpush1.msra.mxu0 %v277
  %543 = vmatprep.subr.mxu0 %v282
  %544 = vmatpush1.msra.mxu0 %v281
  %545 = vmatprep.subr.mxu0 %v286
  %546 = vmatpush1.msra.mxu0 %v285
  %547 = vmatprep.subr.mxu0 %v290
  %548 = vmatpush1.msra.mxu0 %v289
  %549 = vmatprep.subr.mxu0 %v294
  %550 = vmatpush1.msra.mxu0 %v293
  %551 = vmatprep.subr.mxu0 %v298
  %552 = vmatpush1.msra.mxu0 %v297
  %553 = vmatprep.subr.mxu0 %v302
  %554 = vmatpush1.msra.mxu0 %v301
  %555 = vmatprep.subr.mxu0 %v306
  %556 = vmatpush1.msra.mxu0 %v305
  %557 = vmatprep.subr.mxu0 %v310
  %558 = vmatpush1.msra.mxu0 %v309
  %559 = vmatprep.subr.mxu0 %v314
  %560 = vmatpush1.msra.mxu0 %v313
  %561 = vmatprep.subr.mxu0 %v318
  %562 = vmatpush1.msra.mxu0 %v317
  %563 = vmatprep.subr.mxu0 %v322
  %564 = vmatpush1.msra.mxu0 %v321
  %565 = vmatprep.subr.mxu0 %v326
  %566 = vmatpush1.msra.mxu0 %v325
  %567 = vmatprep.subr.mxu0 0.0
  %568 = vmatpush1.msra.mxu0 0.0
  %569 = vmatprep.subr.mxu0 0.0
  %570 = vmatpush1.msra.mxu0 0.0
  %571 = vmatprep.subr.mxu0 0.0
  %572 = vmatpush1.msra.mxu0 0.0
  %573 = vmatprep.subr.mxu0 0.0
  %574 = vmatpush1.msra.mxu0 0.0
  %575 = vmatprep.subr.mxu0 0.0
  %576 = vmatpush1.msra.mxu0 0.0
  %577 = vmatprep.subr.mxu0 0.0
  %578 = vmatpush1.msra.mxu0 0.0
  %579 = vmatprep.subr.mxu0 0.0
  %580 = vmatpush1.msra.mxu0 0.0
  %581 = vmatprep.subr.mxu0 0.0
  %582 = vmatpush1.msra.mxu0 0.0
  %583 = vmatprep.subr.mxu0 0.0
  %584 = vmatpush1.msra.mxu0 0.0
  %585 = vmatprep.subr.mxu0 0.0
  %586 = vmatpush1.msra.mxu0 0.0
  %587 = vmatprep.subr.mxu0 0.0
  %588 = vmatpush1.msra.mxu0 0.0
  %589 = vmatprep.subr.mxu0 0.0
  %590 = vmatpush1.msra.mxu0 0.0
  %591 = vmatprep.subr.mxu0 0.0
  %592 = vmatpush1.msra.mxu0 0.0
  %593 = vmatprep.subr.mxu0 0.0
  %594 = vmatpush1.msra.mxu0 0.0
  %595 = vmatprep.subr.mxu0 0.0
  %596 = vmatpush1.msra.mxu0 0.0
  %597 = vmatprep.subr.mxu0 0.0
  %598 = vmatpush1.msra.mxu0 0.0
  %599 = vmatprep.mubr.f32.mxu0 0.0
  %600 = vmatmul.mubr.f32.gmra.mrb[0].mxu0 %v264
  %v601 = vpop.f32.mrb[0].mxu0
  %v602 = vadd.f32 %v460, %v601
  %v603 = vpop.f32.mrb[0].mxu0
  %v604 = vadd.f32 %v462, %v603
  %605 = vdwg.mxu0
  %606 = vmatprep.subr.mxu0 %v268
  %607 = vmatpush1.msra.mxu0 %v267
  %608 = vmatprep.subr.mxu0 %v272
  %609 = vmatpush1.msra.mxu0 %v271
  %610 = vmatprep.subr.mxu0 %v276
  %611 = vmatpush1.msra.mxu0 %v275
  %612 = vmatprep.subr.mxu0 %v280
  %613 = vmatpush1.msra.mxu0 %v279
  %614 = vmatprep.subr.mxu0 %v284
  %615 = vmatpush1.msra.mxu0 %v283
  %616 = vmatprep.subr.mxu0 %v288
  %617 = vmatpush1.msra.mxu0 %v287
  %618 = vmatprep.subr.mxu0 %v292
  %619 = vmatpush1.msra.mxu0 %v291
  %620 = vmatprep.subr.mxu0 %v296
  %621 = vmatpush1.msra.mxu0 %v295
  %622 = vmatprep.subr.mxu0 %v300
  %623 = vmatpush1.msra.mxu0 %v299
  %624 = vmatprep.subr.mxu0 %v304
  %625 = vmatpush1.msra.mxu0 %v303
  %626 = vmatprep.subr.mxu0 %v308
  %627 = vmatpush1.msra.mxu0 %v307
  %628 = vmatprep.subr.mxu0 %v312
  %629 = vmatpush1.msra.mxu0 %v311
  %630 = vmatprep.subr.mxu0 %v316
  %631 = vmatpush1.msra.mxu0 %v315
  %632 = vmatprep.subr.mxu0 %v320
  %633 = vmatpush1.msra.mxu0 %v319
  %634 = vmatprep.subr.mxu0 %v324
  %635 = vmatpush1.msra.mxu0 %v323
  %636 = vmatprep.subr.mxu0 %v328
  %637 = vmatpush1.msra.mxu0 %v327
  %638 = vmatprep.subr.mxu0 0.0
  %639 = vmatpush1.msra.mxu0 0.0
  %640 = vmatprep.subr.mxu0 0.0
  %641 = vmatpush1.msra.mxu0 0.0
  %642 = vmatprep.subr.mxu0 0.0
  %643 = vmatpush1.msra.mxu0 0.0
  %644 = vmatprep.subr.mxu0 0.0
  %645 = vmatpush1.msra.mxu0 0.0
  %646 = vmatprep.subr.mxu0 0.0
  %647 = vmatpush1.msra.mxu0 0.0
  %648 = vmatprep.subr.mxu0 0.0
  %649 = vmatpush1.msra.mxu0 0.0
  %650 = vmatprep.subr.mxu0 0.0
  %651 = vmatpush1.msra.mxu0 0.0
  %652 = vmatprep.subr.mxu0 0.0
  %653 = vmatpush1.msra.mxu0 0.0
  %654 = vmatprep.subr.mxu0 0.0
  %655 = vmatpush1.msra.mxu0 0.0
  %656 = vmatprep.subr.mxu0 0.0
  %657 = vmatpush1.msra.mxu0 0.0
  %658 = vmatprep.subr.mxu0 0.0
  %659 = vmatpush1.msra.mxu0 0.0
  %660 = vmatprep.subr.mxu0 0.0
  %661 = vmatpush1.msra.mxu0 0.0
  %662 = vmatprep.subr.mxu0 0.0
  %663 = vmatpush1.msra.mxu0 0.0
  %664 = vmatprep.subr.mxu0 0.0
  %665 = vmatpush1.msra.mxu0 0.0
  %666 = vmatprep.subr.mxu0 0.0
  %667 = vmatpush1.msra.mxu0 0.0
  %668 = vmatprep.subr.mxu0 0.0
  %669 = vmatpush1.msra.mxu0 0.0
  %670 = vmatprep.mubr.f32.mxu0 0.0
  %671 = vmatmul.mubr.f32.gmra.mrb[0].mxu0 %v264
  %v672 = vpop.f32.mrb[0].mxu0
  %v673 = vadd.f32 %v531, %v672
  %v674 = vpop.f32.mrb[0].mxu0
  %v675 = vadd.f32 %v533, %v674
  %676 = vdwg.mxu0
  %v678 = vlaneseq
  %v679 = vshrl.u32 %v678, 7
  %v680 = vsub.s32 0, %v679
  %v681 = vrot.slane %v28, %v680
  %v682 = vlaneseq
  %v683 = vshrl.u32 %v682, 7
  %v684 = vsub.s32 1, %v683
  %v685 = vrot.slane %v28, %v684
  %v686 = vlaneseq
  %v687 = vshrl.u32 %v686, 7
  %v688 = vsub.s32 2, %v687
  %v689 = vrot.slane %v28, %v688
  %v690 = vlaneseq
  %v691 = vshrl.u32 %v690, 7
  %v692 = vsub.s32 3, %v691
  %v693 = vrot.slane %v28, %v692
  %v698 = vadd.f32 %v602, %v681
  %v699 = vadd.f32 %v604, %v685
  %v700 = vadd.f32 %v673, %v689
  %v701 = vadd.f32 %v675, %v693
  %v702 = vmul.f32 %v698, 0.5
  %v703 = vmul.f32 %v699, 0.5
  %v704 = vmul.f32 %v700, 0.5
  %v705 = vtanh.pop %v702
  %v706 = vtanh.pop %v703
  %v707 = vtanh.pop %v704
  %v708 = vmul.f32 %v705, 0.5
  %v709 = vmul.f32 %v706, 0.5
  %v710 = vmul.f32 %v707, 0.5
  %v711 = vadd.f32 %v708, 0.5
  %v712 = vadd.f32 %v709, 0.5
  %v713 = vadd.f32 %v710, 0.5
  %v714 = vtanh.pop %v701
  %v715 = vmul.f32 %v712, %v32
  %v716 = vmul.f32 %v711, %v714
  %v717 = vadd.f32 %v715, %v716
  %v718 = vtanh.pop %v717
  %v719 = vmul.f32 %v713, %v718
  %s720 = scalar_lea.vmem %s0, 32
  %v721 = vld [vmem:[%s720] sm:$0xff]
  %v722 = vld [vmem:[%s720 + $0x8] sm:$0xff]
  %v723 = vld [vmem:[%s720 + $0x10] sm:$0xff]
  %v724 = vld [vmem:[%s720 + $0x18] sm:$0xff]
  %725 = vmatprep.subr.mxu0 %v38
  %726 = vmatpush1.msra.mxu0 %v37
  %727 = vmatprep.subr.mxu0 %v42
  %728 = vmatpush1.msra.mxu0 %v41
  %729 = vmatprep.subr.mxu0 %v46
  %730 = vmatpush1.msra.mxu0 %v45
  %731 = vmatprep.subr.mxu0 %v50
  %732 = vmatpush1.msra.mxu0 %v49
  %733 = vmatprep.subr.mxu0 %v54
  %734 = vmatpush1.msra.mxu0 %v53
  %735 = vmatprep.subr.mxu0 %v58
  %736 = vmatpush1.msra.mxu0 %v57
  %737 = vmatprep.subr.mxu0 %v62
  %738 = vmatpush1.msra.mxu0 %v61
  %739 = vmatprep.subr.mxu0 %v66
  %740 = vmatpush1.msra.mxu0 %v65
  %741 = vmatprep.subr.mxu0 %v70
  %742 = vmatpush1.msra.mxu0 %v69
  %743 = vmatprep.subr.mxu0 %v74
  %744 = vmatpush1.msra.mxu0 %v73
  %745 = vmatprep.subr.mxu0 %v78
  %746 = vmatpush1.msra.mxu0 %v77
  %747 = vmatprep.subr.mxu0 %v82
  %748 = vmatpush1.msra.mxu0 %v81
  %749 = vmatprep.subr.mxu0 %v86
  %750 = vmatpush1.msra.mxu0 %v85
  %751 = vmatprep.subr.mxu0 %v90
  %752 = vmatpush1.msra.mxu0 %v89
  %753 = vmatprep.subr.mxu0 %v94
  %754 = vmatpush1.msra.mxu0 %v93
  %755 = vmatprep.subr.mxu0 %v98
  %756 = vmatpush1.msra.mxu0 %v97
  %757 = vmatprep.subr.mxu0 0.0
  %758 = vmatpush1.msra.mxu0 0.0
  %759 = vmatprep.subr.mxu0 0.0
  %760 = vmatpush1.msra.mxu0 0.0
  %761 = vmatprep.subr.mxu0 0.0
  %762 = vmatpush1.msra.mxu0 0.0
  %763 = vmatprep.subr.mxu0 0.0
  %764 = vmatpush1.msra.mxu0 0.0
  %765 = vmatprep.subr.mxu0 0.0
  %766 = vmatpush1.msra.mxu0 0.0
  %767 = vmatprep.subr.mxu0 0.0
  %768 = vmatpush1.msra.mxu0 0.0
  %769 = vmatprep.subr.mxu0 0.0
  %770 = vmatpush1.msra.mxu0 0.0
  %771 = vmatprep.subr.mxu0 0.0
  %772 = vmatpush1.msra.mxu0 0.0
  %773 = vmatprep.subr.mxu0 0.0
  %774 = vmatpush1.msra.mxu0 0.0
  %775 = vmatprep.subr.mxu0 0.0
  %776 = vmatpush1.msra.mxu0 0.0
  %777 = vmatprep.subr.mxu0 0.0
  %778 = vmatpush1.msra.mxu0 0.0
  %779 = vmatprep.subr.mxu0 0.0
  %780 = vmatpush1.msra.mxu0 0.0
  %781 = vmatprep.subr.mxu0 0.0
  %782 = vmatpush1.msra.mxu0 0.0
  %783 = vmatprep.subr.mxu0 0.0
  %784 = vmatpush1.msra.mxu0 0.0
  %785 = vmatprep.subr.mxu0 0.0
  %786 = vmatpush1.msra.mxu0 0.0
  %787 = vmatprep.subr.mxu0 0.0
  %788 = vmatpush1.msra.mxu0 0.0
  %789 = vmatprep.mubr.f32.mxu0 0.0
  %790 = vmatmul.mubr.f32.gmra.mrb[0].mxu0 %v264
  %v791 = vpop.f32.mrb[0].mxu0
  %v792 = vadd.f32 0.0, %v791
  %v793 = vpop.f32.mrb[0].mxu0
  %v794 = vadd.f32 0.0, %v793
  %795 = vdwg.mxu0
  %796 = vmatprep.subr.mxu0 %v40
  %797 = vmatpush1.msra.mxu0 %v39
  %798 = vmatprep.subr.mxu0 %v44
  %799 = vmatpush1.msra.mxu0 %v43
  %800 = vmatprep.subr.mxu0 %v48
  %801 = vmatpush1.msra.mxu0 %v47
  %802 = vmatprep.subr.mxu0 %v52
  %803 = vmatpush1.msra.mxu0 %v51
  %804 = vmatprep.subr.mxu0 %v56
  %805 = vmatpush1.msra.mxu0 %v55
  %806 = vmatprep.subr.mxu0 %v60
  %807 = vmatpush1.msra.mxu0 %v59
  %808 = vmatprep.subr.mxu0 %v64
  %809 = vmatpush1.msra.mxu0 %v63
  %810 = vmatprep.subr.mxu0 %v68
  %811 = vmatpush1.msra.mxu0 %v67
  %812 = vmatprep.subr.mxu0 %v72
  %813 = vmatpush1.msra.mxu0 %v71
  %814 = vmatprep.subr.mxu0 %v76
  %815 = vmatpush1.msra.mxu0 %v75
  %816 = vmatprep.subr.mxu0 %v80
  %817 = vmatpush1.msra.mxu0 %v79
  %818 = vmatprep.subr.mxu0 %v84
  %819 = vmatpush1.msra.mxu0 %v83
  %820 = vmatprep.subr.mxu0 %v88
  %821 = vmatpush1.msra.mxu0 %v87
  %822 = vmatprep.subr.mxu0 %v92
  %823 = vmatpush1.msra.mxu0 %v91
  %824 = vmatprep.subr.mxu0 %v96
  %825 = vmatpush1.msra.mxu0 %v95
  %826 = vmatprep.subr.mxu0 %v100
  %827 = vmatpush1.msra.mxu0 %v99
  %828 = vmatprep.subr.mxu0 0.0
  %829 = vmatpush1.msra.mxu0 0.0
  %830 = vmatprep.subr.mxu0 0.0
  %831 = vmatpush1.msra.mxu0 0.0
  %832 = vmatprep.subr.mxu0 0.0
  %833 = vmatpush1.msra.mxu0 0.0
  %834 = vmatprep.subr.mxu0 0.0
  %835 = vmatpush1.msra.mxu0 0.0
  %836 = vmatprep.subr.mxu0 0.0
  %837 = vmatpush1.msra.mxu0 0.0
  %838 = vmatprep.subr.mxu0 0.0
  %839 = vmatpush1.msra.mxu0 0.0
  %840 = vmatprep.subr.mxu0 0.0
  %841 = vmatpush1.msra.mxu0 0.0
  %842 = vmatprep.subr.mxu0 0.0
  %843 = vmatpush1.msra.mxu0 0.0
  %844 = vmatprep.subr.mxu0 0.0
  %845 = vmatpush1.msra.mxu0 0.0
  %846 = vmatprep.subr.mxu0 0.0
  %847 = vmatpush1.msra.mxu0 0.0
  %848 = vmatprep.subr.mxu0 0.0
  %849 = vmatpush1.msra.mxu0 0.0
  %850 = vmatprep.subr.mxu0 0.0
  %851 = vmatpush1.msra.mxu0 0.0
  %852 = vmatprep.subr.mxu0 0.0
  %853 = vmatpush1.msra.mxu0 0.0
  %854 = vmatprep.subr.mxu0 0.0
  %855 = vmatpush1.msra.mxu0 0.0
  %856 = vmatprep.subr.mxu0 0.0
  %857 = vmatpush1.msra.mxu0 0.0
  %858 = vmatprep.subr.mxu0 0.0
  %859 = vmatpush1.msra.mxu0 0.0
  %860 = vmatprep.mubr.f32.mxu0 0.0
  %861 = vmatmul.mubr.f32.gmra.mrb[0].mxu0 %v264
  %v862 = vpop.f32.mrb[0].mxu0
  %v863 = vadd.f32 0.0, %v862
  %v864 = vpop.f32.mrb[0].mxu0
  %v865 = vadd.f32 0.0, %v864
  %866 = vdwg.mxu0
  %v867 = vadd.f32 %v721, %v792
  %v868 = vadd.f32 %v722, %v794
  %v869 = vadd.f32 %v723, %v863
  %v870 = vadd.f32 %v724, %v865
  %v871 = vmul.f32 %v867, 0.5
  %v872 = vmul.f32 %v868, 0.5
  %v873 = vmul.f32 %v869, 0.5
  %v874 = vtanh.pop %v871
  %v875 = vtanh.pop %v872
  %v876 = vtanh.pop %v873
  %v877 = vmul.f32 %v874, 0.5
  %v878 = vmul.f32 %v875, 0.5
  %v879 = vmul.f32 %v876, 0.5
  %v880 = vadd.f32 %v877, 0.5
  %v881 = vadd.f32 %v878, 0.5
  %v882 = vadd.f32 %v879, 0.5
  %v883 = vtanh.pop %v870
  %v884 = vmul.f32 %v881, %v262
  %v885 = vmul.f32 %v880, %v883
  %v886 = vadd.f32 %v884, %v885
  %v887 = vtanh.pop %v886
  %v888 = vmul.f32 %v882, %v887
  %889 = vmatprep.subr.mxu0 %v330
  %890 = vmatpush1.msra.mxu0 %v329
  %891 = vmatprep.subr.mxu0 %v334
  %892 = vmatpush1.msra.mxu0 %v333
  %893 = vmatprep.subr.mxu0 %v338
  %894 = vmatpush1.msra.mxu0 %v337
  %895 = vmatprep.subr.mxu0 %v342
  %896 = vmatpush1.msra.mxu0 %v341
  %897 = vmatprep.subr.mxu0 %v346
  %898 = vmatpush1.msra.mxu0 %v345
  %899 = vmatprep.subr.mxu0 %v350
  %900 = vmatpush1.msra.mxu0 %v349
  %901 = vmatprep.subr.mxu0 %v354
  %902 = vmatpush1.msra.mxu0 %v353
  %903 = vmatprep.subr.mxu0 %v358
  %904 = vmatpush1.msra.mxu0 %v357
  %905 = vmatprep.subr.mxu0 %v362
  %906 = vmatpush1.msra.mxu0 %v361
  %907 = vmatprep.subr.mxu0 %v366
  %908 = vmatpush1.msra.mxu0 %v365
  %909 = vmatprep.subr.mxu0 %v370
  %910 = vmatpush1.msra.mxu0 %v369
  %911 = vmatprep.subr.mxu0 %v374
  %912 = vmatpush1.msra.mxu0 %v373
  %913 = vmatprep.subr.mxu0 %v378
  %914 = vmatpush1.msra.mxu0 %v377
  %915 = vmatprep.subr.mxu0 %v382
  %916 = vmatpush1.msra.mxu0 %v381
  %917 = vmatprep.subr.mxu0 %v386
  %918 = vmatpush1.msra.mxu0 %v385
  %919 = vmatprep.subr.mxu0 %v390
  %920 = vmatpush1.msra.mxu0 %v389
  %921 = vmatprep.subr.mxu0 0.0
  %922 = vmatpush1.msra.mxu0 0.0
  %923 = vmatprep.subr.mxu0 0.0
  %924 = vmatpush1.msra.mxu0 0.0
  %925 = vmatprep.subr.mxu0 0.0
  %926 = vmatpush1.msra.mxu0 0.0
  %927 = vmatprep.subr.mxu0 0.0
  %928 = vmatpush1.msra.mxu0 0.0
  %929 = vmatprep.subr.mxu0 0.0
  %930 = vmatpush1.msra.mxu0 0.0
  %931 = vmatprep.subr.mxu0 0.0
  %932 = vmatpush1.msra.mxu0 0.0
  %933 = vmatprep.subr.mxu0 0.0
  %934 = vmatpush1.msra.mxu0 0.0
  %935 = vmatprep.subr.mxu0 0.0
  %936 = vmatpush1.msra.mxu0 0.0
  %937 = vmatprep.subr.mxu0 0.0
  %938 = vmatpush1.msra.mxu0 0.0
  %939 = vmatprep.subr.mxu0 0.0
  %940 = vmatpush1.msra.mxu0 0.0
  %941 = vmatprep.subr.mxu0 0.0
  %942 = vmatpush1.msra.mxu0 0.0
  %943 = vmatprep.subr.mxu0 0.0
  %944 = vmatpush1.msra.mxu0 0.0
  %945 = vmatprep.subr.mxu0 0.0
  %946 = vmatpush1.msra.mxu0 0.0
  %947 = vmatprep.subr.mxu0 0.0
  %948 = vmatpush1.msra.mxu0 0.0
  %949 = vmatprep.subr.mxu0 0.0
  %950 = vmatpush1.msra.mxu0 0.0
  %951 = vmatprep.subr.mxu0 0.0
  %952 = vmatpush1.msra.mxu0 0.0
  %953 = vmatprep.mubr.f32.mxu0 0.0
  %954 = vmatmul.mubr.f32.gmra.mrb[0].mxu0 %v719
  %v955 = vpop.f32.mrb[0].mxu0
  %v956 = vadd.f32 0.0, %v955
  %v957 = vpop.f32.mrb[0].mxu0
  %v958 = vadd.f32 0.0, %v957
  %959 = vdwg.mxu0
  %960 = vmatprep.subr.mxu0 %v332
  %961 = vmatpush1.msra.mxu0 %v331
  %962 = vmatprep.subr.mxu0 %v336
  %963 = vmatpush1.msra.mxu0 %v335
  %964 = vmatprep.subr.mxu0 %v340
  %965 = vmatpush1.msra.mxu0 %v339
  %966 = vmatprep.subr.mxu0 %v344
  %967 = vmatpush1.msra.mxu0 %v343
  %968 = vmatprep.subr.mxu0 %v348
  %969 = vmatpush1.msra.mxu0 %v347
  %970 = vmatprep.subr.mxu0 %v352
  %971 = vmatpush1.msra.mxu0 %v351
  %972 = vmatprep.subr.mxu0 %v356
  %973 = vmatpush1.msra.mxu0 %v355
  %974 = vmatprep.subr.mxu0 %v360
  %975 = vmatpush1.msra.mxu0 %v359
  %976 = vmatprep.subr.mxu0 %v364
  %977 = vmatpush1.msra.mxu0 %v363
  %978 = vmatprep.subr.mxu0 %v368
  %979 = vmatpush1.msra.mxu0 %v367
  %980 = vmatprep.subr.mxu0 %v372
  %981 = vmatpush1.msra.mxu0 %v371
  %982 = vmatprep.subr.mxu0 %v376
  %983 = vmatpush1.msra.mxu0 %v375
  %984 = vmatprep.subr.mxu0 %v380
  %985 = vmatpush1.msra.mxu0 %v379
  %986 = vmatprep.subr.mxu0 %v384
  %987 = vmatpush1.msra.mxu0 %v383
  %988 = vmatprep.subr.mxu0 %v388
  %989 = vmatpush1.msra.mxu0 %v387
  %990 = vmatprep.subr.mxu0 %v392
  %991 = vmatpush1.msra.mxu0 %v391
  %992 = vmatprep.subr.mxu0 0.0
  %993 = vmatpush1.msra.mxu0 0.0
  %994 = vmatprep.subr.mxu0 0.0
  %995 = vmatpush1.msra.mxu0 0.0
  %996 = vmatprep.subr.mxu0 0.0
  %997 = vmatpush1.msra.mxu0 0.0
  %998 = vmatprep.subr.mxu0 0.0
  %999 = vmatpush1.msra.mxu0 0.0
  %1000 = vmatprep.subr.mxu0 0.0
  %1001 = vmatpush1.msra.mxu0 0.0
  %1002 = vmatprep.subr.mxu0 0.0
  %1003 = vmatpush1.msra.mxu0 0.0
  %1004 = vmatprep.subr.mxu0 0.0
  %1005 = vmatpush1.msra.mxu0 0.0
  %1006 = vmatprep.subr.mxu0 0.0
  %1007 = vmatpush1.msra.mxu0 0.0
  %1008 = vmatprep.subr.mxu0 0.0
  %1009 = vmatpush1.msra.mxu0 0.0
  %1010 = vmatprep.subr.mxu0 0.0
  %1011 = vmatpush1.msra.mxu0 0.0
  %1012 = vmatprep.subr.mxu0 0.0
  %1013 = vmatpush1.msra.mxu0 0.0
  %1014 = vmatprep.subr.mxu0 0.0
  %1015 = vmatpush1.msra.mxu0 0.0
  %1016 = vmatprep.subr.mxu0 0.0
  %1017 = vmatpush1.msra.mxu0 0.0
  %1018 = vmatprep.subr.mxu0 0.0
  %1019 = vmatpush1.msra.mxu0 0.0
  %1020 = vmatprep.subr.mxu0 0.0
  %1021 = vmatpush1.msra.mxu0 0.0
  %1022 = vmatprep.subr.mxu0 0.0
  %1023 = vmatpush1.msra.mxu0 0.0
  %1024 = vmatprep.mubr.f32.mxu0 0.0
  %1025 = vmatmul.mubr.f32.gmra.mrb[0].mxu0 %v719
  %v1026 = vpop.f32.mrb[0].mxu0
  %v1027 = vadd.f32 0.0, %v1026
  %v1028 = vpop.f32.mrb[0].mxu0
  %v1029 = vadd.f32 0.0, %v1028
  %1030 = vdwg.mxu0
  %1031 = vmatprep.subr.mxu0 %v266
  %1032 = vmatpush1.msra.mxu0 %v265
  %1033 = vmatprep.subr.mxu0 %v270
  %1034 = vmatpush1.msra.mxu0 %v269
  %1035 = vmatprep.subr.mxu0 %v274
  %1036 = vmatpush1.msra.mxu0 %v273
  %1037 = vmatprep.subr.mxu0 %v278
  %1038 = vmatpush1.msra.mxu0 %v277
  %1039 = vmatprep.subr.mxu0 %v282
  %1040 = vmatpush1.msra.mxu0 %v281
  %1041 = vmatprep.subr.mxu0 %v286
  %1042 = vmatpush1.msra.mxu0 %v285
  %1043 = vmatprep.subr.mxu0 %v290
  %1044 = vmatpush1.msra.mxu0 %v289
  %1045 = vmatprep.subr.mxu0 %v294
  %1046 = vmatpush1.msra.mxu0 %v293
  %1047 = vmatprep.subr.mxu0 %v298
  %1048 = vmatpush1.msra.mxu0 %v297
  %1049 = vmatprep.subr.mxu0 %v302
  %1050 = vmatpush1.msra.mxu0 %v301
  %1051 = vmatprep.subr.mxu0 %v306
  %1052 = vmatpush1.msra.mxu0 %v305
  %1053 = vmatprep.subr.mxu0 %v310
  %1054 = vmatpush1.msra.mxu0 %v309
  %1055 = vmatprep.subr.mxu0 %v314
  %1056 = vmatpush1.msra.mxu0 %v313
  %1057 = vmatprep.subr.mxu0 %v318
  %1058 = vmatpush1.msra.mxu0 %v317
  %1059 = vmatprep.subr.mxu0 %v322
  %1060 = vmatpush1.msra.mxu0 %v321
  %1061 = vmatprep.subr.mxu0 %v326
  %1062 = vmatpush1.msra.mxu0 %v325
  %1063 = vmatprep.subr.mxu0 0.0
  %1064 = vmatpush1.msra.mxu0 0.0
  %1065 = vmatprep.subr.mxu0 0.0
  %1066 = vmatpush1.msra.mxu0 0.0
  %1067 = vmatprep.subr.mxu0 0.0
  %1068 = vmatpush1.msra.mxu0 0.0
  %1069 = vmatprep.subr.mxu0 0.0
  %1070 = vmatpush1.msra.mxu0 0.0
  %1071 = vmatprep.subr.mxu0 0.0
  %1072 = vmatpush1.msra.mxu0 0.0
  %1073 = vmatprep.subr.mxu0 0.0
  %1074 = vmatpush1.msra.mxu0 0.0
  %1075 = vmatprep.subr.mxu0 0.0
  %1076 = vmatpush1.msra.mxu0 0.0
  %1077 = vmatprep.subr.mxu0 0.0
  %1078 = vmatpush1.msra.mxu0 0.0
  %1079 = vmatprep.subr.mxu0 0.0
  %1080 = vmatpush1.msra.mxu0 0.0
  %1081 = vmatprep.subr.mxu0 0.0
  %1082 = vmatpush1.msra.mxu0 0.0
  %1083 = vmatprep.subr.mxu0 0.0
  %1084 = vmatpush1.msra.mxu0 0.0
  %1085 = vmatprep.subr.mxu0 0.0
  %1086 = vmatpush1.msra.mxu0 0.0
  %1087 = vmatprep.subr.mxu0 0.0
  %1088 = vmatpush1.msra.mxu0 0.0
  %1089 = vmatprep.subr.mxu0 0.0
  %1090 = vmatpush1.msra.mxu0 0.0
  %1091 = vmatprep.subr.mxu0 0.0
  %1092 = vmatpush1.msra.mxu0 0.0
  %1093 = vmatprep.subr.mxu0 0.0
  %1094 = vmatpush1.msra.mxu0 0.0
  %1095 = vmatprep.mubr.f32.mxu0 0.0
  %1096 = vmatmul.mubr.f32.gmra.mrb[0].mxu0 %v888
  %v1097 = vpop.f32.mrb[0].mxu0
  %v1098 = vadd.f32 %v956, %v1097
  %v1099 = vpop.f32.mrb[0].mxu0
  %v1100 = vadd.f32 %v958, %v1099
  %1101 = vdwg.mxu0
  %1102 = vmatprep.subr.mxu0 %v268
  %1103 = vmatpush1.msra.mxu0 %v267
  %1104 = vmatprep.subr.mxu0 %v272
  %1105 = vmatpush1.msra.mxu0 %v271
  %1106 = vmatprep.subr.mxu0 %v276
  %1107 = vmatpush1.msra.mxu0 %v275
  %1108 = vmatprep.subr.mxu0 %v280
  %1109 = vmatpush1.msra.mxu0 %v279
  %1110 = vmatprep.subr.mxu0 %v284
  %1111 = vmatpush1.msra.mxu0 %v283
  %1112 = vmatprep.subr.mxu0 %v288
  %1113 = vmatpush1.msra.mxu0 %v287
  %1114 = vmatprep.subr.mxu0 %v292
  %1115 = vmatpush1.msra.mxu0 %v291
  %1116 = vmatprep.subr.mxu0 %v296
  %1117 = vmatpush1.msra.mxu0 %v295
  %1118 = vmatprep.subr.mxu0 %v300
  %1119 = vmatpush1.msra.mxu0 %v299
  %1120 = vmatprep.subr.mxu0 %v304
  %1121 = vmatpush1.msra.mxu0 %v303
  %1122 = vmatprep.subr.mxu0 %v308
  %1123 = vmatpush1.msra.mxu0 %v307
  %1124 = vmatprep.subr.mxu0 %v312
  %1125 = vmatpush1.msra.mxu0 %v311
  %1126 = vmatprep.subr.mxu0 %v316
  %1127 = vmatpush1.msra.mxu0 %v315
  %1128 = vmatprep.subr.mxu0 %v320
  %1129 = vmatpush1.msra.mxu0 %v319
  %1130 = vmatprep.subr.mxu0 %v324
  %1131 = vmatpush1.msra.mxu0 %v323
  %1132 = vmatprep.subr.mxu0 %v328
  %1133 = vmatpush1.msra.mxu0 %v327
  %1134 = vmatprep.subr.mxu0 0.0
  %1135 = vmatpush1.msra.mxu0 0.0
  %1136 = vmatprep.subr.mxu0 0.0
  %1137 = vmatpush1.msra.mxu0 0.0
  %1138 = vmatprep.subr.mxu0 0.0
  %1139 = vmatpush1.msra.mxu0 0.0
  %1140 = vmatprep.subr.mxu0 0.0
  %1141 = vmatpush1.msra.mxu0 0.0
  %1142 = vmatprep.subr.mxu0 0.0
  %1143 = vmatpush1.msra.mxu0 0.0
  %1144 = vmatprep.subr.mxu0 0.0
  %1145 = vmatpush1.msra.mxu0 0.0
  %1146 = vmatprep.subr.mxu0 0.0
  %1147 = vmatpush1.msra.mxu0 0.0
  %1148 = vmatprep.subr.mxu0 0.0
  %1149 = vmatpush1.msra.mxu0 0.0
  %1150 = vmatprep.subr.mxu0 0.0
  %1151 = vmatpush1.msra.mxu0 0.0
  %1152 = vmatprep.subr.mxu0 0.0
  %1153 = vmatpush1.msra.mxu0 0.0
  %1154 = vmatprep.subr.mxu0 0.0
  %1155 = vmatpush1.msra.mxu0 0.0
  %1156 = vmatprep.subr.mxu0 0.0
  %1157 = vmatpush1.msra.mxu0 0.0
  %1158 = vmatprep.subr.mxu0 0.0
  %1159 = vmatpush1.msra.mxu0 0.0
  %1160 = vmatprep.subr.mxu0 0.0
  %1161 = vmatpush1.msra.mxu0 0.0
  %1162 = vmatprep.subr.mxu0 0.0
  %1163 = vmatpush1.msra.mxu0 0.0
  %1164 = vmatprep.subr.mxu0 0.0
  %1165 = vmatpush1.msra.mxu0 0.0
  %1166 = vmatprep.mubr.f32.mxu0 0.0
  %1167 = vmatmul.mubr.f32.gmra.mrb[0].mxu0 %v888
  %v1168 = vpop.f32.mrb[0].mxu0
  %v1169 = vadd.f32 %v1027, %v1168
  %v1170 = vpop.f32.mrb[0].mxu0
  %v1171 = vadd.f32 %v1029, %v1170
  %1172 = vdwg.mxu0
  %v1173 = vadd.f32 %v1098, %v681
  %v1174 = vadd.f32 %v1100, %v685
  %v1175 = vadd.f32 %v1169, %v689
  %v1176 = vadd.f32 %v1171, %v693
  %v1177 = vmul.f32 %v1173, 0.5
  %v1178 = vmul.f32 %v1174, 0.5
  %v1179 = vmul.f32 %v1175, 0.5
  %v1180 = vtanh.pop %v1177
  %v1181 = vtanh.pop %v1178
  %v1182 = vtanh.pop %v1179
  %v1183 = vmul.f32 %v1180, 0.5
  %v1184 = vmul.f32 %v1181, 0.5
  %v1185 = vmul.f32 %v1182, 0.5
  %v1186 = vadd.f32 %v1183, 0.5
  %v1187 = vadd.f32 %v1184, 0.5
  %v1188 = vadd.f32 %v1185, 0.5
  %v1189 = vtanh.pop %v1176
  %v1190 = vmul.f32 %v1187, %v717
  %v1191 = vmul.f32 %v1186, %v1189
  %v1192 = vadd.f32 %v1190, %v1191
  %v1193 = vtanh.pop %v1192
  %v1194 = vmul.f32 %v1188, %v1193
  %s1195 = scalar_lea.vmem %s0, 64
  %v1196 = vld [vmem:[%s1195] sm:$0xff]
  %v1197 = vld [vmem:[%s1195 + $0x8] sm:$0xff]
  %v1198 = vld [vmem:[%s1195 + $0x10] sm:$0xff]
  %v1199 = vld [vmem:[%s1195 + $0x18] sm:$0xff]
  %1200 = vmatprep.subr.mxu0 %v38
  %1201 = vmatpush1.msra.mxu0 %v37
  %1202 = vmatprep.subr.mxu0 %v42
  %1203 = vmatpush1.msra.mxu0 %v41
  %1204 = vmatprep.subr.mxu0 %v46
  %1205 = vmatpush1.msra.mxu0 %v45
  %1206 = vmatprep.subr.mxu0 %v50
  %1207 = vmatpush1.msra.mxu0 %v49
  %1208 = vmatprep.subr.mxu0 %v54
  %1209 = vmatpush1.msra.mxu0 %v53
  %1210 = vmatprep.subr.mxu0 %v58
  %1211 = vmatpush1.msra.mxu0 %v57
  %1212 = vmatprep.subr.mxu0 %v62
  %1213 = vmatpush1.msra.mxu0 %v61
  %1214 = vmatprep.subr.mxu0 %v66
  %1215 = vmatpush1.msra.mxu0 %v65
  %1216 = vmatprep.subr.mxu0 %v70
  %1217 = vmatpush1.msra.mxu0 %v69
  %1218 = vmatprep.subr.mxu0 %v74
  %1219 = vmatpush1.msra.mxu0 %v73
  %1220 = vmatprep.subr.mxu0 %v78
  %1221 = vmatpush1.msra.mxu0 %v77
  %1222 = vmatprep.subr.mxu0 %v82
  %1223 = vmatpush1.msra.mxu0 %v81
  %1224 = vmatprep.subr.mxu0 %v86
  %1225 = vmatpush1.msra.mxu0 %v85
  %1226 = vmatprep.subr.mxu0 %v90
  %1227 = vmatpush1.msra.mxu0 %v89
  %1228 = vmatprep.subr.mxu0 %v94
  %1229 = vmatpush1.msra.mxu0 %v93
  %1230 = vmatprep.subr.mxu0 %v98
  %1231 = vmatpush1.msra.mxu0 %v97
  %1232 = vmatprep.subr.mxu0 0.0
  %1233 = vmatpush1.msra.mxu0 0.0
  %1234 = vmatprep.subr.mxu0 0.0
  %1235 = vmatpush1.msra.mxu0 0.0
  %1236 = vmatprep.subr.mxu0 0.0
  %1237 = vmatpush1.msra.mxu0 0.0
  %1238 = vmatprep.subr.mxu0 0.0
  %1239 = vmatpush1.msra.mxu0 0.0
  %1240 = vmatprep.subr.mxu0 0.0
  %1241 = vmatpush1.msra.mxu0 0.0
  %1242 = vmatprep.subr.mxu0 0.0
  %1243 = vmatpush1.msra.mxu0 0.0
  %1244 = vmatprep.subr.mxu0 0.0
  %1245 = vmatpush1.msra.mxu0 0.0
  %1246 = vmatprep.subr.mxu0 0.0
  %1247 = vmatpush1.msra.mxu0 0.0
  %1248 = vmatprep.subr.mxu0 0.0
  %1249 = vmatpush1.msra.mxu0 0.0
  %1250 = vmatprep.subr.mxu0 0.0
  %1251 = vmatpush1.msra.mxu0 0.0
  %1252 = vmatprep.subr.mxu0 0.0
  %1253 = vmatpush1.msra.mxu0 0.0
  %1254 = vmatprep.subr.mxu0 0.0
  %1255 = vmatpush1.msra.mxu0 0.0
  %1256 = vmatprep.subr.mxu0 0.0
  %1257 = vmatpush1.msra.mxu0 0.0
  %1258 = vmatprep.subr.mxu0 0.0
  %1259 = vmatpush1.msra.mxu0 0.0
  %1260 = vmatprep.subr.mxu0 0.0
  %1261 = vmatpush1.msra.mxu0 0.0
  %1262 = vmatprep.subr.mxu0 0.0
  %1263 = vmatpush1.msra.mxu0 0.0
  %1264 = vmatprep.mubr.f32.mxu0 0.0
  %1265 = vmatmul.mubr.f32.gmra.mrb[0].mxu0 %v888
  %v1266 = vpop.f32.mrb[0].mxu0
  %v1267 = vadd.f32 0.0, %v1266
  %v1268 = vpop.f32.mrb[0].mxu0
  %v1269 = vadd.f32 0.0, %v1268
  %1270 = vdwg.mxu0
  %1271 = vmatprep.subr.mxu0 %v40
  %1272 = vmatpush1.msra.mxu0 %v39
  %1273 = vmatprep.subr.mxu0 %v44
  %1274 = vmatpush1.msra.mxu0 %v43
  %1275 = vmatprep.subr.mxu0 %v48
  %1276 = vmatpush1.msra.mxu0 %v47
  %1277 = vmatprep.subr.mxu0 %v52
  %1278 = vmatpush1.msra.mxu0 %v51
  %1279 = vmatprep.subr.mxu0 %v56
  %1280 = vmatpush1.msra.mxu0 %v55
  %1281 = vmatprep.subr.mxu0 %v60
  %1282 = vmatpush1.msra.mxu0 %v59
  %1283 = vmatprep.subr.mxu0 %v64
  %1284 = vmatpush1.msra.mxu0 %v63
  %1285 = vmatprep.subr.mxu0 %v68
  %1286 = vmatpush1.msra.mxu0 %v67
  %1287 = vmatprep.subr.mxu0 %v72
  %1288 = vmatpush1.msra.mxu0 %v71
  %1289 = vmatprep.subr.mxu0 %v76
  %1290 = vmatpush1.msra.mxu0 %v75
  %1291 = vmatprep.subr.mxu0 %v80
  %1292 = vmatpush1.msra.mxu0 %v79
  %1293 = vmatprep.subr.mxu0 %v84
  %1294 = vmatpush1.msra.mxu0 %v83
  %1295 = vmatprep.subr.mxu0 %v88
  %1296 = vmatpush1.msra.mxu0 %v87
  %1297 = vmatprep.subr.mxu0 %v92
  %1298 = vmatpush1.msra.mxu0 %v91
  %1299 = vmatprep.subr.mxu0 %v96
  %1300 = vmatpush1.msra.mxu0 %v95
  %1301 = vmatprep.subr.mxu0 %v100
  %1302 = vmatpush1.msra.mxu0 %v99
  %1303 = vmatprep.subr.mxu0 0.0
  %1304 = vmatpush1.msra.mxu0 0.0
  %1305 = vmatprep.subr.mxu0 0.0
  %1306 = vmatpush1.msra.mxu0 0.0
  %1307 = vmatprep.subr.mxu0 0.0
  %1308 = vmatpush1.msra.mxu0 0.0
  %1309 = vmatprep.subr.mxu0 0.0
  %1310 = vmatpush1.msra.mxu0 0.0
  %1311 = vmatprep.subr.mxu0 0.0
  %1312 = vmatpush1.msra.mxu0 0.0
  %1313 = vmatprep.subr.mxu0 0.0
  %1314 = vmatpush1.msra.mxu0 0.0
  %1315 = vmatprep.subr.mxu0 0.0
  %1316 = vmatpush1.msra.mxu0 0.0
  %1317 = vmatprep.subr.mxu0 0.0
  %1318 = vmatpush1.msra.mxu0 0.0
  %1319 = vmatprep.subr.mxu0 0.0
  %1320 = vmatpush1.msra.mxu0 0.0
  %1321 = vmatprep.subr.mxu0 0.0
  %1322 = vmatpush1.msra.mxu0 0.0
  %1323 = vmatprep.subr.mxu0 0.0
  %1324 = vmatpush1.msra.mxu0 0.0
  %1325 = vmatprep.subr.mxu0 0.0
  %1326 = vmatpush1.msra.mxu0 0.0
  %1327 = vmatprep.subr.mxu0 0.0
  %1328 = vmatpush1.msra.mxu0 0.0
  %1329 = vmatprep.subr.mxu0 0.0
  %1330 = vmatpush1.msra.mxu0 0.0
  %1331 = vmatprep.subr.mxu0 0.0
  %1332 = vmatpush1.msra.mxu0 0.0
  %1333 = vmatprep.subr.mxu0 0.0
  %1334 = vmatpush1.msra.mxu0 0.0
  %1335 = vmatprep.mubr.f32.mxu0 0.0
  %1336 = vmatmul.mubr.f32.gmra.mrb[0].mxu0 %v888
  %v1337 = vpop.f32.mrb[0].mxu0
  %v1338 = vadd.f32 0.0, %v1337
  %v1339 = vpop.f32.mrb[0].mxu0
  %v1340 = vadd.f32 0.0, %v1339
  %1341 = vdwg.mxu0
  %v1342 = vadd.f32 %v1196, %v1267
  %v1343 = vadd.f32 %v1197, %v1269
  %v1344 = vadd.f32 %v1198, %v1338
  %v1345 = vadd.f32 %v1199, %v1340
  %v1346 = vmul.f32 %v1342, 0.5
  %v1347 = vmul.f32 %v1343, 0.5
  %v1348 = vmul.f32 %v1344, 0.5
  %v1349 = vtanh.pop %v1346
  %v1350 = vtanh.pop %v1347
  %v1351 = vtanh.pop %v1348
  %v1352 = vmul.f32 %v1349, 0.5
  %v1353 = vmul.f32 %v1350, 0.5
  %v1354 = vmul.f32 %v1351, 0.5
  %v1355 = vadd.f32 %v1352, 0.5
  %v1356 = vadd.f32 %v1353, 0.5
  %v1357 = vadd.f32 %v1354, 0.5
  %v1358 = vtanh.pop %v1345
  %v1359 = vmul.f32 %v1356, %v886
  %v1360 = vmul.f32 %v1355, %v1358
  %v1361 = vadd.f32 %v1359, %v1360
  %v1362 = vtanh.pop %v1361
  %v1363 = vmul.f32 %v1357, %v1362
  %1364 = vmatprep.subr.mxu0 %v330
  %1365 = vmatpush1.msra.mxu0 %v329
  %1366 = vmatprep.subr.mxu0 %v334
  %1367 = vmatpush1.msra.mxu0 %v333
  %1368 = vmatprep.subr.mxu0 %v338
  %1369 = vmatpush1.msra.mxu0 %v337
  %1370 = vmatprep.subr.mxu0 %v342
  %1371 = vmatpush1.msra.mxu0 %v341
  %1372 = vmatprep.subr.mxu0 %v346
  %1373 = vmatpush1.msra.mxu0 %v345
  %1374 = vmatprep.subr.mxu0 %v350
  %1375 = vmatpush1.msra.mxu0 %v349
  %1376 = vmatprep.subr.mxu0 %v354
  %1377 = vmatpush1.msra.mxu0 %v353
  %1378 = vmatprep.subr.mxu0 %v358
  %1379 = vmatpush1.msra.mxu0 %v357
  %1380 = vmatprep.subr.mxu0 %v362
  %1381 = vmatpush1.msra.mxu0 %v361
  %1382 = vmatprep.subr.mxu0 %v366
  %1383 = vmatpush1.msra.mxu0 %v365
  %1384 = vmatprep.subr.mxu0 %v370
  %1385 = vmatpush1.msra.mxu0 %v369
  %1386 = vmatprep.subr.mxu0 %v374
  %1387 = vmatpush1.msra.mxu0 %v373
  %1388 = vmatprep.subr.mxu0 %v378
  %1389 = vmatpush1.msra.mxu0 %v377
  %1390 = vmatprep.subr.mxu0 %v382
  %1391 = vmatpush1.msra.mxu0 %v381
  %1392 = vmatprep.subr.mxu0 %v386
  %1393 = vmatpush1.msra.mxu0 %v385
  %1394 = vmatprep.subr.mxu0 %v390
  %1395 = vmatpush1.msra.mxu0 %v389
  %1396 = vmatprep.subr.mxu0 0.0
  %1397 = vmatpush1.msra.mxu0 0.0
  %1398 = vmatprep.subr.mxu0 0.0
  %1399 = vmatpush1.msra.mxu0 0.0
  %1400 = vmatprep.subr.mxu0 0.0
  %1401 = vmatpush1.msra.mxu0 0.0
  %1402 = vmatprep.subr.mxu0 0.0
  %1403 = vmatpush1.msra.mxu0 0.0
  %1404 = vmatprep.subr.mxu0 0.0
  %1405 = vmatpush1.msra.mxu0 0.0
  %1406 = vmatprep.subr.mxu0 0.0
  %1407 = vmatpush1.msra.mxu0 0.0
  %1408 = vmatprep.subr.mxu0 0.0
  %1409 = vmatpush1.msra.mxu0 0.0
  %1410 = vmatprep.subr.mxu0 0.0
  %1411 = vmatpush1.msra.mxu0 0.0
  %1412 = vmatprep.subr.mxu0 0.0
  %1413 = vmatpush1.msra.mxu0 0.0
  %1414 = vmatprep.subr.mxu0 0.0
  %1415 = vmatpush1.msra.mxu0 0.0
  %1416 = vmatprep.subr.mxu0 0.0
  %1417 = vmatpush1.msra.mxu0 0.0
  %1418 = vmatprep.subr.mxu0 0.0
  %1419 = vmatpush1.msra.mxu0 0.0
  %1420 = vmatprep.subr.mxu0 0.0
  %1421 = vmatpush1.msra.mxu0 0.0
  %1422 = vmatprep.subr.mxu0 0.0
  %1423 = vmatpush1.msra.mxu0 0.0
  %1424 = vmatprep.subr.mxu0 0.0
  %1425 = vmatpush1.msra.mxu0 0.0
  %1426 = vmatprep.subr.mxu0 0.0
  %1427 = vmatpush1.msra.mxu0 0.0
  %1428 = vmatprep.mubr.f32.mxu0 0.0
  %1429 = vmatmul.mubr.f32.gmra.mrb[0].mxu0 %v1194
  %v1430 = vpop.f32.mrb[0].mxu0
  %v1431 = vadd.f32 0.0, %v1430
  %v1432 = vpop.f32.mrb[0].mxu0
  %v1433 = vadd.f32 0.0, %v1432
  %1434 = vdwg.mxu0
  %1435 = vmatprep.subr.mxu0 %v332
  %1436 = vmatpush1.msra.mxu0 %v331
  %1437 = vmatprep.subr.mxu0 %v336
  %1438 = vmatpush1.msra.mxu0 %v335
  %1439 = vmatprep.subr.mxu0 %v340
  %1440 = vmatpush1.msra.mxu0 %v339
  %1441 = vmatprep.subr.mxu0 %v344
  %1442 = vmatpush1.msra.mxu0 %v343
  %1443 = vmatprep.subr.mxu0 %v348
  %1444 = vmatpush1.msra.mxu0 %v347
  %1445 = vmatprep.subr.mxu0 %v352
  %1446 = vmatpush1.msra.mxu0 %v351
  %1447 = vmatprep.subr.mxu0 %v356
  %1448 = vmatpush1.msra.mxu0 %v355
  %1449 = vmatprep.subr.mxu0 %v360
  %1450 = vmatpush1.msra.mxu0 %v359
  %1451 = vmatprep.subr.mxu0 %v364
  %1452 = vmatpush1.msra.mxu0 %v363
  %1453 = vmatprep.subr.mxu0 %v368
  %1454 = vmatpush1.msra.mxu0 %v367
  %1455 = vmatprep.subr.mxu0 %v372
  %1456 = vmatpush1.msra.mxu0 %v371
  %1457 = vmatprep.subr.mxu0 %v376
  %1458 = vmatpush1.msra.mxu0 %v375
  %1459 = vmatprep.subr.mxu0 %v380
  %1460 = vmatpush1.msra.mxu0 %v379
  %1461 = vmatprep.subr.mxu0 %v384
  %1462 = vmatpush1.msra.mxu0 %v383
  %1463 = vmatprep.subr.mxu0 %v388
  %1464 = vmatpush1.msra.mxu0 %v387
  %1465 = vmatprep.subr.mxu0 %v392
  %1466 = vmatpush1.msra.mxu0 %v391
  %1467 = vmatprep.subr.mxu0 0.0
  %1468 = vmatpush1.msra.mxu0 0.0
  %1469 = vmatprep.subr.mxu0 0.0
  %1470 = vmatpush1.msra.mxu0 0.0
  %1471 = vmatprep.subr.mxu0 0.0
  %1472 = vmatpush1.msra.mxu0 0.0
  %1473 = vmatprep.subr.mxu0 0.0
  %1474 = vmatpush1.msra.mxu0 0.0
  %1475 = vmatprep.subr.mxu0 0.0
  %1476 = vmatpush1.msra.mxu0 0.0
  %1477 = vmatprep.subr.mxu0 0.0
  %1478 = vmatpush1.msra.mxu0 0.0
  %1479 = vmatprep.subr.mxu0 0.0
  %1480 = vmatpush1.msra.mxu0 0.0
  %1481 = vmatprep.subr.mxu0 0.0
  %1482 = vmatpush1.msra.mxu0 0.0
  %1483 = vmatprep.subr.mxu0 0.0
  %1484 = vmatpush1.msra.mxu0 0.0
  %1485 = vmatprep.subr.mxu0 0.0
  %1486 = vmatpush1.msra.mxu0 0.0
  %1487 = vmatprep.subr.mxu0 0.0
  %1488 = vmatpush1.msra.mxu0 0.0
  %1489 = vmatprep.subr.mxu0 0.0
  %1490 = vmatpush1.msra.mxu0 0.0
  %1491 = vmatprep.subr.mxu0 0.0
  %1492 = vmatpush1.msra.mxu0 0.0
  %1493 = vmatprep.subr.mxu0 0.0
  %1494 = vmatpush1.msra.mxu0 0.0
  %1495 = vmatprep.subr.mxu0 0.0
  %1496 = vmatpush1.msra.mxu0 0.0
  %1497 = vmatprep.subr.mxu0 0.0
  %1498 = vmatpush1.msra.mxu0 0.0
  %1499 = vmatprep.mubr.f32.mxu0 0.0
  %1500 = vmatmul.mubr.f32.gmra.mrb[0].mxu0 %v1194
  %v1501 = vpop.f32.mrb[0].mxu0
  %v1502 = vadd.f32 0.0, %v1501
  %v1503 = vpop.f32.mrb[0].mxu0
  %v1504 = vadd.f32 0.0, %v1503
  %1505 = vdwg.mxu0
  %1506 = vmatprep.subr.mxu0 %v266
  %1507 = vmatpush1.msra.mxu0 %v265
  %1508 = vmatprep.subr.mxu0 %v270
  %1509 = vmatpush1.msra.mxu0 %v269
  %1510 = vmatprep.subr.mxu0 %v274
  %1511 = vmatpush1.msra.mxu0 %v273
  %1512 = vmatprep.subr.mxu0 %v278
  %1513 = vmatpush1.msra.mxu0 %v277
  %1514 = vmatprep.subr.mxu0 %v282
  %1515 = vmatpush1.msra.mxu0 %v281
  %1516 = vmatprep.subr.mxu0 %v286
  %1517 = vmatpush1.msra.mxu0 %v285
  %1518 = vmatprep.subr.mxu0 %v290
  %1519 = vmatpush1.msra.mxu0 %v289
  %1520 = vmatprep.subr.mxu0 %v294
  %1521 = vmatpush1.msra.mxu0 %v293
  %1522 = vmatprep.subr.mxu0 %v298
  %1523 = vmatpush1.msra.mxu0 %v297
  %1524 = vmatprep.subr.mxu0 %v302
  %1525 = vmatpush1.msra.mxu0 %v301
  %1526 = vmatprep.subr.mxu0 %v306
  %1527 = vmatpush1.msra.mxu0 %v305
  %1528 = vmatprep.subr.mxu0 %v310
  %1529 = vmatpush1.msra.mxu0 %v309
  %1530 = vmatprep.subr.mxu0 %v314
  %1531 = vmatpush1.msra.mxu0 %v313
  %1532 = vmatprep.subr.mxu0 %v318
  %1533 = vmatpush1.msra.mxu0 %v317
  %1534 = vmatprep.subr.mxu0 %v322
  %1535 = vmatpush1.msra.mxu0 %v321
  %1536 = vmatprep.subr.mxu0 %v326
  %1537 = vmatpush1.msra.mxu0 %v325
  %1538 = vmatprep.subr.mxu0 0.0
  %1539 = vmatpush1.msra.mxu0 0.0
  %1540 = vmatprep.subr.mxu0 0.0
  %1541 = vmatpush1.msra.mxu0 0.0
  %1542 = vmatprep.subr.mxu0 0.0
  %1543 = vmatpush1.msra.mxu0 0.0
  %1544 = vmatprep.subr.mxu0 0.0
  %1545 = vmatpush1.msra.mxu0 0.0
  %1546 = vmatprep.subr.mxu0 0.0
  %1547 = vmatpush1.msra.mxu0 0.0
  %1548 = vmatprep.subr.mxu0 0.0
  %1549 = vmatpush1.msra.mxu0 0.0
  %1550 = vmatprep.subr.mxu0 0.0
  %1551 = vmatpush1.msra.mxu0 0.0
  %1552 = vmatprep.subr.mxu0 0.0
  %1553 = vmatpush1.msra.mxu0 0.0
  %1554 = vmatprep.subr.mxu0 0.0
  %1555 = vmatpush1.msra.mxu0 0.0
  %1556 = vmatprep.subr.mxu0 0.0
  %1557 = vmatpush1.msra.mxu0 0.0
  %1558 = vmatprep.subr.mxu0 0.0
  %1559 = vmatpush1.msra.mxu0 0.0
  %1560 = vmatprep.subr.mxu0 0.0
  %1561 = vmatpush1.msra.mxu0 0.0
  %1562 = vmatprep.subr.mxu0 0.0
  %1563 = vmatpush1.msra.mxu0 0.0
  %1564 = vmatprep.subr.mxu0 0.0
  %1565 = vmatpush1.msra.mxu0 0.0
  %1566 = vmatprep.subr.mxu0 0.0
  %1567 = vmatpush1.msra.mxu0 0.0
  %1568 = vmatprep.subr.mxu0 0.0
  %1569 = vmatpush1.msra.mxu0 0.0
  %1570 = vmatprep.mubr.f32.mxu0 0.0
  %1571 = vmatmul.mubr.f32.gmra.mrb[0].mxu0 %v1363
  %v1572 = vpop.f32.mrb[0].mxu0
  %v1573 = vadd.f32 %v1431, %v1572
  %v1574 = vpop.f32.mrb[0].mxu0
  %v1575 = vadd.f32 %v1433, %v1574
  %1576 = vdwg.mxu0
  %1577 = vmatprep.subr.mxu0 %v268
  %1578 = vmatpush1.msra.mxu0 %v267
  %1579 = vmatprep.subr.mxu0 %v272
  %1580 = vmatpush1.msra.mxu0 %v271
  %1581 = vmatprep.subr.mxu0 %v276
  %1582 = vmatpush1.msra.mxu0 %v275
  %1583 = vmatprep.subr.mxu0 %v280
  %1584 = vmatpush1.msra.mxu0 %v279
  %1585 = vmatprep.subr.mxu0 %v284
  %1586 = vmatpush1.msra.mxu0 %v283
  %1587 = vmatprep.subr.mxu0 %v288
  %1588 = vmatpush1.msra.mxu0 %v287
  %1589 = vmatprep.subr.mxu0 %v292
  %1590 = vmatpush1.msra.mxu0 %v291
  %1591 = vmatprep.subr.mxu0 %v296
  %1592 = vmatpush1.msra.mxu0 %v295
  %1593 = vmatprep.subr.mxu0 %v300
  %1594 = vmatpush1.msra.mxu0 %v299
  %1595 = vmatprep.subr.mxu0 %v304
  %1596 = vmatpush1.msra.mxu0 %v303
  %1597 = vmatprep.subr.mxu0 %v308
  %1598 = vmatpush1.msra.mxu0 %v307
  %1599 = vmatprep.subr.mxu0 %v312
  %1600 = vmatpush1.msra.mxu0 %v311
  %1601 = vmatprep.subr.mxu0 %v316
  %1602 = vmatpush1.msra.mxu0 %v315
  %1603 = vmatprep.subr.mxu0 %v320
  %1604 = vmatpush1.msra.mxu0 %v319
  %1605 = vmatprep.subr.mxu0 %v324
  %1606 = vmatpush1.msra.mxu0 %v323
  %1607 = vmatprep.subr.mxu0 %v328
  %1608 = vmatpush1.msra.mxu0 %v327
  %1609 = vmatprep.subr.mxu0 0.0
  %1610 = vmatpush1.msra.mxu0 0.0
  %1611 = vmatprep.subr.mxu0 0.0
  %1612 = vmatpush1.msra.mxu0 0.0
  %1613 = vmatprep.subr.mxu0 0.0
  %1614 = vmatpush1.msra.mxu0 0.0
  %1615 = vmatprep.subr.mxu0 0.0
  %1616 = vmatpush1.msra.mxu0 0.0
  %1617 = vmatprep.subr.mxu0 0.0
  %1618 = vmatpush1.msra.mxu0 0.0
  %1619 = vmatprep.subr.mxu0 0.0
  %1620 = vmatpush1.msra.mxu0 0.0
  %1621 = vmatprep.subr.mxu0 0.0
  %1622 = vmatpush1.msra.mxu0 0.0
  %1623 = vmatprep.subr.mxu0 0.0
  %1624 = vmatpush1.msra.mxu0 0.0
  %1625 = vmatprep.subr.mxu0 0.0
  %1626 = vmatpush1.msra.mxu0 0.0
  %1627 = vmatprep.subr.mxu0 0.0
  %1628 = vmatpush1.msra.mxu0 0.0
  %1629 = vmatprep.subr.mxu0 0.0
  %1630 = vmatpush1.msra.mxu0 0.0
  %1631 = vmatprep.subr.mxu0 0.0
  %1632 = vmatpush1.msra.mxu0 0.0
  %1633 = vmatprep.subr.mxu0 0.0
  %1634 = vmatpush1.msra.mxu0 0.0
  %1635 = vmatprep.subr.mxu0 0.0
  %1636 = vmatpush1.msra.mxu0 0.0
  %1637 = vmatprep.subr.mxu0 0.0
  %1638 = vmatpush1.msra.mxu0 0.0
  %1639 = vmatprep.subr.mxu0 0.0
  %1640 = vmatpush1.msra.mxu0 0.0
  %1641 = vmatprep.mubr.f32.mxu0 0.0
  %1642 = vmatmul.mubr.f32.gmra.mrb[0].mxu0 %v1363
  %v1643 = vpop.f32.mrb[0].mxu0
  %v1644 = vadd.f32 %v1502, %v1643
  %v1645 = vpop.f32.mrb[0].mxu0
  %v1646 = vadd.f32 %v1504, %v1645
  %1647 = vdwg.mxu0
  %v1648 = vadd.f32 %v1573, %v681
  %v1649 = vadd.f32 %v1575, %v685
  %v1650 = vadd.f32 %v1644, %v689
  %v1651 = vadd.f32 %v1646, %v693
  %v1652 = vmul.f32 %v1648, 0.5
  %v1653 = vmul.f32 %v1649, 0.5
  %v1654 = vmul.f32 %v1650, 0.5
  %v1655 = vtanh.pop %v1652
  %v1656 = vtanh.pop %v1653
  %v1657 = vtanh.pop %v1654
  %v1658 = vmul.f32 %v1655, 0.5
  %v1659 = vmul.f32 %v1656, 0.5
  %v1660 = vmul.f32 %v1657, 0.5
  %v1661 = vadd.f32 %v1658, 0.5
  %v1662 = vadd.f32 %v1659, 0.5
  %v1663 = vadd.f32 %v1660, 0.5
  %v1664 = vtanh.pop %v1651
  %v1665 = vmul.f32 %v1662, %v1192
  %v1666 = vmul.f32 %v1661, %v1664
  %v1667 = vadd.f32 %v1665, %v1666
  %v1668 = vtanh.pop %v1667
  %v1669 = vmul.f32 %v1663, %v1668
  %s1670 = scalar_lea.vmem %s0, 96
  %v1671 = vld [vmem:[%s1670] sm:$0xff]
  %v1672 = vld [vmem:[%s1670 + $0x8] sm:$0xff]
  %v1673 = vld [vmem:[%s1670 + $0x10] sm:$0xff]
  %v1674 = vld [vmem:[%s1670 + $0x18] sm:$0xff]
  %1675 = vmatprep.subr.mxu0 %v38
  %1676 = vmatpush1.msra.mxu0 %v37
  %1677 = vmatprep.subr.mxu0 %v42
  %1678 = vmatpush1.msra.mxu0 %v41
  %1679 = vmatprep.subr.mxu0 %v46
  %1680 = vmatpush1.msra.mxu0 %v45
  %1681 = vmatprep.subr.mxu0 %v50
  %1682 = vmatpush1.msra.mxu0 %v49
  %1683 = vmatprep.subr.mxu0 %v54
  %1684 = vmatpush1.msra.mxu0 %v53
  %1685 = vmatprep.subr.mxu0 %v58
  %1686 = vmatpush1.msra.mxu0 %v57
  %1687 = vmatprep.subr.mxu0 %v62
  %1688 = vmatpush1.msra.mxu0 %v61
  %1689 = vmatprep.subr.mxu0 %v66
  %1690 = vmatpush1.msra.mxu0 %v65
  %1691 = vmatprep.subr.mxu0 %v70
  %1692 = vmatpush1.msra.mxu0 %v69
  %1693 = vmatprep.subr.mxu0 %v74
  %1694 = vmatpush1.msra.mxu0 %v73
  %1695 = vmatprep.subr.mxu0 %v78
  %1696 = vmatpush1.msra.mxu0 %v77
  %1697 = vmatprep.subr.mxu0 %v82
  %1698 = vmatpush1.msra.mxu0 %v81
  %1699 = vmatprep.subr.mxu0 %v86
  %1700 = vmatpush1.msra.mxu0 %v85
  %1701 = vmatprep.subr.mxu0 %v90
  %1702 = vmatpush1.msra.mxu0 %v89
  %1703 = vmatprep.subr.mxu0 %v94
  %1704 = vmatpush1.msra.mxu0 %v93
  %1705 = vmatprep.subr.mxu0 %v98
  %1706 = vmatpush1.msra.mxu0 %v97
  %1707 = vmatprep.subr.mxu0 0.0
  %1708 = vmatpush1.msra.mxu0 0.0
  %1709 = vmatprep.subr.mxu0 0.0
  %1710 = vmatpush1.msra.mxu0 0.0
  %1711 = vmatprep.subr.mxu0 0.0
  %1712 = vmatpush1.msra.mxu0 0.0
  %1713 = vmatprep.subr.mxu0 0.0
  %1714 = vmatpush1.msra.mxu0 0.0
  %1715 = vmatprep.subr.mxu0 0.0
  %1716 = vmatpush1.msra.mxu0 0.0
  %1717 = vmatprep.subr.mxu0 0.0
  %1718 = vmatpush1.msra.mxu0 0.0
  %1719 = vmatprep.subr.mxu0 0.0
  %1720 = vmatpush1.msra.mxu0 0.0
  %1721 = vmatprep.subr.mxu0 0.0
  %1722 = vmatpush1.msra.mxu0 0.0
  %1723 = vmatprep.subr.mxu0 0.0
  %1724 = vmatpush1.msra.mxu0 0.0
  %1725 = vmatprep.subr.mxu0 0.0
  %1726 = vmatpush1.msra.mxu0 0.0
  %1727 = vmatprep.subr.mxu0 0.0
  %1728 = vmatpush1.msra.mxu0 0.0
  %1729 = vmatprep.subr.mxu0 0.0
  %1730 = vmatpush1.msra.mxu0 0.0
  %1731 = vmatprep.subr.mxu0 0.0
  %1732 = vmatpush1.msra.mxu0 0.0
  %1733 = vmatprep.subr.mxu0 0.0
  %1734 = vmatpush1.msra.mxu0 0.0
  %1735 = vmatprep.subr.mxu0 0.0
  %1736 = vmatpush1.msra.mxu0 0.0
  %1737 = vmatprep.subr.mxu0 0.0
  %1738 = vmatpush1.msra.mxu0 0.0
  %1739 = vmatprep.mubr.f32.mxu0 0.0
  %1740 = vmatmul.mubr.f32.gmra.mrb[0].mxu0 %v1363
  %v1741 = vpop.f32.mrb[0].mxu0
  %v1742 = vadd.f32 0.0, %v1741
  %v1743 = vpop.f32.mrb[0].mxu0
  %v1744 = vadd.f32 0.0, %v1743
  %1745 = vdwg.mxu0
  %1746 = vmatprep.subr.mxu0 %v40
  %1747 = vmatpush1.msra.mxu0 %v39
  %1748 = vmatprep.subr.mxu0 %v44
  %1749 = vmatpush1.msra.mxu0 %v43
  %1750 = vmatprep.subr.mxu0 %v48
  %1751 = vmatpush1.msra.mxu0 %v47
  %1752 = vmatprep.subr.mxu0 %v52
  %1753 = vmatpush1.msra.mxu0 %v51
  %1754 = vmatprep.subr.mxu0 %v56
  %1755 = vmatpush1.msra.mxu0 %v55
  %1756 = vmatprep.subr.mxu0 %v60
  %1757 = vmatpush1.msra.mxu0 %v59
  %1758 = vmatprep.subr.mxu0 %v64
  %1759 = vmatpush1.msra.mxu0 %v63
  %1760 = vmatprep.subr.mxu0 %v68
  %1761 = vmatpush1.msra.mxu0 %v67
  %1762 = vmatprep.subr.mxu0 %v72
  %1763 = vmatpush1.msra.mxu0 %v71
  %1764 = vmatprep.subr.mxu0 %v76
  %1765 = vmatpush1.msra.mxu0 %v75
  %1766 = vmatprep.subr.mxu0 %v80
  %1767 = vmatpush1.msra.mxu0 %v79
  %1768 = vmatprep.subr.mxu0 %v84
  %1769 = vmatpush1.msra.mxu0 %v83
  %1770 = vmatprep.subr.mxu0 %v88
  %1771 = vmatpush1.msra.mxu0 %v87
  %1772 = vmatprep.subr.mxu0 %v92
  %1773 = vmatpush1.msra.mxu0 %v91
  %1774 = vmatprep.subr.mxu0 %v96
  %1775 = vmatpush1.msra.mxu0 %v95
  %1776 = vmatprep.subr.mxu0 %v100
  %1777 = vmatpush1.msra.mxu0 %v99
  %1778 = vmatprep.subr.mxu0 0.0
  %1779 = vmatpush1.msra.mxu0 0.0
  %1780 = vmatprep.subr.mxu0 0.0
  %1781 = vmatpush1.msra.mxu0 0.0
  %1782 = vmatprep.subr.mxu0 0.0
  %1783 = vmatpush1.msra.mxu0 0.0
  %1784 = vmatprep.subr.mxu0 0.0
  %1785 = vmatpush1.msra.mxu0 0.0
  %1786 = vmatprep.subr.mxu0 0.0
  %1787 = vmatpush1.msra.mxu0 0.0
  %1788 = vmatprep.subr.mxu0 0.0
  %1789 = vmatpush1.msra.mxu0 0.0
  %1790 = vmatprep.subr.mxu0 0.0
  %1791 = vmatpush1.msra.mxu0 0.0
  %1792 = vmatprep.subr.mxu0 0.0
  %1793 = vmatpush1.msra.mxu0 0.0
  %1794 = vmatprep.subr.mxu0 0.0
  %1795 = vmatpush1.msra.mxu0 0.0
  %1796 = vmatprep.subr.mxu0 0.0
  %1797 = vmatpush1.msra.mxu0 0.0
  %1798 = vmatprep.subr.mxu0 0.0
  %1799 = vmatpush1.msra.mxu0 0.0
  %1800 = vmatprep.subr.mxu0 0.0
  %1801 = vmatpush1.msra.mxu0 0.0
  %1802 = vmatprep.subr.mxu0 0.0
  %1803 = vmatpush1.msra.mxu0 0.0
  %1804 = vmatprep.subr.mxu0 0.0
  %1805 = vmatpush1.msra.mxu0 0.0
  %1806 = vmatprep.subr.mxu0 0.0
  %1807 = vmatpush1.msra.mxu0 0.0
  %1808 = vmatprep.subr.mxu0 0.0
  %1809 = vmatpush1.msra.mxu0 0.0
  %1810 = vmatprep.mubr.f32.mxu0 0.0
  %1811 = vmatmul.mubr.f32.gmra.mrb[0].mxu0 %v1363
  %v1812 = vpop.f32.mrb[0].mxu0
  %v1813 = vadd.f32 0.0, %v1812
  %v1814 = vpop.f32.mrb[0].mxu0
  %v1815 = vadd.f32 0.0, %v1814
  %1816 = vdwg.mxu0
  %v1817 = vadd.f32 %v1671, %v1742
  %v1818 = vadd.f32 %v1672, %v1744
  %v1819 = vadd.f32 %v1673, %v1813
  %v1820 = vadd.f32 %v1674, %v1815
  %v1821 = vmul.f32 %v1817, 0.5
  %v1822 = vmul.f32 %v1818, 0.5
  %v1823 = vmul.f32 %v1819, 0.5
  %v1824 = vtanh.pop %v1821
  %v1825 = vtanh.pop %v1822
  %v1826 = vtanh.pop %v1823
  %v1827 = vmul.f32 %v1824, 0.5
  %v1828 = vmul.f32 %v1825, 0.5
  %v1829 = vmul.f32 %v1826, 0.5
  %v1830 = vadd.f32 %v1827, 0.5
  %v1831 = vadd.f32 %v1828, 0.5
  %v1832 = vadd.f32 %v1829, 0.5
  %v1833 = vtanh.pop %v1820
  %v1834 = vmul.f32 %v1831, %v1361
  %v1835 = vmul.f32 %v1830, %v1833
  %v1836 = vadd.f32 %v1834, %v1835
  %v1837 = vtanh.pop %v1836
  %v1838 = vmul.f32 %v1832, %v1837
  %1839 = vmatprep.subr.mxu0 %v330
  %1840 = vmatpush1.msra.mxu0 %v329
  %1841 = vmatprep.subr.mxu0 %v334
  %1842 = vmatpush1.msra.mxu0 %v333
  %1843 = vmatprep.subr.mxu0 %v338
  %1844 = vmatpush1.msra.mxu0 %v337
  %1845 = vmatprep.subr.mxu0 %v342
  %1846 = vmatpush1.msra.mxu0 %v341
  %1847 = vmatprep.subr.mxu0 %v346
  %1848 = vmatpush1.msra.mxu0 %v345
  %1849 = vmatprep.subr.mxu0 %v350
  %1850 = vmatpush1.msra.mxu0 %v349
  %1851 = vmatprep.subr.mxu0 %v354
  %1852 = vmatpush1.msra.mxu0 %v353
  %1853 = vmatprep.subr.mxu0 %v358
  %1854 = vmatpush1.msra.mxu0 %v357
  %1855 = vmatprep.subr.mxu0 %v362
  %1856 = vmatpush1.msra.mxu0 %v361
  %1857 = vmatprep.subr.mxu0 %v366
  %1858 = vmatpush1.msra.mxu0 %v365
  %1859 = vmatprep.subr.mxu0 %v370
  %1860 = vmatpush1.msra.mxu0 %v369
  %1861 = vmatprep.subr.mxu0 %v374
  %1862 = vmatpush1.msra.mxu0 %v373
  %1863 = vmatprep.subr.mxu0 %v378
  %1864 = vmatpush1.msra.mxu0 %v377
  %1865 = vmatprep.subr.mxu0 %v382
  %1866 = vmatpush1.msra.mxu0 %v381
  %1867 = vmatprep.subr.mxu0 %v386
  %1868 = vmatpush1.msra.mxu0 %v385
  %1869 = vmatprep.subr.mxu0 %v390
  %1870 = vmatpush1.msra.mxu0 %v389
  %1871 = vmatprep.subr.mxu0 0.0
  %1872 = vmatpush1.msra.mxu0 0.0
  %1873 = vmatprep.subr.mxu0 0.0
  %1874 = vmatpush1.msra.mxu0 0.0
  %1875 = vmatprep.subr.mxu0 0.0
  %1876 = vmatpush1.msra.mxu0 0.0
  %1877 = vmatprep.subr.mxu0 0.0
  %1878 = vmatpush1.msra.mxu0 0.0
  %1879 = vmatprep.subr.mxu0 0.0
  %1880 = vmatpush1.msra.mxu0 0.0
  %1881 = vmatprep.subr.mxu0 0.0
  %1882 = vmatpush1.msra.mxu0 0.0
  %1883 = vmatprep.subr.mxu0 0.0
  %1884 = vmatpush1.msra.mxu0 0.0
  %1885 = vmatprep.subr.mxu0 0.0
  %1886 = vmatpush1.msra.mxu0 0.0
  %1887 = vmatprep.subr.mxu0 0.0
  %1888 = vmatpush1.msra.mxu0 0.0
  %1889 = vmatprep.subr.mxu0 0.0
  %1890 = vmatpush1.msra.mxu0 0.0
  %1891 = vmatprep.subr.mxu0 0.0
  %1892 = vmatpush1.msra.mxu0 0.0
  %1893 = vmatprep.subr.mxu0 0.0
  %1894 = vmatpush1.msra.mxu0 0.0
  %1895 = vmatprep.subr.mxu0 0.0
  %1896 = vmatpush1.msra.mxu0 0.0
  %1897 = vmatprep.subr.mxu0 0.0
  %1898 = vmatpush1.msra.mxu0 0.0
  %1899 = vmatprep.subr.mxu0 0.0
  %1900 = vmatpush1.msra.mxu0 0.0
  %1901 = vmatprep.subr.mxu0 0.0
  %1902 = vmatpush1.msra.mxu0 0.0
  %1903 = vmatprep.mubr.f32.mxu0 0.0
  %1904 = vmatmul.mubr.f32.gmra.mrb[0].mxu0 %v1669
  %v1905 = vpop.f32.mrb[0].mxu0
  %v1906 = vadd.f32 0.0, %v1905
  %v1907 = vpop.f32.mrb[0].mxu0
  %v1908 = vadd.f32 0.0, %v1907
  %1909 = vdwg.mxu0
  %1910 = vmatprep.subr.mxu0 %v332
  %1911 = vmatpush1.msra.mxu0 %v331
  %1912 = vmatprep.subr.mxu0 %v336
  %1913 = vmatpush1.msra.mxu0 %v335
  %1914 = vmatprep.subr.mxu0 %v340
  %1915 = vmatpush1.msra.mxu0 %v339
  %1916 = vmatprep.subr.mxu0 %v344
  %1917 = vmatpush1.msra.mxu0 %v343
  %1918 = vmatprep.subr.mxu0 %v348
  %1919 = vmatpush1.msra.mxu0 %v347
  %1920 = vmatprep.subr.mxu0 %v352
  %1921 = vmatpush1.msra.mxu0 %v351
  %1922 = vmatprep.subr.mxu0 %v356
  %1923 = vmatpush1.msra.mxu0 %v355
  %1924 = vmatprep.subr.mxu0 %v360
  %1925 = vmatpush1.msra.mxu0 %v359
  %1926 = vmatprep.subr.mxu0 %v364
  %1927 = vmatpush1.msra.mxu0 %v363
  %1928 = vmatprep.subr.mxu0 %v368
  %1929 = vmatpush1.msra.mxu0 %v367
  %1930 = vmatprep.subr.mxu0 %v372
  %1931 = vmatpush1.msra.mxu0 %v371
  %1932 = vmatprep.subr.mxu0 %v376
  %1933 = vmatpush1.msra.mxu0 %v375
  %1934 = vmatprep.subr.mxu0 %v380
  %1935 = vmatpush1.msra.mxu0 %v379
  %1936 = vmatprep.subr.mxu0 %v384
  %1937 = vmatpush1.msra.mxu0 %v383
  %1938 = vmatprep.subr.mxu0 %v388
  %1939 = vmatpush1.msra.mxu0 %v387
  %1940 = vmatprep.subr.mxu0 %v392
  %1941 = vmatpush1.msra.mxu0 %v391
  %1942 = vmatprep.subr.mxu0 0.0
  %1943 = vmatpush1.msra.mxu0 0.0
  %1944 = vmatprep.subr.mxu0 0.0
  %1945 = vmatpush1.msra.mxu0 0.0
  %1946 = vmatprep.subr.mxu0 0.0
  %1947 = vmatpush1.msra.mxu0 0.0
  %1948 = vmatprep.subr.mxu0 0.0
  %1949 = vmatpush1.msra.mxu0 0.0
  %1950 = vmatprep.subr.mxu0 0.0
  %1951 = vmatpush1.msra.mxu0 0.0
  %1952 = vmatprep.subr.mxu0 0.0
  %1953 = vmatpush1.msra.mxu0 0.0
  %1954 = vmatprep.subr.mxu0 0.0
  %1955 = vmatpush1.msra.mxu0 0.0
  %1956 = vmatprep.subr.mxu0 0.0
  %1957 = vmatpush1.msra.mxu0 0.0
  %1958 = vmatprep.subr.mxu0 0.0
  %1959 = vmatpush1.msra.mxu0 0.0
  %1960 = vmatprep.subr.mxu0 0.0
  %1961 = vmatpush1.msra.mxu0 0.0
  %1962 = vmatprep.subr.mxu0 0.0
  %1963 = vmatpush1.msra.mxu0 0.0
  %1964 = vmatprep.subr.mxu0 0.0
  %1965 = vmatpush1.msra.mxu0 0.0
  %1966 = vmatprep.subr.mxu0 0.0
  %1967 = vmatpush1.msra.mxu0 0.0
  %1968 = vmatprep.subr.mxu0 0.0
  %1969 = vmatpush1.msra.mxu0 0.0
  %1970 = vmatprep.subr.mxu0 0.0
  %1971 = vmatpush1.msra.mxu0 0.0
  %1972 = vmatprep.subr.mxu0 0.0
  %1973 = vmatpush1.msra.mxu0 0.0
  %1974 = vmatprep.mubr.f32.mxu0 0.0
  %1975 = vmatmul.mubr.f32.gmra.mrb[0].mxu0 %v1669
  %v1976 = vpop.f32.mrb[0].mxu0
  %v1977 = vadd.f32 0.0, %v1976
  %v1978 = vpop.f32.mrb[0].mxu0
  %v1979 = vadd.f32 0.0, %v1978
  %1980 = vdwg.mxu0
  %1981 = vmatprep.subr.mxu0 %v266
  %1982 = vmatpush1.msra.mxu0 %v265
  %1983 = vmatprep.subr.mxu0 %v270
  %1984 = vmatpush1.msra.mxu0 %v269
  %1985 = vmatprep.subr.mxu0 %v274
  %1986 = vmatpush1.msra.mxu0 %v273
  %1987 = vmatprep.subr.mxu0 %v278
  %1988 = vmatpush1.msra.mxu0 %v277
  %1989 = vmatprep.subr.mxu0 %v282
  %1990 = vmatpush1.msra.mxu0 %v281
  %1991 = vmatprep.subr.mxu0 %v286
  %1992 = vmatpush1.msra.mxu0 %v285
  %1993 = vmatprep.subr.mxu0 %v290
  %1994 = vmatpush1.msra.mxu0 %v289
  %1995 = vmatprep.subr.mxu0 %v294
  %1996 = vmatpush1.msra.mxu0 %v293
  %1997 = vmatprep.subr.mxu0 %v298
  %1998 = vmatpush1.msra.mxu0 %v297
  %1999 = vmatprep.subr.mxu0 %v302
  %2000 = vmatpush1.msra.mxu0 %v301
  %2001 = vmatprep.subr.mxu0 %v306
  %2002 = vmatpush1.msra.mxu0 %v305
  %2003 = vmatprep.subr.mxu0 %v310
  %2004 = vmatpush1.msra.mxu0 %v309
  %2005 = vmatprep.subr.mxu0 %v314
  %2006 = vmatpush1.msra.mxu0 %v313
  %2007 = vmatprep.subr.mxu0 %v318
  %2008 = vmatpush1.msra.mxu0 %v317
  %2009 = vmatprep.subr.mxu0 %v322
  %2010 = vmatpush1.msra.mxu0 %v321
  %2011 = vmatprep.subr.mxu0 %v326
  %2012 = vmatpush1.msra.mxu0 %v325
  %2013 = vmatprep.subr.mxu0 0.0
  %2014 = vmatpush1.msra.mxu0 0.0
  %2015 = vmatprep.subr.mxu0 0.0
  %2016 = vmatpush1.msra.mxu0 0.0
  %2017 = vmatprep.subr.mxu0 0.0
  %2018 = vmatpush1.msra.mxu0 0.0
  %2019 = vmatprep.subr.mxu0 0.0
  %2020 = vmatpush1.msra.mxu0 0.0
  %2021 = vmatprep.subr.mxu0 0.0
  %2022 = vmatpush1.msra.mxu0 0.0
  %2023 = vmatprep.subr.mxu0 0.0
  %2024 = vmatpush1.msra.mxu0 0.0
  %2025 = vmatprep.subr.mxu0 0.0
  %2026 = vmatpush1.msra.mxu0 0.0
  %2027 = vmatprep.subr.mxu0 0.0
  %2028 = vmatpush1.msra.mxu0 0.0
  %2029 = vmatprep.subr.mxu0 0.0
  %2030 = vmatpush1.msra.mxu0 0.0
  %2031 = vmatprep.subr.mxu0 0.0
  %2032 = vmatpush1.msra.mxu0 0.0
  %2033 = vmatprep.subr.mxu0 0.0
  %2034 = vmatpush1.msra.mxu0 0.0
  %2035 = vmatprep.subr.mxu0 0.0
  %2036 = vmatpush1.msra.mxu0 0.0
  %2037 = vmatprep.subr.mxu0 0.0
  %2038 = vmatpush1.msra.mxu0 0.0
  %2039 = vmatprep.subr.mxu0 0.0
  %2040 = vmatpush1.msra.mxu0 0.0
  %2041 = vmatprep.subr.mxu0 0.0
  %2042 = vmatpush1.msra.mxu0 0.0
  %2043 = vmatprep.subr.mxu0 0.0
  %2044 = vmatpush1.msra.mxu0 0.0
  %2045 = vmatprep.mubr.f32.mxu0 0.0
  %2046 = vmatmul.mubr.f32.gmra.mrb[0].mxu0 %v1838
  %v2047 = vpop.f32.mrb[0].mxu0
  %v2048 = vadd.f32 %v1906, %v2047
  %v2049 = vpop.f32.mrb[0].mxu0
  %v2050 = vadd.f32 %v1908, %v2049
  %2051 = vdwg.mxu0
  %2052 = vmatprep.subr.mxu0 %v268
  %2053 = vmatpush1.msra.mxu0 %v267
  %2054 = vmatprep.subr.mxu0 %v272
  %2055 = vmatpush1.msra.mxu0 %v271
  %2056 = vmatprep.subr.mxu0 %v276
  %2057 = vmatpush1.msra.mxu0 %v275
  %2058 = vmatprep.subr.mxu0 %v280
  %2059 = vmatpush1.msra.mxu0 %v279
  %2060 = vmatprep.subr.mxu0 %v284
  %2061 = vmatpush1.msra.mxu0 %v283
  %2062 = vmatprep.subr.mxu0 %v288
  %2063 = vmatpush1.msra.mxu0 %v287
  %2064 = vmatprep.subr.mxu0 %v292
  %2065 = vmatpush1.msra.mxu0 %v291
  %2066 = vmatprep.subr.mxu0 %v296
  %2067 = vmatpush1.msra.mxu0 %v295
  %2068 = vmatprep.subr.mxu0 %v300
  %2069 = vmatpush1.msra.mxu0 %v299
  %2070 = vmatprep.subr.mxu0 %v304
  %2071 = vmatpush1.msra.mxu0 %v303
  %2072 = vmatprep.subr.mxu0 %v308
  %2073 = vmatpush1.msra.mxu0 %v307
  %2074 = vmatprep.subr.mxu0 %v312
  %2075 = vmatpush1.msra.mxu0 %v311
  %2076 = vmatprep.subr.mxu0 %v316
  %2077 = vmatpush1.msra.mxu0 %v315
  %2078 = vmatprep.subr.mxu0 %v320
  %2079 = vmatpush1.msra.mxu0 %v319
  %2080 = vmatprep.subr.mxu0 %v324
  %2081 = vmatpush1.msra.mxu0 %v323
  %2082 = vmatprep.subr.mxu0 %v328
  %2083 = vmatpush1.msra.mxu0 %v327
  %2084 = vmatprep.subr.mxu0 0.0
  %2085 = vmatpush1.msra.mxu0 0.0
  %2086 = vmatprep.subr.mxu0 0.0
  %2087 = vmatpush1.msra.mxu0 0.0
  %2088 = vmatprep.subr.mxu0 0.0
  %2089 = vmatpush1.msra.mxu0 0.0
  %2090 = vmatprep.subr.mxu0 0.0
  %2091 = vmatpush1.msra.mxu0 0.0
  %2092 = vmatprep.subr.mxu0 0.0
  %2093 = vmatpush1.msra.mxu0 0.0
  %2094 = vmatprep.subr.mxu0 0.0
  %2095 = vmatpush1.msra.mxu0 0.0
  %2096 = vmatprep.subr.mxu0 0.0
  %2097 = vmatpush1.msra.mxu0 0.0
  %2098 = vmatprep.subr.mxu0 0.0
  %2099 = vmatpush1.msra.mxu0 0.0
  %2100 = vmatprep.subr.mxu0 0.0
  %2101 = vmatpush1.msra.mxu0 0.0
  %2102 = vmatprep.subr.mxu0 0.0
  %2103 = vmatpush1.msra.mxu0 0.0
  %2104 = vmatprep.subr.mxu0 0.0
  %2105 = vmatpush1.msra.mxu0 0.0
  %2106 = vmatprep.subr.mxu0 0.0
  %2107 = vmatpush1.msra.mxu0 0.0
  %2108 = vmatprep.subr.mxu0 0.0
  %2109 = vmatpush1.msra.mxu0 0.0
  %2110 = vmatprep.subr.mxu0 0.0
  %2111 = vmatpush1.msra.mxu0 0.0
  %2112 = vmatprep.subr.mxu0 0.0
  %2113 = vmatpush1.msra.mxu0 0.0
  %2114 = vmatprep.subr.mxu0 0.0
  %2115 = vmatpush1.msra.mxu0 0.0
  %2116 = vmatprep.mubr.f32.mxu0 0.0
  %2117 = vmatmul.mubr.f32.gmra.mrb[0].mxu0 %v1838
  %v2118 = vpop.f32.mrb[0].mxu0
  %v2119 = vadd.f32 %v1977, %v2118
  %v2120 = vpop.f32.mrb[0].mxu0
  %v2121 = vadd.f32 %v1979, %v2120
  %2122 = vdwg.mxu0
  %v2123 = vadd.f32 %v2048, %v681
  %v2124 = vadd.f32 %v2050, %v685
  %v2125 = vadd.f32 %v2119, %v689
  %v2126 = vadd.f32 %v2121, %v693
  %v2127 = vmul.f32 %v2123, 0.5
  %v2128 = vmul.f32 %v2124, 0.5
  %v2129 = vmul.f32 %v2125, 0.5
  %v2130 = vtanh.pop %v2127
  %v2131 = vtanh.pop %v2128
  %v2132 = vtanh.pop %v2129
  %v2133 = vmul.f32 %v2130, 0.5
  %v2134 = vmul.f32 %v2131, 0.5
  %v2135 = vmul.f32 %v2132, 0.5
  %v2136 = vadd.f32 %v2133, 0.5
  %v2137 = vadd.f32 %v2134, 0.5
  %v2138 = vadd.f32 %v2135, 0.5
  %v2139 = vtanh.pop %v2126
  %v2140 = vmul.f32 %v2137, %v1667
  %v2141 = vmul.f32 %v2136, %v2139
  %v2142 = vadd.f32 %v2140, %v2141
  %v2143 = vtanh.pop %v2142
  %v2144 = vmul.f32 %v2138, %v2143
  %s2145 = scalar_lea.vmem %s0, 128
  %v2146 = vld [vmem:[%s2145] sm:$0xff]
  %v2147 = vld [vmem:[%s2145 + $0x8] sm:$0xff]
  %v2148 = vld [vmem:[%s2145 + $0x10] sm:$0xff]
  %v2149 = vld [vmem:[%s2145 + $0x18] sm:$0xff]
  %2150 = vmatprep.subr.mxu0 %v38
  %2151 = vmatpush1.msra.mxu0 %v37
  %2152 = vmatprep.subr.mxu0 %v42
  %2153 = vmatpush1.msra.mxu0 %v41
  %2154 = vmatprep.subr.mxu0 %v46
  %2155 = vmatpush1.msra.mxu0 %v45
  %2156 = vmatprep.subr.mxu0 %v50
  %2157 = vmatpush1.msra.mxu0 %v49
  %2158 = vmatprep.subr.mxu0 %v54
  %2159 = vmatpush1.msra.mxu0 %v53
  %2160 = vmatprep.subr.mxu0 %v58
  %2161 = vmatpush1.msra.mxu0 %v57
  %2162 = vmatprep.subr.mxu0 %v62
  %2163 = vmatpush1.msra.mxu0 %v61
  %2164 = vmatprep.subr.mxu0 %v66
  %2165 = vmatpush1.msra.mxu0 %v65
  %2166 = vmatprep.subr.mxu0 %v70
  %2167 = vmatpush1.msra.mxu0 %v69
  %2168 = vmatprep.subr.mxu0 %v74
  %2169 = vmatpush1.msra.mxu0 %v73
  %2170 = vmatprep.subr.mxu0 %v78
  %2171 = vmatpush1.msra.mxu0 %v77
  %2172 = vmatprep.subr.mxu0 %v82
  %2173 = vmatpush1.msra.mxu0 %v81
  %2174 = vmatprep.subr.mxu0 %v86
  %2175 = vmatpush1.msra.mxu0 %v85
  %2176 = vmatprep.subr.mxu0 %v90
  %2177 = vmatpush1.msra.mxu0 %v89
  %2178 = vmatprep.subr.mxu0 %v94
  %2179 = vmatpush1.msra.mxu0 %v93
  %2180 = vmatprep.subr.mxu0 %v98
  %2181 = vmatpush1.msra.mxu0 %v97
  %2182 = vmatprep.subr.mxu0 0.0
  %2183 = vmatpush1.msra.mxu0 0.0
  %2184 = vmatprep.subr.mxu0 0.0
  %2185 = vmatpush1.msra.mxu0 0.0
  %2186 = vmatprep.subr.mxu0 0.0
  %2187 = vmatpush1.msra.mxu0 0.0
  %2188 = vmatprep.subr.mxu0 0.0
  %2189 = vmatpush1.msra.mxu0 0.0
  %2190 = vmatprep.subr.mxu0 0.0
  %2191 = vmatpush1.msra.mxu0 0.0
  %2192 = vmatprep.subr.mxu0 0.0
  %2193 = vmatpush1.msra.mxu0 0.0
  %2194 = vmatprep.subr.mxu0 0.0
  %2195 = vmatpush1.msra.mxu0 0.0
  %2196 = vmatprep.subr.mxu0 0.0
  %2197 = vmatpush1.msra.mxu0 0.0
  %2198 = vmatprep.subr.mxu0 0.0
  %2199 = vmatpush1.msra.mxu0 0.0
  %2200 = vmatprep.subr.mxu0 0.0
  %2201 = vmatpush1.msra.mxu0 0.0
  %2202 = vmatprep.subr.mxu0 0.0
  %2203 = vmatpush1.msra.mxu0 0.0
  %2204 = vmatprep.subr.mxu0 0.0
  %2205 = vmatpush1.msra.mxu0 0.0
  %2206 = vmatprep.subr.mxu0 0.0
  %2207 = vmatpush1.msra.mxu0 0.0
  %2208 = vmatprep.subr.mxu0 0.0
  %2209 = vmatpush1.msra.mxu0 0.0
  %2210 = vmatprep.subr.mxu0 0.0
  %2211 = vmatpush1.msra.mxu0 0.0
  %2212 = vmatprep.subr.mxu0 0.0
  %2213 = vmatpush1.msra.mxu0 0.0
  %2214 = vmatprep.mubr.f32.mxu0 0.0
  %2215 = vmatmul.mubr.f32.gmra.mrb[0].mxu0 %v1838
  %v2216 = vpop.f32.mrb[0].mxu0
  %v2217 = vadd.f32 0.0, %v2216
  %v2218 = vpop.f32.mrb[0].mxu0
  %v2219 = vadd.f32 0.0, %v2218
  %2220 = vdwg.mxu0
  %2221 = vmatprep.subr.mxu0 %v40
  %2222 = vmatpush1.msra.mxu0 %v39
  %2223 = vmatprep.subr.mxu0 %v44
  %2224 = vmatpush1.msra.mxu0 %v43
  %2225 = vmatprep.subr.mxu0 %v48
  %2226 = vmatpush1.msra.mxu0 %v47
  %2227 = vmatprep.subr.mxu0 %v52
  %2228 = vmatpush1.msra.mxu0 %v51
  %2229 = vmatprep.subr.mxu0 %v56
  %2230 = vmatpush1.msra.mxu0 %v55
  %2231 = vmatprep.subr.mxu0 %v60
  %2232 = vmatpush1.msra.mxu0 %v59
  %2233 = vmatprep.subr.mxu0 %v64
  %2234 = vmatpush1.msra.mxu0 %v63
  %2235 = vmatprep.subr.mxu0 %v68
  %2236 = vmatpush1.msra.mxu0 %v67
  %2237 = vmatprep.subr.mxu0 %v72
  %2238 = vmatpush1.msra.mxu0 %v71
  %2239 = vmatprep.subr.mxu0 %v76
  %2240 = vmatpush1.msra.mxu0 %v75
  %2241 = vmatprep.subr.mxu0 %v80
  %2242 = vmatpush1.msra.mxu0 %v79
  %2243 = vmatprep.subr.mxu0 %v84
  %2244 = vmatpush1.msra.mxu0 %v83
  %2245 = vmatprep.subr.mxu0 %v88
  %2246 = vmatpush1.msra.mxu0 %v87
  %2247 = vmatprep.subr.mxu0 %v92
  %2248 = vmatpush1.msra.mxu0 %v91
  %2249 = vmatprep.subr.mxu0 %v96
  %2250 = vmatpush1.msra.mxu0 %v95
  %2251 = vmatprep.subr.mxu0 %v100
  %2252 = vmatpush1.msra.mxu0 %v99
  %2253 = vmatprep.subr.mxu0 0.0
  %2254 = vmatpush1.msra.mxu0 0.0
  %2255 = vmatprep.subr.mxu0 0.0
  %2256 = vmatpush1.msra.mxu0 0.0
  %2257 = vmatprep.subr.mxu0 0.0
  %2258 = vmatpush1.msra.mxu0 0.0
  %2259 = vmatprep.subr.mxu0 0.0
  %2260 = vmatpush1.msra.mxu0 0.0
  %2261 = vmatprep.subr.mxu0 0.0
  %2262 = vmatpush1.msra.mxu0 0.0
  %2263 = vmatprep.subr.mxu0 0.0
  %2264 = vmatpush1.msra.mxu0 0.0
  %2265 = vmatprep.subr.mxu0 0.0
  %2266 = vmatpush1.msra.mxu0 0.0
  %2267 = vmatprep.subr.mxu0 0.0
  %2268 = vmatpush1.msra.mxu0 0.0
  %2269 = vmatprep.subr.mxu0 0.0
  %2270 = vmatpush1.msra.mxu0 0.0
  %2271 = vmatprep.subr.mxu0 0.0
  %2272 = vmatpush1.msra.mxu0 0.0
  %2273 = vmatprep.subr.mxu0 0.0
  %2274 = vmatpush1.msra.mxu0 0.0
  %2275 = vmatprep.subr.mxu0 0.0
  %2276 = vmatpush1.msra.mxu0 0.0
  %2277 = vmatprep.subr.mxu0 0.0
  %2278 = vmatpush1.msra.mxu0 0.0
  %2279 = vmatprep.subr.mxu0 0.0
  %2280 = vmatpush1.msra.mxu0 0.0
  %2281 = vmatprep.subr.mxu0 0.0
  %2282 = vmatpush1.msra.mxu0 0.0
  %2283 = vmatprep.subr.mxu0 0.0
  %2284 = vmatpush1.msra.mxu0 0.0
  %2285 = vmatprep.mubr.f32.mxu0 0.0
  %2286 = vmatmul.mubr.f32.gmra.mrb[0].mxu0 %v1838
  %v2287 = vpop.f32.mrb[0].mxu0
  %v2288 = vadd.f32 0.0, %v2287
  %v2289 = vpop.f32.mrb[0].mxu0
  %v2290 = vadd.f32 0.0, %v2289
  %2291 = vdwg.mxu0
  %v2292 = vadd.f32 %v2146, %v2217
  %v2293 = vadd.f32 %v2147, %v2219
  %v2294 = vadd.f32 %v2148, %v2288
  %v2295 = vadd.f32 %v2149, %v2290
  %v2296 = vmul.f32 %v2292, 0.5
  %v2297 = vmul.f32 %v2293, 0.5
  %v2298 = vmul.f32 %v2294, 0.5
  %v2299 = vtanh.pop %v2296
  %v2300 = vtanh.pop %v2297
  %v2301 = vtanh.pop %v2298
  %v2302 = vmul.f32 %v2299, 0.5
  %v2303 = vmul.f32 %v2300, 0.5
  %v2304 = vmul.f32 %v2301, 0.5
  %v2305 = vadd.f32 %v2302, 0.5
  %v2306 = vadd.f32 %v2303, 0.5
  %v2307 = vadd.f32 %v2304, 0.5
  %v2308 = vtanh.pop %v2295
  %v2309 = vmul.f32 %v2306, %v1836
  %v2310 = vmul.f32 %v2305, %v2308
  %v2311 = vadd.f32 %v2309, %v2310
  %v2312 = vtanh.pop %v2311
  %v2313 = vmul.f32 %v2307, %v2312
  %2314 = vmatprep.subr.mxu0 %v330
  %2315 = vmatpush1.msra.mxu0 %v329
  %2316 = vmatprep.subr.mxu0 %v334
  %2317 = vmatpush1.msra.mxu0 %v333
  %2318 = vmatprep.subr.mxu0 %v338
  %2319 = vmatpush1.msra.mxu0 %v337
  %2320 = vmatprep.subr.mxu0 %v342
  %2321 = vmatpush1.msra.mxu0 %v341
  %2322 = vmatprep.subr.mxu0 %v346
  %2323 = vmatpush1.msra.mxu0 %v345
  %2324 = vmatprep.subr.mxu0 %v350
  %2325 = vmatpush1.msra.mxu0 %v349
  %2326 = vmatprep.subr.mxu0 %v354
  %2327 = vmatpush1.msra.mxu0 %v353
  %2328 = vmatprep.subr.mxu0 %v358
  %2329 = vmatpush1.msra.mxu0 %v357
  %2330 = vmatprep.subr.mxu0 %v362
  %2331 = vmatpush1.msra.mxu0 %v361
  %2332 = vmatprep.subr.mxu0 %v366
  %2333 = vmatpush1.msra.mxu0 %v365
  %2334 = vmatprep.subr.mxu0 %v370
  %2335 = vmatpush1.msra.mxu0 %v369
  %2336 = vmatprep.subr.mxu0 %v374
  %2337 = vmatpush1.msra.mxu0 %v373
  %2338 = vmatprep.subr.mxu0 %v378
  %2339 = vmatpush1.msra.mxu0 %v377
  %2340 = vmatprep.subr.mxu0 %v382
  %2341 = vmatpush1.msra.mxu0 %v381
  %2342 = vmatprep.subr.mxu0 %v386
  %2343 = vmatpush1.msra.mxu0 %v385
  %2344 = vmatprep.subr.mxu0 %v390
  %2345 = vmatpush1.msra.mxu0 %v389
  %2346 = vmatprep.subr.mxu0 0.0
  %2347 = vmatpush1.msra.mxu0 0.0
  %2348 = vmatprep.subr.mxu0 0.0
  %2349 = vmatpush1.msra.mxu0 0.0
  %2350 = vmatprep.subr.mxu0 0.0
  %2351 = vmatpush1.msra.mxu0 0.0
  %2352 = vmatprep.subr.mxu0 0.0
  %2353 = vmatpush1.msra.mxu0 0.0
  %2354 = vmatprep.subr.mxu0 0.0
  %2355 = vmatpush1.msra.mxu0 0.0
  %2356 = vmatprep.subr.mxu0 0.0
  %2357 = vmatpush1.msra.mxu0 0.0
  %2358 = vmatprep.subr.mxu0 0.0
  %2359 = vmatpush1.msra.mxu0 0.0
  %2360 = vmatprep.subr.mxu0 0.0
  %2361 = vmatpush1.msra.mxu0 0.0
  %2362 = vmatprep.subr.mxu0 0.0
  %2363 = vmatpush1.msra.mxu0 0.0
  %2364 = vmatprep.subr.mxu0 0.0
  %2365 = vmatpush1.msra.mxu0 0.0
  %2366 = vmatprep.subr.mxu0 0.0
  %2367 = vmatpush1.msra.mxu0 0.0
  %2368 = vmatprep.subr.mxu0 0.0
  %2369 = vmatpush1.msra.mxu0 0.0
  %2370 = vmatprep.subr.mxu0 0.0
  %2371 = vmatpush1.msra.mxu0 0.0
  %2372 = vmatprep.subr.mxu0 0.0
  %2373 = vmatpush1.msra.mxu0 0.0
  %2374 = vmatprep.subr.mxu0 0.0
  %2375 = vmatpush1.msra.mxu0 0.0
  %2376 = vmatprep.subr.mxu0 0.0
  %2377 = vmatpush1.msra.mxu0 0.0
  %2378 = vmatprep.mubr.f32.mxu0 0.0
  %2379 = vmatmul.mubr.f32.gmra.mrb[0].mxu0 %v2144
  %v2380 = vpop.f32.mrb[0].mxu0
  %v2381 = vadd.f32 0.0, %v2380
  %v2382 = vpop.f32.mrb[0].mxu0
  %v2383 = vadd.f32 0.0, %v2382
  %2384 = vdwg.mxu0
  %2385 = vmatprep.subr.mxu0 %v332
  %2386 = vmatpush1.msra.mxu0 %v331
  %2387 = vmatprep.subr.mxu0 %v336
  %2388 = vmatpush1.msra.mxu0 %v335
  %2389 = vmatprep.subr.mxu0 %v340
  %2390 = vmatpush1.msra.mxu0 %v339
  %2391 = vmatprep.subr.mxu0 %v344
  %2392 = vmatpush1.msra.mxu0 %v343
  %2393 = vmatprep.subr.mxu0 %v348
  %2394 = vmatpush1.msra.mxu0 %v347
  %2395 = vmatprep.subr.mxu0 %v352
  %2396 = vmatpush1.msra.mxu0 %v351
  %2397 = vmatprep.subr.mxu0 %v356
  %2398 = vmatpush1.msra.mxu0 %v355
  %2399 = vmatprep.subr.mxu0 %v360
  %2400 = vmatpush1.msra.mxu0 %v359
  %2401 = vmatprep.subr.mxu0 %v364
  %2402 = vmatpush1.msra.mxu0 %v363
  %2403 = vmatprep.subr.mxu0 %v368
  %2404 = vmatpush1.msra.mxu0 %v367
  %2405 = vmatprep.subr.mxu0 %v372
  %2406 = vmatpush1.msra.mxu0 %v371
  %2407 = vmatprep.subr.mxu0 %v376
  %2408 = vmatpush1.msra.mxu0 %v375
  %2409 = vmatprep.subr.mxu0 %v380
  %2410 = vmatpush1.msra.mxu0 %v379
  %2411 = vmatprep.subr.mxu0 %v384
  %2412 = vmatpush1.msra.mxu0 %v383
  %2413 = vmatprep.subr.mxu0 %v388
  %2414 = vmatpush1.msra.mxu0 %v387
  %2415 = vmatprep.subr.mxu0 %v392
  %2416 = vmatpush1.msra.mxu0 %v391
  %2417 = vmatprep.subr.mxu0 0.0
  %2418 = vmatpush1.msra.mxu0 0.0
  %2419 = vmatprep.subr.mxu0 0.0
  %2420 = vmatpush1.msra.mxu0 0.0
  %2421 = vmatprep.subr.mxu0 0.0
  %2422 = vmatpush1.msra.mxu0 0.0
  %2423 = vmatprep.subr.mxu0 0.0
  %2424 = vmatpush1.msra.mxu0 0.0
  %2425 = vmatprep.subr.mxu0 0.0
  %2426 = vmatpush1.msra.mxu0 0.0
  %2427 = vmatprep.subr.mxu0 0.0
  %2428 = vmatpush1.msra.mxu0 0.0
  %2429 = vmatprep.subr.mxu0 0.0
  %2430 = vmatpush1.msra.mxu0 0.0
  %2431 = vmatprep.subr.mxu0 0.0
  %2432 = vmatpush1.msra.mxu0 0.0
  %2433 = vmatprep.subr.mxu0 0.0
  %2434 = vmatpush1.msra.mxu0 0.0
  %2435 = vmatprep.subr.mxu0 0.0
  %2436 = vmatpush1.msra.mxu0 0.0
  %2437 = vmatprep.subr.mxu0 0.0
  %2438 = vmatpush1.msra.mxu0 0.0
  %2439 = vmatprep.subr.mxu0 0.0
  %2440 = vmatpush1.msra.mxu0 0.0
  %2441 = vmatprep.subr.mxu0 0.0
  %2442 = vmatpush1.msra.mxu0 0.0
  %2443 = vmatprep.subr.mxu0 0.0
  %2444 = vmatpush1.msra.mxu0 0.0
  %2445 = vmatprep.subr.mxu0 0.0
  %2446 = vmatpush1.msra.mxu0 0.0
  %2447 = vmatprep.subr.mxu0 0.0
  %2448 = vmatpush1.msra.mxu0 0.0
  %2449 = vmatprep.mubr.f32.mxu0 0.0
  %2450 = vmatmul.mubr.f32.gmra.mrb[0].mxu0 %v2144
  %v2451 = vpop.f32.mrb[0].mxu0
  %v2452 = vadd.f32 0.0, %v2451
  %v2453 = vpop.f32.mrb[0].mxu0
  %v2454 = vadd.f32 0.0, %v2453
  %2455 = vdwg.mxu0
  %2456 = vmatprep.subr.mxu0 %v266
  %2457 = vmatpush1.msra.mxu0 %v265
  %2458 = vmatprep.subr.mxu0 %v270
  %2459 = vmatpush1.msra.mxu0 %v269
  %2460 = vmatprep.subr.mxu0 %v274
  %2461 = vmatpush1.msra.mxu0 %v273
  %2462 = vmatprep.subr.mxu0 %v278
  %2463 = vmatpush1.msra.mxu0 %v277
  %2464 = vmatprep.subr.mxu0 %v282
  %2465 = vmatpush1.msra.mxu0 %v281
  %2466 = vmatprep.subr.mxu0 %v286
  %2467 = vmatpush1.msra.mxu0 %v285
  %2468 = vmatprep.subr.mxu0 %v290
  %2469 = vmatpush1.msra.mxu0 %v289
  %2470 = vmatprep.subr.mxu0 %v294
  %2471 = vmatpush1.msra.mxu0 %v293
  %2472 = vmatprep.subr.mxu0 %v298
  %2473 = vmatpush1.msra.mxu0 %v297
  %2474 = vmatprep.subr.mxu0 %v302
  %2475 = vmatpush1.msra.mxu0 %v301
  %2476 = vmatprep.subr.mxu0 %v306
  %2477 = vmatpush1.msra.mxu0 %v305
  %2478 = vmatprep.subr.mxu0 %v310
  %2479 = vmatpush1.msra.mxu0 %v309
  %2480 = vmatprep.subr.mxu0 %v314
  %2481 = vmatpush1.msra.mxu0 %v313
  %2482 = vmatprep.subr.mxu0 %v318
  %2483 = vmatpush1.msra.mxu0 %v317
  %2484 = vmatprep.subr.mxu0 %v322
  %2485 = vmatpush1.msra.mxu0 %v321
  %2486 = vmatprep.subr.mxu0 %v326
  %2487 = vmatpush1.msra.mxu0 %v325
  %2488 = vmatprep.subr.mxu0 0.0
  %2489 = vmatpush1.msra.mxu0 0.0
  %2490 = vmatprep.subr.mxu0 0.0
  %2491 = vmatpush1.msra.mxu0 0.0
  %2492 = vmatprep.subr.mxu0 0.0
  %2493 = vmatpush1.msra.mxu0 0.0
  %2494 = vmatprep.subr.mxu0 0.0
  %2495 = vmatpush1.msra.mxu0 0.0
  %2496 = vmatprep.subr.mxu0 0.0
  %2497 = vmatpush1.msra.mxu0 0.0
  %2498 = vmatprep.subr.mxu0 0.0
  %2499 = vmatpush1.msra.mxu0 0.0
  %2500 = vmatprep.subr.mxu0 0.0
  %2501 = vmatpush1.msra.mxu0 0.0
  %2502 = vmatprep.subr.mxu0 0.0
  %2503 = vmatpush1.msra.mxu0 0.0
  %2504 = vmatprep.subr.mxu0 0.0
  %2505 = vmatpush1.msra.mxu0 0.0
  %2506 = vmatprep.subr.mxu0 0.0
  %2507 = vmatpush1.msra.mxu0 0.0
  %2508 = vmatprep.subr.mxu0 0.0
  %2509 = vmatpush1.msra.mxu0 0.0
  %2510 = vmatprep.subr.mxu0 0.0
  %2511 = vmatpush1.msra.mxu0 0.0
  %2512 = vmatprep.subr.mxu0 0.0
  %2513 = vmatpush1.msra.mxu0 0.0
  %2514 = vmatprep.subr.mxu0 0.0
  %2515 = vmatpush1.msra.mxu0 0.0
  %2516 = vmatprep.subr.mxu0 0.0
  %2517 = vmatpush1.msra.mxu0 0.0
  %2518 = vmatprep.subr.mxu0 0.0
  %2519 = vmatpush1.msra.mxu0 0.0
  %2520 = vmatprep.mubr.f32.mxu0 0.0
  %2521 = vmatmul.mubr.f32.gmra.mrb[0].mxu0 %v2313
  %v2522 = vpop.f32.mrb[0].mxu0
  %v2523 = vadd.f32 %v2381, %v2522
  %v2524 = vpop.f32.mrb[0].mxu0
  %v2525 = vadd.f32 %v2383, %v2524
  %2526 = vdwg.mxu0
  %2527 = vmatprep.subr.mxu0 %v268
  %2528 = vmatpush1.msra.mxu0 %v267
  %2529 = vmatprep.subr.mxu0 %v272
  %2530 = vmatpush1.msra.mxu0 %v271
  %2531 = vmatprep.subr.mxu0 %v276
  %2532 = vmatpush1.msra.mxu0 %v275
  %2533 = vmatprep.subr.mxu0 %v280
  %2534 = vmatpush1.msra.mxu0 %v279
  %2535 = vmatprep.subr.mxu0 %v284
  %2536 = vmatpush1.msra.mxu0 %v283
  %2537 = vmatprep.subr.mxu0 %v288
  %2538 = vmatpush1.msra.mxu0 %v287
  %2539 = vmatprep.subr.mxu0 %v292
  %2540 = vmatpush1.msra.mxu0 %v291
  %2541 = vmatprep.subr.mxu0 %v296
  %2542 = vmatpush1.msra.mxu0 %v295
  %2543 = vmatprep.subr.mxu0 %v300
  %2544 = vmatpush1.msra.mxu0 %v299
  %2545 = vmatprep.subr.mxu0 %v304
  %2546 = vmatpush1.msra.mxu0 %v303
  %2547 = vmatprep.subr.mxu0 %v308
  %2548 = vmatpush1.msra.mxu0 %v307
  %2549 = vmatprep.subr.mxu0 %v312
  %2550 = vmatpush1.msra.mxu0 %v311
  %2551 = vmatprep.subr.mxu0 %v316
  %2552 = vmatpush1.msra.mxu0 %v315
  %2553 = vmatprep.subr.mxu0 %v320
  %2554 = vmatpush1.msra.mxu0 %v319
  %2555 = vmatprep.subr.mxu0 %v324
  %2556 = vmatpush1.msra.mxu0 %v323
  %2557 = vmatprep.subr.mxu0 %v328
  %2558 = vmatpush1.msra.mxu0 %v327
  %2559 = vmatprep.subr.mxu0 0.0
  %2560 = vmatpush1.msra.mxu0 0.0
  %2561 = vmatprep.subr.mxu0 0.0
  %2562 = vmatpush1.msra.mxu0 0.0
  %2563 = vmatprep.subr.mxu0 0.0
  %2564 = vmatpush1.msra.mxu0 0.0
  %2565 = vmatprep.subr.mxu0 0.0
  %2566 = vmatpush1.msra.mxu0 0.0
  %2567 = vmatprep.subr.mxu0 0.0
  %2568 = vmatpush1.msra.mxu0 0.0
  %2569 = vmatprep.subr.mxu0 0.0
  %2570 = vmatpush1.msra.mxu0 0.0
  %2571 = vmatprep.subr.mxu0 0.0
  %2572 = vmatpush1.msra.mxu0 0.0
  %2573 = vmatprep.subr.mxu0 0.0
  %2574 = vmatpush1.msra.mxu0 0.0
  %2575 = vmatprep.subr.mxu0 0.0
  %2576 = vmatpush1.msra.mxu0 0.0
  %2577 = vmatprep.subr.mxu0 0.0
  %2578 = vmatpush1.msra.mxu0 0.0
  %2579 = vmatprep.subr.mxu0 0.0
  %2580 = vmatpush1.msra.mxu0 0.0
  %2581 = vmatprep.subr.mxu0 0.0
  %2582 = vmatpush1.msra.mxu0 0.0
  %2583 = vmatprep.subr.mxu0 0.0
  %2584 = vmatpush1.msra.mxu0 0.0
  %2585 = vmatprep.subr.mxu0 0.0
  %2586 = vmatpush1.msra.mxu0 0.0
  %2587 = vmatprep.subr.mxu0 0.0
  %2588 = vmatpush1.msra.mxu0 0.0
  %2589 = vmatprep.subr.mxu0 0.0
  %2590 = vmatpush1.msra.mxu0 0.0
  %2591 = vmatprep.mubr.f32.mxu0 0.0
  %2592 = vmatmul.mubr.f32.gmra.mrb[0].mxu0 %v2313
  %v2593 = vpop.f32.mrb[0].mxu0
  %v2594 = vadd.f32 %v2452, %v2593
  %v2595 = vpop.f32.mrb[0].mxu0
  %v2596 = vadd.f32 %v2454, %v2595
  %2597 = vdwg.mxu0
  %v2598 = vadd.f32 %v2523, %v681
  %v2599 = vadd.f32 %v2525, %v685
  %v2600 = vadd.f32 %v2594, %v689
  %v2601 = vadd.f32 %v2596, %v693
  %v2602 = vmul.f32 %v2598, 0.5
  %v2603 = vmul.f32 %v2599, 0.5
  %v2604 = vmul.f32 %v2600, 0.5
  %v2605 = vtanh.pop %v2602
  %v2606 = vtanh.pop %v2603
  %v2607 = vtanh.pop %v2604
  %v2608 = vmul.f32 %v2605, 0.5
  %v2609 = vmul.f32 %v2606, 0.5
  %v2610 = vmul.f32 %v2607, 0.5
  %v2611 = vadd.f32 %v2608, 0.5
  %v2612 = vadd.f32 %v2609, 0.5
  %v2613 = vadd.f32 %v2610, 0.5
  %v2614 = vtanh.pop %v2601
  %v2615 = vmul.f32 %v2612, %v2142
  %v2616 = vmul.f32 %v2611, %v2614
  %v2617 = vadd.f32 %v2615, %v2616
  %v2618 = vtanh.pop %v2617
  %v2619 = vmul.f32 %v2613, %v2618
  %s2620 = scalar_lea.vmem %s0, 160
  %v2621 = vld [vmem:[%s2620] sm:$0xff]
  %v2622 = vld [vmem:[%s2620 + $0x8] sm:$0xff]
  %v2623 = vld [vmem:[%s2620 + $0x10] sm:$0xff]
  %v2624 = vld [vmem:[%s2620 + $0x18] sm:$0xff]
  %2625 = vmatprep.subr.mxu0 %v38
  %2626 = vmatpush1.msra.mxu0 %v37
  %2627 = vmatprep.subr.mxu0 %v42
  %2628 = vmatpush1.msra.mxu0 %v41
  %2629 = vmatprep.subr.mxu0 %v46
  %2630 = vmatpush1.msra.mxu0 %v45
  %2631 = vmatprep.subr.mxu0 %v50
  %2632 = vmatpush1.msra.mxu0 %v49
  %2633 = vmatprep.subr.mxu0 %v54
  %2634 = vmatpush1.msra.mxu0 %v53
  %2635 = vmatprep.subr.mxu0 %v58
  %2636 = vmatpush1.msra.mxu0 %v57
  %2637 = vmatprep.subr.mxu0 %v62
  %2638 = vmatpush1.msra.mxu0 %v61
  %2639 = vmatprep.subr.mxu0 %v66
  %2640 = vmatpush1.msra.mxu0 %v65
  %2641 = vmatprep.subr.mxu0 %v70
  %2642 = vmatpush1.msra.mxu0 %v69
  %2643 = vmatprep.subr.mxu0 %v74
  %2644 = vmatpush1.msra.mxu0 %v73
  %2645 = vmatprep.subr.mxu0 %v78
  %2646 = vmatpush1.msra.mxu0 %v77
  %2647 = vmatprep.subr.mxu0 %v82
  %2648 = vmatpush1.msra.mxu0 %v81
  %2649 = vmatprep.subr.mxu0 %v86
  %2650 = vmatpush1.msra.mxu0 %v85
  %2651 = vmatprep.subr.mxu0 %v90
  %2652 = vmatpush1.msra.mxu0 %v89
  %2653 = vmatprep.subr.mxu0 %v94
  %2654 = vmatpush1.msra.mxu0 %v93
  %2655 = vmatprep.subr.mxu0 %v98
  %2656 = vmatpush1.msra.mxu0 %v97
  %2657 = vmatprep.subr.mxu0 0.0
  %2658 = vmatpush1.msra.mxu0 0.0
  %2659 = vmatprep.subr.mxu0 0.0
  %2660 = vmatpush1.msra.mxu0 0.0
  %2661 = vmatprep.subr.mxu0 0.0
  %2662 = vmatpush1.msra.mxu0 0.0
  %2663 = vmatprep.subr.mxu0 0.0
  %2664 = vmatpush1.msra.mxu0 0.0
  %2665 = vmatprep.subr.mxu0 0.0
  %2666 = vmatpush1.msra.mxu0 0.0
  %2667 = vmatprep.subr.mxu0 0.0
  %2668 = vmatpush1.msra.mxu0 0.0
  %2669 = vmatprep.subr.mxu0 0.0
  %2670 = vmatpush1.msra.mxu0 0.0
  %2671 = vmatprep.subr.mxu0 0.0
  %2672 = vmatpush1.msra.mxu0 0.0
  %2673 = vmatprep.subr.mxu0 0.0
  %2674 = vmatpush1.msra.mxu0 0.0
  %2675 = vmatprep.subr.mxu0 0.0
  %2676 = vmatpush1.msra.mxu0 0.0
  %2677 = vmatprep.subr.mxu0 0.0
  %2678 = vmatpush1.msra.mxu0 0.0
  %2679 = vmatprep.subr.mxu0 0.0
  %2680 = vmatpush1.msra.mxu0 0.0
  %2681 = vmatprep.subr.mxu0 0.0
  %2682 = vmatpush1.msra.mxu0 0.0
  %2683 = vmatprep.subr.mxu0 0.0
  %2684 = vmatpush1.msra.mxu0 0.0
  %2685 = vmatprep.subr.mxu0 0.0
  %2686 = vmatpush1.msra.mxu0 0.0
  %2687 = vmatprep.subr.mxu0 0.0
  %2688 = vmatpush1.msra.mxu0 0.0
  %2689 = vmatprep.mubr.f32.mxu0 0.0
  %2690 = vmatmul.mubr.f32.gmra.mrb[0].mxu0 %v2313
  %v2691 = vpop.f32.mrb[0].mxu0
  %v2692 = vadd.f32 0.0, %v2691
  %v2693 = vpop.f32.mrb[0].mxu0
  %v2694 = vadd.f32 0.0, %v2693
  %2695 = vdwg.mxu0
  %2696 = vmatprep.subr.mxu0 %v40
  %2697 = vmatpush1.msra.mxu0 %v39
  %2698 = vmatprep.subr.mxu0 %v44
  %2699 = vmatpush1.msra.mxu0 %v43
  %2700 = vmatprep.subr.mxu0 %v48
  %2701 = vmatpush1.msra.mxu0 %v47
  %2702 = vmatprep.subr.mxu0 %v52
  %2703 = vmatpush1.msra.mxu0 %v51
  %2704 = vmatprep.subr.mxu0 %v56
  %2705 = vmatpush1.msra.mxu0 %v55
  %2706 = vmatprep.subr.mxu0 %v60
  %2707 = vmatpush1.msra.mxu0 %v59
  %2708 = vmatprep.subr.mxu0 %v64
  %2709 = vmatpush1.msra.mxu0 %v63
  %2710 = vmatprep.subr.mxu0 %v68
  %2711 = vmatpush1.msra.mxu0 %v67
  %2712 = vmatprep.subr.mxu0 %v72
  %2713 = vmatpush1.msra.mxu0 %v71
  %2714 = vmatprep.subr.mxu0 %v76
  %2715 = vmatpush1.msra.mxu0 %v75
  %2716 = vmatprep.subr.mxu0 %v80
  %2717 = vmatpush1.msra.mxu0 %v79
  %2718 = vmatprep.subr.mxu0 %v84
  %2719 = vmatpush1.msra.mxu0 %v83
  %2720 = vmatprep.subr.mxu0 %v88
  %2721 = vmatpush1.msra.mxu0 %v87
  %2722 = vmatprep.subr.mxu0 %v92
  %2723 = vmatpush1.msra.mxu0 %v91
  %2724 = vmatprep.subr.mxu0 %v96
  %2725 = vmatpush1.msra.mxu0 %v95
  %2726 = vmatprep.subr.mxu0 %v100
  %2727 = vmatpush1.msra.mxu0 %v99
  %2728 = vmatprep.subr.mxu0 0.0
  %2729 = vmatpush1.msra.mxu0 0.0
  %2730 = vmatprep.subr.mxu0 0.0
  %2731 = vmatpush1.msra.mxu0 0.0
  %2732 = vmatprep.subr.mxu0 0.0
  %2733 = vmatpush1.msra.mxu0 0.0
  %2734 = vmatprep.subr.mxu0 0.0
  %2735 = vmatpush1.msra.mxu0 0.0
  %2736 = vmatprep.subr.mxu0 0.0
  %2737 = vmatpush1.msra.mxu0 0.0
  %2738 = vmatprep.subr.mxu0 0.0
  %2739 = vmatpush1.msra.mxu0 0.0
  %2740 = vmatprep.subr.mxu0 0.0
  %2741 = vmatpush1.msra.mxu0 0.0
  %2742 = vmatprep.subr.mxu0 0.0
  %2743 = vmatpush1.msra.mxu0 0.0
  %2744 = vmatprep.subr.mxu0 0.0
  %2745 = vmatpush1.msra.mxu0 0.0
  %2746 = vmatprep.subr.mxu0 0.0
  %2747 = vmatpush1.msra.mxu0 0.0
  %2748 = vmatprep.subr.mxu0 0.0
  %2749 = vmatpush1.msra.mxu0 0.0
  %2750 = vmatprep.subr.mxu0 0.0
  %2751 = vmatpush1.msra.mxu0 0.0
  %2752 = vmatprep.subr.mxu0 0.0
  %2753 = vmatpush1.msra.mxu0 0.0
  %2754 = vmatprep.subr.mxu0 0.0
  %2755 = vmatpush1.msra.mxu0 0.0
  %2756 = vmatprep.subr.mxu0 0.0
  %2757 = vmatpush1.msra.mxu0 0.0
  %2758 = vmatprep.subr.mxu0 0.0
  %2759 = vmatpush1.msra.mxu0 0.0
  %2760 = vmatprep.mubr.f32.mxu0 0.0
  %2761 = vmatmul.mubr.f32.gmra.mrb[0].mxu0 %v2313
  %v2762 = vpop.f32.mrb[0].mxu0
  %v2763 = vadd.f32 0.0, %v2762
  %v2764 = vpop.f32.mrb[0].mxu0
  %v2765 = vadd.f32 0.0, %v2764
  %2766 = vdwg.mxu0
  %v2767 = vadd.f32 %v2621, %v2692
  %v2768 = vadd.f32 %v2622, %v2694
  %v2769 = vadd.f32 %v2623, %v2763
  %v2770 = vadd.f32 %v2624, %v2765
  %v2771 = vmul.f32 %v2767, 0.5
  %v2772 = vmul.f32 %v2768, 0.5
  %v2773 = vmul.f32 %v2769, 0.5
  %v2774 = vtanh.pop %v2771
  %v2775 = vtanh.pop %v2772
  %v2776 = vtanh.pop %v2773
  %v2777 = vmul.f32 %v2774, 0.5
  %v2778 = vmul.f32 %v2775, 0.5
  %v2779 = vmul.f32 %v2776, 0.5
  %v2780 = vadd.f32 %v2777, 0.5
  %v2781 = vadd.f32 %v2778, 0.5
  %v2782 = vadd.f32 %v2779, 0.5
  %v2783 = vtanh.pop %v2770
  %v2784 = vmul.f32 %v2781, %v2311
  %v2785 = vmul.f32 %v2780, %v2783
  %v2786 = vadd.f32 %v2784, %v2785
  %v2787 = vtanh.pop %v2786
  %v2788 = vmul.f32 %v2782, %v2787
  %2789 = vmatprep.subr.mxu0 %v330
  %2790 = vmatpush1.msra.mxu0 %v329
  %2791 = vmatprep.subr.mxu0 %v334
  %2792 = vmatpush1.msra.mxu0 %v333
  %2793 = vmatprep.subr.mxu0 %v338
  %2794 = vmatpush1.msra.mxu0 %v337
  %2795 = vmatprep.subr.mxu0 %v342
  %2796 = vmatpush1.msra.mxu0 %v341
  %2797 = vmatprep.subr.mxu0 %v346
  %2798 = vmatpush1.msra.mxu0 %v345
  %2799 = vmatprep.subr.mxu0 %v350
  %2800 = vmatpush1.msra.mxu0 %v349
  %2801 = vmatprep.subr.mxu0 %v354
  %2802 = vmatpush1.msra.mxu0 %v353
  %2803 = vmatprep.subr.mxu0 %v358
  %2804 = vmatpush1.msra.mxu0 %v357
  %2805 = vmatprep.subr.mxu0 %v362
  %2806 = vmatpush1.msra.mxu0 %v361
  %2807 = vmatprep.subr.mxu0 %v366
  %2808 = vmatpush1.msra.mxu0 %v365
  %2809 = vmatprep.subr.mxu0 %v370
  %2810 = vmatpush1.msra.mxu0 %v369
  %2811 = vmatprep.subr.mxu0 %v374
  %2812 = vmatpush1.msra.mxu0 %v373
  %2813 = vmatprep.subr.mxu0 %v378
  %2814 = vmatpush1.msra.mxu0 %v377
  %2815 = vmatprep.subr.mxu0 %v382
  %2816 = vmatpush1.msra.mxu0 %v381
  %2817 = vmatprep.subr.mxu0 %v386
  %2818 = vmatpush1.msra.mxu0 %v385
  %2819 = vmatprep.subr.mxu0 %v390
  %2820 = vmatpush1.msra.mxu0 %v389
  %2821 = vmatprep.subr.mxu0 0.0
  %2822 = vmatpush1.msra.mxu0 0.0
  %2823 = vmatprep.subr.mxu0 0.0
  %2824 = vmatpush1.msra.mxu0 0.0
  %2825 = vmatprep.subr.mxu0 0.0
  %2826 = vmatpush1.msra.mxu0 0.0
  %2827 = vmatprep.subr.mxu0 0.0
  %2828 = vmatpush1.msra.mxu0 0.0
  %2829 = vmatprep.subr.mxu0 0.0
  %2830 = vmatpush1.msra.mxu0 0.0
  %2831 = vmatprep.subr.mxu0 0.0
  %2832 = vmatpush1.msra.mxu0 0.0
  %2833 = vmatprep.subr.mxu0 0.0
  %2834 = vmatpush1.msra.mxu0 0.0
  %2835 = vmatprep.subr.mxu0 0.0
  %2836 = vmatpush1.msra.mxu0 0.0
  %2837 = vmatprep.subr.mxu0 0.0
  %2838 = vmatpush1.msra.mxu0 0.0
  %2839 = vmatprep.subr.mxu0 0.0
  %2840 = vmatpush1.msra.mxu0 0.0
  %2841 = vmatprep.subr.mxu0 0.0
  %2842 = vmatpush1.msra.mxu0 0.0
  %2843 = vmatprep.subr.mxu0 0.0
  %2844 = vmatpush1.msra.mxu0 0.0
  %2845 = vmatprep.subr.mxu0 0.0
  %2846 = vmatpush1.msra.mxu0 0.0
  %2847 = vmatprep.subr.mxu0 0.0
  %2848 = vmatpush1.msra.mxu0 0.0
  %2849 = vmatprep.subr.mxu0 0.0
  %2850 = vmatpush1.msra.mxu0 0.0
  %2851 = vmatprep.subr.mxu0 0.0
  %2852 = vmatpush1.msra.mxu0 0.0
  %2853 = vmatprep.mubr.f32.mxu0 0.0
  %2854 = vmatmul.mubr.f32.gmra.mrb[0].mxu0 %v2619
  %v2855 = vpop.f32.mrb[0].mxu0
  %v2856 = vadd.f32 0.0, %v2855
  %v2857 = vpop.f32.mrb[0].mxu0
  %v2858 = vadd.f32 0.0, %v2857
  %2859 = vdwg.mxu0
  %2860 = vmatprep.subr.mxu0 %v332
  %2861 = vmatpush1.msra.mxu0 %v331
  %2862 = vmatprep.subr.mxu0 %v336
  %2863 = vmatpush1.msra.mxu0 %v335
  %2864 = vmatprep.subr.mxu0 %v340
  %2865 = vmatpush1.msra.mxu0 %v339
  %2866 = vmatprep.subr.mxu0 %v344
  %2867 = vmatpush1.msra.mxu0 %v343
  %2868 = vmatprep.subr.mxu0 %v348
  %2869 = vmatpush1.msra.mxu0 %v347
  %2870 = vmatprep.subr.mxu0 %v352
  %2871 = vmatpush1.msra.mxu0 %v351
  %2872 = vmatprep.subr.mxu0 %v356
  %2873 = vmatpush1.msra.mxu0 %v355
  %2874 = vmatprep.subr.mxu0 %v360
  %2875 = vmatpush1.msra.mxu0 %v359
  %2876 = vmatprep.subr.mxu0 %v364
  %2877 = vmatpush1.msra.mxu0 %v363
  %2878 = vmatprep.subr.mxu0 %v368
  %2879 = vmatpush1.msra.mxu0 %v367
  %2880 = vmatprep.subr.mxu0 %v372
  %2881 = vmatpush1.msra.mxu0 %v371
  %2882 = vmatprep.subr.mxu0 %v376
  %2883 = vmatpush1.msra.mxu0 %v375
  %2884 = vmatprep.subr.mxu0 %v380
  %2885 = vmatpush1.msra.mxu0 %v379
  %2886 = vmatprep.subr.mxu0 %v384
  %2887 = vmatpush1.msra.mxu0 %v383
  %2888 = vmatprep.subr.mxu0 %v388
  %2889 = vmatpush1.msra.mxu0 %v387
  %2890 = vmatprep.subr.mxu0 %v392
  %2891 = vmatpush1.msra.mxu0 %v391
  %2892 = vmatprep.subr.mxu0 0.0
  %2893 = vmatpush1.msra.mxu0 0.0
  %2894 = vmatprep.subr.mxu0 0.0
  %2895 = vmatpush1.msra.mxu0 0.0
  %2896 = vmatprep.subr.mxu0 0.0
  %2897 = vmatpush1.msra.mxu0 0.0
  %2898 = vmatprep.subr.mxu0 0.0
  %2899 = vmatpush1.msra.mxu0 0.0
  %2900 = vmatprep.subr.mxu0 0.0
  %2901 = vmatpush1.msra.mxu0 0.0
  %2902 = vmatprep.subr.mxu0 0.0
  %2903 = vmatpush1.msra.mxu0 0.0
  %2904 = vmatprep.subr.mxu0 0.0
  %2905 = vmatpush1.msra.mxu0 0.0
  %2906 = vmatprep.subr.mxu0 0.0
  %2907 = vmatpush1.msra.mxu0 0.0
  %2908 = vmatprep.subr.mxu0 0.0
  %2909 = vmatpush1.msra.mxu0 0.0
  %2910 = vmatprep.subr.mxu0 0.0
  %2911 = vmatpush1.msra.mxu0 0.0
  %2912 = vmatprep.subr.mxu0 0.0
  %2913 = vmatpush1.msra.mxu0 0.0
  %2914 = vmatprep.subr.mxu0 0.0
  %2915 = vmatpush1.msra.mxu0 0.0
  %2916 = vmatprep.subr.mxu0 0.0
  %2917 = vmatpush1.msra.mxu0 0.0
  %2918 = vmatprep.subr.mxu0 0.0
  %2919 = vmatpush1.msra.mxu0 0.0
  %2920 = vmatprep.subr.mxu0 0.0
  %2921 = vmatpush1.msra.mxu0 0.0
  %2922 = vmatprep.subr.mxu0 0.0
  %2923 = vmatpush1.msra.mxu0 0.0
  %2924 = vmatprep.mubr.f32.mxu0 0.0
  %2925 = vmatmul.mubr.f32.gmra.mrb[0].mxu0 %v2619
  %v2926 = vpop.f32.mrb[0].mxu0
  %v2927 = vadd.f32 0.0, %v2926
  %v2928 = vpop.f32.mrb[0].mxu0
  %v2929 = vadd.f32 0.0, %v2928
  %2930 = vdwg.mxu0
  %2931 = vmatprep.subr.mxu0 %v266
  %2932 = vmatpush1.msra.mxu0 %v265
  %2933 = vmatprep.subr.mxu0 %v270
  %2934 = vmatpush1.msra.mxu0 %v269
  %2935 = vmatprep.subr.mxu0 %v274
  %2936 = vmatpush1.msra.mxu0 %v273
  %2937 = vmatprep.subr.mxu0 %v278
  %2938 = vmatpush1.msra.mxu0 %v277
  %2939 = vmatprep.subr.mxu0 %v282
  %2940 = vmatpush1.msra.mxu0 %v281
  %2941 = vmatprep.subr.mxu0 %v286
  %2942 = vmatpush1.msra.mxu0 %v285
  %2943 = vmatprep.subr.mxu0 %v290
  %2944 = vmatpush1.msra.mxu0 %v289
  %2945 = vmatprep.subr.mxu0 %v294
  %2946 = vmatpush1.msra.mxu0 %v293
  %2947 = vmatprep.subr.mxu0 %v298
  %2948 = vmatpush1.msra.mxu0 %v297
  %2949 = vmatprep.subr.mxu0 %v302
  %2950 = vmatpush1.msra.mxu0 %v301
  %2951 = vmatprep.subr.mxu0 %v306
  %2952 = vmatpush1.msra.mxu0 %v305
  %2953 = vmatprep.subr.mxu0 %v310
  %2954 = vmatpush1.msra.mxu0 %v309
  %2955 = vmatprep.subr.mxu0 %v314
  %2956 = vmatpush1.msra.mxu0 %v313
  %2957 = vmatprep.subr.mxu0 %v318
  %2958 = vmatpush1.msra.mxu0 %v317
  %2959 = vmatprep.subr.mxu0 %v322
  %2960 = vmatpush1.msra.mxu0 %v321
  %2961 = vmatprep.subr.mxu0 %v326
  %2962 = vmatpush1.msra.mxu0 %v325
  %2963 = vmatprep.subr.mxu0 0.0
  %2964 = vmatpush1.msra.mxu0 0.0
  %2965 = vmatprep.subr.mxu0 0.0
  %2966 = vmatpush1.msra.mxu0 0.0
  %2967 = vmatprep.subr.mxu0 0.0
  %2968 = vmatpush1.msra.mxu0 0.0
  %2969 = vmatprep.subr.mxu0 0.0
  %2970 = vmatpush1.msra.mxu0 0.0
  %2971 = vmatprep.subr.mxu0 0.0
  %2972 = vmatpush1.msra.mxu0 0.0
  %2973 = vmatprep.subr.mxu0 0.0
  %2974 = vmatpush1.msra.mxu0 0.0
  %2975 = vmatprep.subr.mxu0 0.0
  %2976 = vmatpush1.msra.mxu0 0.0
  %2977 = vmatprep.subr.mxu0 0.0
  %2978 = vmatpush1.msra.mxu0 0.0
  %2979 = vmatprep.subr.mxu0 0.0
  %2980 = vmatpush1.msra.mxu0 0.0
  %2981 = vmatprep.subr.mxu0 0.0
  %2982 = vmatpush1.msra.mxu0 0.0
  %2983 = vmatprep.subr.mxu0 0.0
  %2984 = vmatpush1.msra.mxu0 0.0
  %2985 = vmatprep.subr.mxu0 0.0
  %2986 = vmatpush1.msra.mxu0 0.0
  %2987 = vmatprep.subr.mxu0 0.0
  %2988 = vmatpush1.msra.mxu0 0.0
  %2989 = vmatprep.subr.mxu0 0.0
  %2990 = vmatpush1.msra.mxu0 0.0
  %2991 = vmatprep.subr.mxu0 0.0
  %2992 = vmatpush1.msra.mxu0 0.0
  %2993 = vmatprep.subr.mxu0 0.0
  %2994 = vmatpush1.msra.mxu0 0.0
  %2995 = vmatprep.mubr.f32.mxu0 0.0
  %2996 = vmatmul.mubr.f32.gmra.mrb[0].mxu0 %v2788
  %v2997 = vpop.f32.mrb[0].mxu0
  %v2998 = vadd.f32 %v2856, %v2997
  %v2999 = vpop.f32.mrb[0].mxu0
  %v3000 = vadd.f32 %v2858, %v2999
  %3001 = vdwg.mxu0
  %3002 = vmatprep.subr.mxu0 %v268
  %3003 = vmatpush1.msra.mxu0 %v267
  %3004 = vmatprep.subr.mxu0 %v272
  %3005 = vmatpush1.msra.mxu0 %v271
  %3006 = vmatprep.subr.mxu0 %v276
  %3007 = vmatpush1.msra.mxu0 %v275
  %3008 = vmatprep.subr.mxu0 %v280
  %3009 = vmatpush1.msra.mxu0 %v279
  %3010 = vmatprep.subr.mxu0 %v284
  %3011 = vmatpush1.msra.mxu0 %v283
  %3012 = vmatprep.subr.mxu0 %v288
  %3013 = vmatpush1.msra.mxu0 %v287
  %3014 = vmatprep.subr.mxu0 %v292
  %3015 = vmatpush1.msra.mxu0 %v291
  %3016 = vmatprep.subr.mxu0 %v296
  %3017 = vmatpush1.msra.mxu0 %v295
  %3018 = vmatprep.subr.mxu0 %v300
  %3019 = vmatpush1.msra.mxu0 %v299
  %3020 = vmatprep.subr.mxu0 %v304
  %3021 = vmatpush1.msra.mxu0 %v303
  %3022 = vmatprep.subr.mxu0 %v308
  %3023 = vmatpush1.msra.mxu0 %v307
  %3024 = vmatprep.subr.mxu0 %v312
  %3025 = vmatpush1.msra.mxu0 %v311
  %3026 = vmatprep.subr.mxu0 %v316
  %3027 = vmatpush1.msra.mxu0 %v315
  %3028 = vmatprep.subr.mxu0 %v320
  %3029 = vmatpush1.msra.mxu0 %v319
  %3030 = vmatprep.subr.mxu0 %v324
  %3031 = vmatpush1.msra.mxu0 %v323
  %3032 = vmatprep.subr.mxu0 %v328
  %3033 = vmatpush1.msra.mxu0 %v327
  %3034 = vmatprep.subr.mxu0 0.0
  %3035 = vmatpush1.msra.mxu0 0.0
  %3036 = vmatprep.subr.mxu0 0.0
  %3037 = vmatpush1.msra.mxu0 0.0
  %3038 = vmatprep.subr.mxu0 0.0
  %3039 = vmatpush1.msra.mxu0 0.0
  %3040 = vmatprep.subr.mxu0 0.0
  %3041 = vmatpush1.msra.mxu0 0.0
  %3042 = vmatprep.subr.mxu0 0.0
  %3043 = vmatpush1.msra.mxu0 0.0
  %3044 = vmatprep.subr.mxu0 0.0
  %3045 = vmatpush1.msra.mxu0 0.0
  %3046 = vmatprep.subr.mxu0 0.0
  %3047 = vmatpush1.msra.mxu0 0.0
  %3048 = vmatprep.subr.mxu0 0.0
  %3049 = vmatpush1.msra.mxu0 0.0
  %3050 = vmatprep.subr.mxu0 0.0
  %3051 = vmatpush1.msra.mxu0 0.0
  %3052 = vmatprep.subr.mxu0 0.0
  %3053 = vmatpush1.msra.mxu0 0.0
  %3054 = vmatprep.subr.mxu0 0.0
  %3055 = vmatpush1.msra.mxu0 0.0
  %3056 = vmatprep.subr.mxu0 0.0
  %3057 = vmatpush1.msra.mxu0 0.0
  %3058 = vmatprep.subr.mxu0 0.0
  %3059 = vmatpush1.msra.mxu0 0.0
  %3060 = vmatprep.subr.mxu0 0.0
  %3061 = vmatpush1.msra.mxu0 0.0
  %3062 = vmatprep.subr.mxu0 0.0
  %3063 = vmatpush1.msra.mxu0 0.0
  %3064 = vmatprep.subr.mxu0 0.0
  %3065 = vmatpush1.msra.mxu0 0.0
  %3066 = vmatprep.mubr.f32.mxu0 0.0
  %3067 = vmatmul.mubr.f32.gmra.mrb[0].mxu0 %v2788
  %v3068 = vpop.f32.mrb[0].mxu0
  %v3069 = vadd.f32 %v2927, %v3068
  %v3070 = vpop.f32.mrb[0].mxu0
  %v3071 = vadd.f32 %v2929, %v3070
  %3072 = vdwg.mxu0
  %v3073 = vadd.f32 %v2998, %v681
  %v3074 = vadd.f32 %v3000, %v685
  %v3075 = vadd.f32 %v3069, %v689
  %v3076 = vadd.f32 %v3071, %v693
  %v3077 = vmul.f32 %v3073, 0.5
  %v3078 = vmul.f32 %v3074, 0.5
  %v3079 = vmul.f32 %v3075, 0.5
  %v3080 = vtanh.pop %v3077
  %v3081 = vtanh.pop %v3078
  %v3082 = vtanh.pop %v3079
  %v3083 = vmul.f32 %v3080, 0.5
  %v3084 = vmul.f32 %v3081, 0.5
  %v3085 = vmul.f32 %v3082, 0.5
  %v3086 = vadd.f32 %v3083, 0.5
  %v3087 = vadd.f32 %v3084, 0.5
  %v3088 = vadd.f32 %v3085, 0.5
  %v3089 = vtanh.pop %v3076
  %v3090 = vmul.f32 %v3087, %v2617
  %v3091 = vmul.f32 %v3086, %v3089
  %v3092 = vadd.f32 %v3090, %v3091
  %v3093 = vtanh.pop %v3092
  %v3094 = vmul.f32 %v3088, %v3093
  %s3095 = scalar_lea.vmem %s0, 192
  %v3096 = vld [vmem:[%s3095] sm:$0xff]
  %v3097 = vld [vmem:[%s3095 + $0x8] sm:$0xff]
  %v3098 = vld [vmem:[%s3095 + $0x10] sm:$0xff]
  %v3099 = vld [vmem:[%s3095 + $0x18] sm:$0xff]
  %3100 = vmatprep.subr.mxu0 %v38
  %3101 = vmatpush1.msra.mxu0 %v37
  %3102 = vmatprep.subr.mxu0 %v42
  %3103 = vmatpush1.msra.mxu0 %v41
  %3104 = vmatprep.subr.mxu0 %v46
  %3105 = vmatpush1.msra.mxu0 %v45
  %3106 = vmatprep.subr.mxu0 %v50
  %3107 = vmatpush1.msra.mxu0 %v49
  %3108 = vmatprep.subr.mxu0 %v54
  %3109 = vmatpush1.msra.mxu0 %v53
  %3110 = vmatprep.subr.mxu0 %v58
  %3111 = vmatpush1.msra.mxu0 %v57
  %3112 = vmatprep.subr.mxu0 %v62
  %3113 = vmatpush1.msra.mxu0 %v61
  %3114 = vmatprep.subr.mxu0 %v66
  %3115 = vmatpush1.msra.mxu0 %v65
  %3116 = vmatprep.subr.mxu0 %v70
  %3117 = vmatpush1.msra.mxu0 %v69
  %3118 = vmatprep.subr.mxu0 %v74
  %3119 = vmatpush1.msra.mxu0 %v73
  %3120 = vmatprep.subr.mxu0 %v78
  %3121 = vmatpush1.msra.mxu0 %v77
  %3122 = vmatprep.subr.mxu0 %v82
  %3123 = vmatpush1.msra.mxu0 %v81
  %3124 = vmatprep.subr.mxu0 %v86
  %3125 = vmatpush1.msra.mxu0 %v85
  %3126 = vmatprep.subr.mxu0 %v90
  %3127 = vmatpush1.msra.mxu0 %v89
  %3128 = vmatprep.subr.mxu0 %v94
  %3129 = vmatpush1.msra.mxu0 %v93
  %3130 = vmatprep.subr.mxu0 %v98
  %3131 = vmatpush1.msra.mxu0 %v97
  %3132 = vmatprep.subr.mxu0 0.0
  %3133 = vmatpush1.msra.mxu0 0.0
  %3134 = vmatprep.subr.mxu0 0.0
  %3135 = vmatpush1.msra.mxu0 0.0
  %3136 = vmatprep.subr.mxu0 0.0
  %3137 = vmatpush1.msra.mxu0 0.0
  %3138 = vmatprep.subr.mxu0 0.0
  %3139 = vmatpush1.msra.mxu0 0.0
  %3140 = vmatprep.subr.mxu0 0.0
  %3141 = vmatpush1.msra.mxu0 0.0
  %3142 = vmatprep.subr.mxu0 0.0
  %3143 = vmatpush1.msra.mxu0 0.0
  %3144 = vmatprep.subr.mxu0 0.0
  %3145 = vmatpush1.msra.mxu0 0.0
  %3146 = vmatprep.subr.mxu0 0.0
  %3147 = vmatpush1.msra.mxu0 0.0
  %3148 = vmatprep.subr.mxu0 0.0
  %3149 = vmatpush1.msra.mxu0 0.0
  %3150 = vmatprep.subr.mxu0 0.0
  %3151 = vmatpush1.msra.mxu0 0.0
  %3152 = vmatprep.subr.mxu0 0.0
  %3153 = vmatpush1.msra.mxu0 0.0
  %3154 = vmatprep.subr.mxu0 0.0
  %3155 = vmatpush1.msra.mxu0 0.0
  %3156 = vmatprep.subr.mxu0 0.0
  %3157 = vmatpush1.msra.mxu0 0.0
  %3158 = vmatprep.subr.mxu0 0.0
  %3159 = vmatpush1.msra.mxu0 0.0
  %3160 = vmatprep.subr.mxu0 0.0
  %3161 = vmatpush1.msra.mxu0 0.0
  %3162 = vmatprep.subr.mxu0 0.0
  %3163 = vmatpush1.msra.mxu0 0.0
  %3164 = vmatprep.mubr.f32.mxu0 0.0
  %3165 = vmatmul.mubr.f32.gmra.mrb[0].mxu0 %v2788
  %v3166 = vpop.f32.mrb[0].mxu0
  %v3167 = vadd.f32 0.0, %v3166
  %v3168 = vpop.f32.mrb[0].mxu0
  %v3169 = vadd.f32 0.0, %v3168
  %3170 = vdwg.mxu0
  %3171 = vmatprep.subr.mxu0 %v40
  %3172 = vmatpush1.msra.mxu0 %v39
  %3173 = vmatprep.subr.mxu0 %v44
  %3174 = vmatpush1.msra.mxu0 %v43
  %3175 = vmatprep.subr.mxu0 %v48
  %3176 = vmatpush1.msra.mxu0 %v47
  %3177 = vmatprep.subr.mxu0 %v52
  %3178 = vmatpush1.msra.mxu0 %v51
  %3179 = vmatprep.subr.mxu0 %v56
  %3180 = vmatpush1.msra.mxu0 %v55
  %3181 = vmatprep.subr.mxu0 %v60
  %3182 = vmatpush1.msra.mxu0 %v59
  %3183 = vmatprep.subr.mxu0 %v64
  %3184 = vmatpush1.msra.mxu0 %v63
  %3185 = vmatprep.subr.mxu0 %v68
  %3186 = vmatpush1.msra.mxu0 %v67
  %3187 = vmatprep.subr.mxu0 %v72
  %3188 = vmatpush1.msra.mxu0 %v71
  %3189 = vmatprep.subr.mxu0 %v76
  %3190 = vmatpush1.msra.mxu0 %v75
  %3191 = vmatprep.subr.mxu0 %v80
  %3192 = vmatpush1.msra.mxu0 %v79
  %3193 = vmatprep.subr.mxu0 %v84
  %3194 = vmatpush1.msra.mxu0 %v83
  %3195 = vmatprep.subr.mxu0 %v88
  %3196 = vmatpush1.msra.mxu0 %v87
  %3197 = vmatprep.subr.mxu0 %v92
  %3198 = vmatpush1.msra.mxu0 %v91
  %3199 = vmatprep.subr.mxu0 %v96
  %3200 = vmatpush1.msra.mxu0 %v95
  %3201 = vmatprep.subr.mxu0 %v100
  %3202 = vmatpush1.msra.mxu0 %v99
  %3203 = vmatprep.subr.mxu0 0.0
  %3204 = vmatpush1.msra.mxu0 0.0
  %3205 = vmatprep.subr.mxu0 0.0
  %3206 = vmatpush1.msra.mxu0 0.0
  %3207 = vmatprep.subr.mxu0 0.0
  %3208 = vmatpush1.msra.mxu0 0.0
  %3209 = vmatprep.subr.mxu0 0.0
  %3210 = vmatpush1.msra.mxu0 0.0
  %3211 = vmatprep.subr.mxu0 0.0
  %3212 = vmatpush1.msra.mxu0 0.0
  %3213 = vmatprep.subr.mxu0 0.0
  %3214 = vmatpush1.msra.mxu0 0.0
  %3215 = vmatprep.subr.mxu0 0.0
  %3216 = vmatpush1.msra.mxu0 0.0
  %3217 = vmatprep.subr.mxu0 0.0
  %3218 = vmatpush1.msra.mxu0 0.0
  %3219 = vmatprep.subr.mxu0 0.0
  %3220 = vmatpush1.msra.mxu0 0.0
  %3221 = vmatprep.subr.mxu0 0.0
  %3222 = vmatpush1.msra.mxu0 0.0
  %3223 = vmatprep.subr.mxu0 0.0
  %3224 = vmatpush1.msra.mxu0 0.0
  %3225 = vmatprep.subr.mxu0 0.0
  %3226 = vmatpush1.msra.mxu0 0.0
  %3227 = vmatprep.subr.mxu0 0.0
  %3228 = vmatpush1.msra.mxu0 0.0
  %3229 = vmatprep.subr.mxu0 0.0
  %3230 = vmatpush1.msra.mxu0 0.0
  %3231 = vmatprep.subr.mxu0 0.0
  %3232 = vmatpush1.msra.mxu0 0.0
  %3233 = vmatprep.subr.mxu0 0.0
  %3234 = vmatpush1.msra.mxu0 0.0
  %3235 = vmatprep.mubr.f32.mxu0 0.0
  %3236 = vmatmul.mubr.f32.gmra.mrb[0].mxu0 %v2788
  %v3237 = vpop.f32.mrb[0].mxu0
  %v3238 = vadd.f32 0.0, %v3237
  %v3239 = vpop.f32.mrb[0].mxu0
  %v3240 = vadd.f32 0.0, %v3239
  %3241 = vdwg.mxu0
  %v3242 = vadd.f32 %v3096, %v3167
  %v3243 = vadd.f32 %v3097, %v3169
  %v3244 = vadd.f32 %v3098, %v3238
  %v3245 = vadd.f32 %v3099, %v3240
  %v3246 = vmul.f32 %v3242, 0.5
  %v3247 = vmul.f32 %v3243, 0.5
  %v3248 = vmul.f32 %v3244, 0.5
  %v3249 = vtanh.pop %v3246
  %v3250 = vtanh.pop %v3247
  %v3251 = vtanh.pop %v3248
  %v3252 = vmul.f32 %v3249, 0.5
  %v3253 = vmul.f32 %v3250, 0.5
  %v3254 = vmul.f32 %v3251, 0.5
  %v3255 = vadd.f32 %v3252, 0.5
  %v3256 = vadd.f32 %v3253, 0.5
  %v3257 = vadd.f32 %v3254, 0.5
  %v3258 = vtanh.pop %v3245
  %v3259 = vmul.f32 %v3256, %v2786
  %v3260 = vmul.f32 %v3255, %v3258
  %v3261 = vadd.f32 %v3259, %v3260
  %v3262 = vtanh.pop %v3261
  %v3263 = vmul.f32 %v3257, %v3262
  %3264 = vmatprep.subr.mxu0 %v330
  %3265 = vmatpush1.msra.mxu0 %v329
  %3266 = vmatprep.subr.mxu0 %v334
  %3267 = vmatpush1.msra.mxu0 %v333
  %3268 = vmatprep.subr.mxu0 %v338
  %3269 = vmatpush1.msra.mxu0 %v337
  %3270 = vmatprep.subr.mxu0 %v342
  %3271 = vmatpush1.msra.mxu0 %v341
  %3272 = vmatprep.subr.mxu0 %v346
  %3273 = vmatpush1.msra.mxu0 %v345
  %3274 = vmatprep.subr.mxu0 %v350
  %3275 = vmatpush1.msra.mxu0 %v349
  %3276 = vmatprep.subr.mxu0 %v354
  %3277 = vmatpush1.msra.mxu0 %v353
  %3278 = vmatprep.subr.mxu0 %v358
  %3279 = vmatpush1.msra.mxu0 %v357
  %3280 = vmatprep.subr.mxu0 %v362
  %3281 = vmatpush1.msra.mxu0 %v361
  %3282 = vmatprep.subr.mxu0 %v366
  %3283 = vmatpush1.msra.mxu0 %v365
  %3284 = vmatprep.subr.mxu0 %v370
  %3285 = vmatpush1.msra.mxu0 %v369
  %3286 = vmatprep.subr.mxu0 %v374
  %3287 = vmatpush1.msra.mxu0 %v373
  %3288 = vmatprep.subr.mxu0 %v378
  %3289 = vmatpush1.msra.mxu0 %v377
  %3290 = vmatprep.subr.mxu0 %v382
  %3291 = vmatpush1.msra.mxu0 %v381
  %3292 = vmatprep.subr.mxu0 %v386
  %3293 = vmatpush1.msra.mxu0 %v385
  %3294 = vmatprep.subr.mxu0 %v390
  %3295 = vmatpush1.msra.mxu0 %v389
  %3296 = vmatprep.subr.mxu0 0.0
  %3297 = vmatpush1.msra.mxu0 0.0
  %3298 = vmatprep.subr.mxu0 0.0
  %3299 = vmatpush1.msra.mxu0 0.0
  %3300 = vmatprep.subr.mxu0 0.0
  %3301 = vmatpush1.msra.mxu0 0.0
  %3302 = vmatprep.subr.mxu0 0.0
  %3303 = vmatpush1.msra.mxu0 0.0
  %3304 = vmatprep.subr.mxu0 0.0
  %3305 = vmatpush1.msra.mxu0 0.0
  %3306 = vmatprep.subr.mxu0 0.0
  %3307 = vmatpush1.msra.mxu0 0.0
  %3308 = vmatprep.subr.mxu0 0.0
  %3309 = vmatpush1.msra.mxu0 0.0
  %3310 = vmatprep.subr.mxu0 0.0
  %3311 = vmatpush1.msra.mxu0 0.0
  %3312 = vmatprep.subr.mxu0 0.0
  %3313 = vmatpush1.msra.mxu0 0.0
  %3314 = vmatprep.subr.mxu0 0.0
  %3315 = vmatpush1.msra.mxu0 0.0
  %3316 = vmatprep.subr.mxu0 0.0
  %3317 = vmatpush1.msra.mxu0 0.0
  %3318 = vmatprep.subr.mxu0 0.0
  %3319 = vmatpush1.msra.mxu0 0.0
  %3320 = vmatprep.subr.mxu0 0.0
  %3321 = vmatpush1.msra.mxu0 0.0
  %3322 = vmatprep.subr.mxu0 0.0
  %3323 = vmatpush1.msra.mxu0 0.0
  %3324 = vmatprep.subr.mxu0 0.0
  %3325 = vmatpush1.msra.mxu0 0.0
  %3326 = vmatprep.subr.mxu0 0.0
  %3327 = vmatpush1.msra.mxu0 0.0
  %3328 = vmatprep.mubr.f32.mxu0 0.0
  %3329 = vmatmul.mubr.f32.gmra.mrb[0].mxu0 %v3094
  %v3330 = vpop.f32.mrb[0].mxu0
  %v3331 = vadd.f32 0.0, %v3330
  %v3332 = vpop.f32.mrb[0].mxu0
  %v3333 = vadd.f32 0.0, %v3332
  %3334 = vdwg.mxu0
  %3335 = vmatprep.subr.mxu0 %v332
  %3336 = vmatpush1.msra.mxu0 %v331
  %3337 = vmatprep.subr.mxu0 %v336
  %3338 = vmatpush1.msra.mxu0 %v335
  %3339 = vmatprep.subr.mxu0 %v340
  %3340 = vmatpush1.msra.mxu0 %v339
  %3341 = vmatprep.subr.mxu0 %v344
  %3342 = vmatpush1.msra.mxu0 %v343
  %3343 = vmatprep.subr.mxu0 %v348
  %3344 = vmatpush1.msra.mxu0 %v347
  %3345 = vmatprep.subr.mxu0 %v352
  %3346 = vmatpush1.msra.mxu0 %v351
  %3347 = vmatprep.subr.mxu0 %v356
  %3348 = vmatpush1.msra.mxu0 %v355
  %3349 = vmatprep.subr.mxu0 %v360
  %3350 = vmatpush1.msra.mxu0 %v359
  %3351 = vmatprep.subr.mxu0 %v364
  %3352 = vmatpush1.msra.mxu0 %v363
  %3353 = vmatprep.subr.mxu0 %v368
  %3354 = vmatpush1.msra.mxu0 %v367
  %3355 = vmatprep.subr.mxu0 %v372
  %3356 = vmatpush1.msra.mxu0 %v371
  %3357 = vmatprep.subr.mxu0 %v376
  %3358 = vmatpush1.msra.mxu0 %v375
  %3359 = vmatprep.subr.mxu0 %v380
  %3360 = vmatpush1.msra.mxu0 %v379
  %3361 = vmatprep.subr.mxu0 %v384
  %3362 = vmatpush1.msra.mxu0 %v383
  %3363 = vmatprep.subr.mxu0 %v388
  %3364 = vmatpush1.msra.mxu0 %v387
  %3365 = vmatprep.subr.mxu0 %v392
  %3366 = vmatpush1.msra.mxu0 %v391
  %3367 = vmatprep.subr.mxu0 0.0
  %3368 = vmatpush1.msra.mxu0 0.0
  %3369 = vmatprep.subr.mxu0 0.0
  %3370 = vmatpush1.msra.mxu0 0.0
  %3371 = vmatprep.subr.mxu0 0.0
  %3372 = vmatpush1.msra.mxu0 0.0
  %3373 = vmatprep.subr.mxu0 0.0
  %3374 = vmatpush1.msra.mxu0 0.0
  %3375 = vmatprep.subr.mxu0 0.0
  %3376 = vmatpush1.msra.mxu0 0.0
  %3377 = vmatprep.subr.mxu0 0.0
  %3378 = vmatpush1.msra.mxu0 0.0
  %3379 = vmatprep.subr.mxu0 0.0
  %3380 = vmatpush1.msra.mxu0 0.0
  %3381 = vmatprep.subr.mxu0 0.0
  %3382 = vmatpush1.msra.mxu0 0.0
  %3383 = vmatprep.subr.mxu0 0.0
  %3384 = vmatpush1.msra.mxu0 0.0
  %3385 = vmatprep.subr.mxu0 0.0
  %3386 = vmatpush1.msra.mxu0 0.0
  %3387 = vmatprep.subr.mxu0 0.0
  %3388 = vmatpush1.msra.mxu0 0.0
  %3389 = vmatprep.subr.mxu0 0.0
  %3390 = vmatpush1.msra.mxu0 0.0
  %3391 = vmatprep.subr.mxu0 0.0
  %3392 = vmatpush1.msra.mxu0 0.0
  %3393 = vmatprep.subr.mxu0 0.0
  %3394 = vmatpush1.msra.mxu0 0.0
  %3395 = vmatprep.subr.mxu0 0.0
  %3396 = vmatpush1.msra.mxu0 0.0
  %3397 = vmatprep.subr.mxu0 0.0
  %3398 = vmatpush1.msra.mxu0 0.0
  %3399 = vmatprep.mubr.f32.mxu0 0.0
  %3400 = vmatmul.mubr.f32.gmra.mrb[0].mxu0 %v3094
  %v3401 = vpop.f32.mrb[0].mxu0
  %v3402 = vadd.f32 0.0, %v3401
  %v3403 = vpop.f32.mrb[0].mxu0
  %v3404 = vadd.f32 0.0, %v3403
  %3405 = vdwg.mxu0
  %3406 = vmatprep.subr.mxu0 %v266
  %3407 = vmatpush1.msra.mxu0 %v265
  %3408 = vmatprep.subr.mxu0 %v270
  %3409 = vmatpush1.msra.mxu0 %v269
  %3410 = vmatprep.subr.mxu0 %v274
  %3411 = vmatpush1.msra.mxu0 %v273
  %3412 = vmatprep.subr.mxu0 %v278
  %3413 = vmatpush1.msra.mxu0 %v277
  %3414 = vmatprep.subr.mxu0 %v282
  %3415 = vmatpush1.msra.mxu0 %v281
  %3416 = vmatprep.subr.mxu0 %v286
  %3417 = vmatpush1.msra.mxu0 %v285
  %3418 = vmatprep.subr.mxu0 %v290
  %3419 = vmatpush1.msra.mxu0 %v289
  %3420 = vmatprep.subr.mxu0 %v294
  %3421 = vmatpush1.msra.mxu0 %v293
  %3422 = vmatprep.subr.mxu0 %v298
  %3423 = vmatpush1.msra.mxu0 %v297
  %3424 = vmatprep.subr.mxu0 %v302
  %3425 = vmatpush1.msra.mxu0 %v301
  %3426 = vmatprep.subr.mxu0 %v306
  %3427 = vmatpush1.msra.mxu0 %v305
  %3428 = vmatprep.subr.mxu0 %v310
  %3429 = vmatpush1.msra.mxu0 %v309
  %3430 = vmatprep.subr.mxu0 %v314
  %3431 = vmatpush1.msra.mxu0 %v313
  %3432 = vmatprep.subr.mxu0 %v318
  %3433 = vmatpush1.msra.mxu0 %v317
  %3434 = vmatprep.subr.mxu0 %v322
  %3435 = vmatpush1.msra.mxu0 %v321
  %3436 = vmatprep.subr.mxu0 %v326
  %3437 = vmatpush1.msra.mxu0 %v325
  %3438 = vmatprep.subr.mxu0 0.0
  %3439 = vmatpush1.msra.mxu0 0.0
  %3440 = vmatprep.subr.mxu0 0.0
  %3441 = vmatpush1.msra.mxu0 0.0
  %3442 = vmatprep.subr.mxu0 0.0
  %3443 = vmatpush1.msra.mxu0 0.0
  %3444 = vmatprep.subr.mxu0 0.0
  %3445 = vmatpush1.msra.mxu0 0.0
  %3446 = vmatprep.subr.mxu0 0.0
  %3447 = vmatpush1.msra.mxu0 0.0
  %3448 = vmatprep.subr.mxu0 0.0
  %3449 = vmatpush1.msra.mxu0 0.0
  %3450 = vmatprep.subr.mxu0 0.0
  %3451 = vmatpush1.msra.mxu0 0.0
  %3452 = vmatprep.subr.mxu0 0.0
  %3453 = vmatpush1.msra.mxu0 0.0
  %3454 = vmatprep.subr.mxu0 0.0
  %3455 = vmatpush1.msra.mxu0 0.0
  %3456 = vmatprep.subr.mxu0 0.0
  %3457 = vmatpush1.msra.mxu0 0.0
  %3458 = vmatprep.subr.mxu0 0.0
  %3459 = vmatpush1.msra.mxu0 0.0
  %3460 = vmatprep.subr.mxu0 0.0
  %3461 = vmatpush1.msra.mxu0 0.0
  %3462 = vmatprep.subr.mxu0 0.0
  %3463 = vmatpush1.msra.mxu0 0.0
  %3464 = vmatprep.subr.mxu0 0.0
  %3465 = vmatpush1.msra.mxu0 0.0
  %3466 = vmatprep.subr.mxu0 0.0
  %3467 = vmatpush1.msra.mxu0 0.0
  %3468 = vmatprep.subr.mxu0 0.0
  %3469 = vmatpush1.msra.mxu0 0.0
  %3470 = vmatprep.mubr.f32.mxu0 0.0
  %3471 = vmatmul.mubr.f32.gmra.mrb[0].mxu0 %v3263
  %v3472 = vpop.f32.mrb[0].mxu0
  %v3473 = vadd.f32 %v3331, %v3472
  %v3474 = vpop.f32.mrb[0].mxu0
  %v3475 = vadd.f32 %v3333, %v3474
  %3476 = vdwg.mxu0
  %3477 = vmatprep.subr.mxu0 %v268
  %3478 = vmatpush1.msra.mxu0 %v267
  %3479 = vmatprep.subr.mxu0 %v272
  %3480 = vmatpush1.msra.mxu0 %v271
  %3481 = vmatprep.subr.mxu0 %v276
  %3482 = vmatpush1.msra.mxu0 %v275
  %3483 = vmatprep.subr.mxu0 %v280
  %3484 = vmatpush1.msra.mxu0 %v279
  %3485 = vmatprep.subr.mxu0 %v284
  %3486 = vmatpush1.msra.mxu0 %v283
  %3487 = vmatprep.subr.mxu0 %v288
  %3488 = vmatpush1.msra.mxu0 %v287
  %3489 = vmatprep.subr.mxu0 %v292
  %3490 = vmatpush1.msra.mxu0 %v291
  %3491 = vmatprep.subr.mxu0 %v296
  %3492 = vmatpush1.msra.mxu0 %v295
  %3493 = vmatprep.subr.mxu0 %v300
  %3494 = vmatpush1.msra.mxu0 %v299
  %3495 = vmatprep.subr.mxu0 %v304
  %3496 = vmatpush1.msra.mxu0 %v303
  %3497 = vmatprep.subr.mxu0 %v308
  %3498 = vmatpush1.msra.mxu0 %v307
  %3499 = vmatprep.subr.mxu0 %v312
  %3500 = vmatpush1.msra.mxu0 %v311
  %3501 = vmatprep.subr.mxu0 %v316
  %3502 = vmatpush1.msra.mxu0 %v315
  %3503 = vmatprep.subr.mxu0 %v320
  %3504 = vmatpush1.msra.mxu0 %v319
  %3505 = vmatprep.subr.mxu0 %v324
  %3506 = vmatpush1.msra.mxu0 %v323
  %3507 = vmatprep.subr.mxu0 %v328
  %3508 = vmatpush1.msra.mxu0 %v327
  %3509 = vmatprep.subr.mxu0 0.0
  %3510 = vmatpush1.msra.mxu0 0.0
  %3511 = vmatprep.subr.mxu0 0.0
  %3512 = vmatpush1.msra.mxu0 0.0
  %3513 = vmatprep.subr.mxu0 0.0
  %3514 = vmatpush1.msra.mxu0 0.0
  %3515 = vmatprep.subr.mxu0 0.0
  %3516 = vmatpush1.msra.mxu0 0.0
  %3517 = vmatprep.subr.mxu0 0.0
  %3518 = vmatpush1.msra.mxu0 0.0
  %3519 = vmatprep.subr.mxu0 0.0
  %3520 = vmatpush1.msra.mxu0 0.0
  %3521 = vmatprep.subr.mxu0 0.0
  %3522 = vmatpush1.msra.mxu0 0.0
  %3523 = vmatprep.subr.mxu0 0.0
  %3524 = vmatpush1.msra.mxu0 0.0
  %3525 = vmatprep.subr.mxu0 0.0
  %3526 = vmatpush1.msra.mxu0 0.0
  %3527 = vmatprep.subr.mxu0 0.0
  %3528 = vmatpush1.msra.mxu0 0.0
  %3529 = vmatprep.subr.mxu0 0.0
  %3530 = vmatpush1.msra.mxu0 0.0
  %3531 = vmatprep.subr.mxu0 0.0
  %3532 = vmatpush1.msra.mxu0 0.0
  %3533 = vmatprep.subr.mxu0 0.0
  %3534 = vmatpush1.msra.mxu0 0.0
  %3535 = vmatprep.subr.mxu0 0.0
  %3536 = vmatpush1.msra.mxu0 0.0
  %3537 = vmatprep.subr.mxu0 0.0
  %3538 = vmatpush1.msra.mxu0 0.0
  %3539 = vmatprep.subr.mxu0 0.0
  %3540 = vmatpush1.msra.mxu0 0.0
  %3541 = vmatprep.mubr.f32.mxu0 0.0
  %3542 = vmatmul.mubr.f32.gmra.mrb[0].mxu0 %v3263
  %v3543 = vpop.f32.mrb[0].mxu0
  %v3544 = vadd.f32 %v3402, %v3543
  %v3545 = vpop.f32.mrb[0].mxu0
  %v3546 = vadd.f32 %v3404, %v3545
  %3547 = vdwg.mxu0
  %v3548 = vadd.f32 %v3473, %v681
  %v3549 = vadd.f32 %v3475, %v685
  %v3550 = vadd.f32 %v3544, %v689
  %v3551 = vadd.f32 %v3546, %v693
  %v3552 = vmul.f32 %v3548, 0.5
  %v3553 = vmul.f32 %v3549, 0.5
  %v3554 = vmul.f32 %v3550, 0.5
  %v3555 = vtanh.pop %v3552
  %v3556 = vtanh.pop %v3553
  %v3557 = vtanh.pop %v3554
  %v3558 = vmul.f32 %v3555, 0.5
  %v3559 = vmul.f32 %v3556, 0.5
  %v3560 = vmul.f32 %v3557, 0.5
  %v3561 = vadd.f32 %v3558, 0.5
  %v3562 = vadd.f32 %v3559, 0.5
  %v3563 = vadd.f32 %v3560, 0.5
  %v3564 = vtanh.pop %v3551
  %v3565 = vmul.f32 %v3562, %v3092
  %v3566 = vmul.f32 %v3561, %v3564
  %v3567 = vadd.f32 %v3565, %v3566
  %v3568 = vtanh.pop %v3567
  %v3569 = vmul.f32 %v3563, %v3568
  %s3570 = scalar_lea.vmem %s0, 224
  %v3571 = vld [vmem:[%s3570] sm:$0xff]
  %v3572 = vld [vmem:[%s3570 + $0x8] sm:$0xff]
  %v3573 = vld [vmem:[%s3570 + $0x10] sm:$0xff]
  %v3574 = vld [vmem:[%s3570 + $0x18] sm:$0xff]
  %3575 = vmatprep.subr.mxu0 %v38
  %3576 = vmatpush1.msra.mxu0 %v37
  %3577 = vmatprep.subr.mxu0 %v42
  %3578 = vmatpush1.msra.mxu0 %v41
  %3579 = vmatprep.subr.mxu0 %v46
  %3580 = vmatpush1.msra.mxu0 %v45
  %3581 = vmatprep.subr.mxu0 %v50
  %3582 = vmatpush1.msra.mxu0 %v49
  %3583 = vmatprep.subr.mxu0 %v54
  %3584 = vmatpush1.msra.mxu0 %v53
  %3585 = vmatprep.subr.mxu0 %v58
  %3586 = vmatpush1.msra.mxu0 %v57
  %3587 = vmatprep.subr.mxu0 %v62
  %3588 = vmatpush1.msra.mxu0 %v61
  %3589 = vmatprep.subr.mxu0 %v66
  %3590 = vmatpush1.msra.mxu0 %v65
  %3591 = vmatprep.subr.mxu0 %v70
  %3592 = vmatpush1.msra.mxu0 %v69
  %3593 = vmatprep.subr.mxu0 %v74
  %3594 = vmatpush1.msra.mxu0 %v73
  %3595 = vmatprep.subr.mxu0 %v78
  %3596 = vmatpush1.msra.mxu0 %v77
  %3597 = vmatprep.subr.mxu0 %v82
  %3598 = vmatpush1.msra.mxu0 %v81
  %3599 = vmatprep.subr.mxu0 %v86
  %3600 = vmatpush1.msra.mxu0 %v85
  %3601 = vmatprep.subr.mxu0 %v90
  %3602 = vmatpush1.msra.mxu0 %v89
  %3603 = vmatprep.subr.mxu0 %v94
  %3604 = vmatpush1.msra.mxu0 %v93
  %3605 = vmatprep.subr.mxu0 %v98
  %3606 = vmatpush1.msra.mxu0 %v97
  %3607 = vmatprep.subr.mxu0 0.0
  %3608 = vmatpush1.msra.mxu0 0.0
  %3609 = vmatprep.subr.mxu0 0.0
  %3610 = vmatpush1.msra.mxu0 0.0
  %3611 = vmatprep.subr.mxu0 0.0
  %3612 = vmatpush1.msra.mxu0 0.0
  %3613 = vmatprep.subr.mxu0 0.0
  %3614 = vmatpush1.msra.mxu0 0.0
  %3615 = vmatprep.subr.mxu0 0.0
  %3616 = vmatpush1.msra.mxu0 0.0
  %3617 = vmatprep.subr.mxu0 0.0
  %3618 = vmatpush1.msra.mxu0 0.0
  %3619 = vmatprep.subr.mxu0 0.0
  %3620 = vmatpush1.msra.mxu0 0.0
  %3621 = vmatprep.subr.mxu0 0.0
  %3622 = vmatpush1.msra.mxu0 0.0
  %3623 = vmatprep.subr.mxu0 0.0
  %3624 = vmatpush1.msra.mxu0 0.0
  %3625 = vmatprep.subr.mxu0 0.0
  %3626 = vmatpush1.msra.mxu0 0.0
  %3627 = vmatprep.subr.mxu0 0.0
  %3628 = vmatpush1.msra.mxu0 0.0
  %3629 = vmatprep.subr.mxu0 0.0
  %3630 = vmatpush1.msra.mxu0 0.0
  %3631 = vmatprep.subr.mxu0 0.0
  %3632 = vmatpush1.msra.mxu0 0.0
  %3633 = vmatprep.subr.mxu0 0.0
  %3634 = vmatpush1.msra.mxu0 0.0
  %3635 = vmatprep.subr.mxu0 0.0
  %3636 = vmatpush1.msra.mxu0 0.0
  %3637 = vmatprep.subr.mxu0 0.0
  %3638 = vmatpush1.msra.mxu0 0.0
  %3639 = vmatprep.mubr.f32.mxu0 0.0
  %3640 = vmatmul.mubr.f32.gmra.mrb[0].mxu0 %v3263
  %v3641 = vpop.f32.mrb[0].mxu0
  %v3642 = vadd.f32 0.0, %v3641
  %v3643 = vpop.f32.mrb[0].mxu0
  %v3644 = vadd.f32 0.0, %v3643
  %3645 = vdwg.mxu0
  %3646 = vmatprep.subr.mxu0 %v40
  %3647 = vmatpush1.msra.mxu0 %v39
  %3648 = vmatprep.subr.mxu0 %v44
  %3649 = vmatpush1.msra.mxu0 %v43
  %3650 = vmatprep.subr.mxu0 %v48
  %3651 = vmatpush1.msra.mxu0 %v47
  %3652 = vmatprep.subr.mxu0 %v52
  %3653 = vmatpush1.msra.mxu0 %v51
  %3654 = vmatprep.subr.mxu0 %v56
  %3655 = vmatpush1.msra.mxu0 %v55
  %3656 = vmatprep.subr.mxu0 %v60
  %3657 = vmatpush1.msra.mxu0 %v59
  %3658 = vmatprep.subr.mxu0 %v64
  %3659 = vmatpush1.msra.mxu0 %v63
  %3660 = vmatprep.subr.mxu0 %v68
  %3661 = vmatpush1.msra.mxu0 %v67
  %3662 = vmatprep.subr.mxu0 %v72
  %3663 = vmatpush1.msra.mxu0 %v71
  %3664 = vmatprep.subr.mxu0 %v76
  %3665 = vmatpush1.msra.mxu0 %v75
  %3666 = vmatprep.subr.mxu0 %v80
  %3667 = vmatpush1.msra.mxu0 %v79
  %3668 = vmatprep.subr.mxu0 %v84
  %3669 = vmatpush1.msra.mxu0 %v83
  %3670 = vmatprep.subr.mxu0 %v88
  %3671 = vmatpush1.msra.mxu0 %v87
  %3672 = vmatprep.subr.mxu0 %v92
  %3673 = vmatpush1.msra.mxu0 %v91
  %3674 = vmatprep.subr.mxu0 %v96
  %3675 = vmatpush1.msra.mxu0 %v95
  %3676 = vmatprep.subr.mxu0 %v100
  %3677 = vmatpush1.msra.mxu0 %v99
  %3678 = vmatprep.subr.mxu0 0.0
  %3679 = vmatpush1.msra.mxu0 0.0
  %3680 = vmatprep.subr.mxu0 0.0
  %3681 = vmatpush1.msra.mxu0 0.0
  %3682 = vmatprep.subr.mxu0 0.0
  %3683 = vmatpush1.msra.mxu0 0.0
  %3684 = vmatprep.subr.mxu0 0.0
  %3685 = vmatpush1.msra.mxu0 0.0
  %3686 = vmatprep.subr.mxu0 0.0
  %3687 = vmatpush1.msra.mxu0 0.0
  %3688 = vmatprep.subr.mxu0 0.0
  %3689 = vmatpush1.msra.mxu0 0.0
  %3690 = vmatprep.subr.mxu0 0.0
  %3691 = vmatpush1.msra.mxu0 0.0
  %3692 = vmatprep.subr.mxu0 0.0
  %3693 = vmatpush1.msra.mxu0 0.0
  %3694 = vmatprep.subr.mxu0 0.0
  %3695 = vmatpush1.msra.mxu0 0.0
  %3696 = vmatprep.subr.mxu0 0.0
  %3697 = vmatpush1.msra.mxu0 0.0
  %3698 = vmatprep.subr.mxu0 0.0
  %3699 = vmatpush1.msra.mxu0 0.0
  %3700 = vmatprep.subr.mxu0 0.0
  %3701 = vmatpush1.msra.mxu0 0.0
  %3702 = vmatprep.subr.mxu0 0.0
  %3703 = vmatpush1.msra.mxu0 0.0
  %3704 = vmatprep.subr.mxu0 0.0
  %3705 = vmatpush1.msra.mxu0 0.0
  %3706 = vmatprep.subr.mxu0 0.0
  %3707 = vmatpush1.msra.mxu0 0.0
  %3708 = vmatprep.subr.mxu0 0.0
  %3709 = vmatpush1.msra.mxu0 0.0
  %3710 = vmatprep.mubr.f32.mxu0 0.0
  %3711 = vmatmul.mubr.f32.gmra.mrb[0].mxu0 %v3263
  %v3712 = vpop.f32.mrb[0].mxu0
  %v3713 = vadd.f32 0.0, %v3712
  %v3714 = vpop.f32.mrb[0].mxu0
  %v3715 = vadd.f32 0.0, %v3714
  %3716 = vdwg.mxu0
  %v3717 = vadd.f32 %v3571, %v3642
  %v3718 = vadd.f32 %v3572, %v3644
  %v3719 = vadd.f32 %v3573, %v3713
  %v3720 = vadd.f32 %v3574, %v3715
  %v3721 = vmul.f32 %v3717, 0.5
  %v3722 = vmul.f32 %v3718, 0.5
  %v3723 = vmul.f32 %v3719, 0.5
  %v3724 = vtanh.pop %v3721
  %v3725 = vtanh.pop %v3722
  %v3726 = vtanh.pop %v3723
  %v3727 = vmul.f32 %v3724, 0.5
  %v3728 = vmul.f32 %v3725, 0.5
  %v3729 = vmul.f32 %v3726, 0.5
  %v3730 = vadd.f32 %v3727, 0.5
  %v3731 = vadd.f32 %v3728, 0.5
  %v3732 = vadd.f32 %v3729, 0.5
  %v3733 = vtanh.pop %v3720
  %v3734 = vmul.f32 %v3731, %v3261
  %v3735 = vmul.f32 %v3730, %v3733
  %v3736 = vadd.f32 %v3734, %v3735
  %v3737 = vtanh.pop %v3736
  %v3738 = vmul.f32 %v3732, %v3737
  %3739 = vmatprep.subr.mxu0 %v330
  %3740 = vmatpush1.msra.mxu0 %v329
  %3741 = vmatprep.subr.mxu0 %v334
  %3742 = vmatpush1.msra.mxu0 %v333
  %3743 = vmatprep.subr.mxu0 %v338
  %3744 = vmatpush1.msra.mxu0 %v337
  %3745 = vmatprep.subr.mxu0 %v342
  %3746 = vmatpush1.msra.mxu0 %v341
  %3747 = vmatprep.subr.mxu0 %v346
  %3748 = vmatpush1.msra.mxu0 %v345
  %3749 = vmatprep.subr.mxu0 %v350
  %3750 = vmatpush1.msra.mxu0 %v349
  %3751 = vmatprep.subr.mxu0 %v354
  %3752 = vmatpush1.msra.mxu0 %v353
  %3753 = vmatprep.subr.mxu0 %v358
  %3754 = vmatpush1.msra.mxu0 %v357
  %3755 = vmatprep.subr.mxu0 %v362
  %3756 = vmatpush1.msra.mxu0 %v361
  %3757 = vmatprep.subr.mxu0 %v366
  %3758 = vmatpush1.msra.mxu0 %v365
  %3759 = vmatprep.subr.mxu0 %v370
  %3760 = vmatpush1.msra.mxu0 %v369
  %3761 = vmatprep.subr.mxu0 %v374
  %3762 = vmatpush1.msra.mxu0 %v373
  %3763 = vmatprep.subr.mxu0 %v378
  %3764 = vmatpush1.msra.mxu0 %v377
  %3765 = vmatprep.subr.mxu0 %v382
  %3766 = vmatpush1.msra.mxu0 %v381
  %3767 = vmatprep.subr.mxu0 %v386
  %3768 = vmatpush1.msra.mxu0 %v385
  %3769 = vmatprep.subr.mxu0 %v390
  %3770 = vmatpush1.msra.mxu0 %v389
  %3771 = vmatprep.subr.mxu0 0.0
  %3772 = vmatpush1.msra.mxu0 0.0
  %3773 = vmatprep.subr.mxu0 0.0
  %3774 = vmatpush1.msra.mxu0 0.0
  %3775 = vmatprep.subr.mxu0 0.0
  %3776 = vmatpush1.msra.mxu0 0.0
  %3777 = vmatprep.subr.mxu0 0.0
  %3778 = vmatpush1.msra.mxu0 0.0
  %3779 = vmatprep.subr.mxu0 0.0
  %3780 = vmatpush1.msra.mxu0 0.0
  %3781 = vmatprep.subr.mxu0 0.0
  %3782 = vmatpush1.msra.mxu0 0.0
  %3783 = vmatprep.subr.mxu0 0.0
  %3784 = vmatpush1.msra.mxu0 0.0
  %3785 = vmatprep.subr.mxu0 0.0
  %3786 = vmatpush1.msra.mxu0 0.0
  %3787 = vmatprep.subr.mxu0 0.0
  %3788 = vmatpush1.msra.mxu0 0.0
  %3789 = vmatprep.subr.mxu0 0.0
  %3790 = vmatpush1.msra.mxu0 0.0
  %3791 = vmatprep.subr.mxu0 0.0
  %3792 = vmatpush1.msra.mxu0 0.0
  %3793 = vmatprep.subr.mxu0 0.0
  %3794 = vmatpush1.msra.mxu0 0.0
  %3795 = vmatprep.subr.mxu0 0.0
  %3796 = vmatpush1.msra.mxu0 0.0
  %3797 = vmatprep.subr.mxu0 0.0
  %3798 = vmatpush1.msra.mxu0 0.0
  %3799 = vmatprep.subr.mxu0 0.0
  %3800 = vmatpush1.msra.mxu0 0.0
  %3801 = vmatprep.subr.mxu0 0.0
  %3802 = vmatpush1.msra.mxu0 0.0
  %3803 = vmatprep.mubr.f32.mxu0 0.0
  %3804 = vmatmul.mubr.f32.gmra.mrb[0].mxu0 %v3569
  %v3805 = vpop.f32.mrb[0].mxu0
  %v3806 = vadd.f32 0.0, %v3805
  %v3807 = vpop.f32.mrb[0].mxu0
  %v3808 = vadd.f32 0.0, %v3807
  %3809 = vdwg.mxu0
  %3810 = vmatprep.subr.mxu0 %v332
  %3811 = vmatpush1.msra.mxu0 %v331
  %3812 = vmatprep.subr.mxu0 %v336
  %3813 = vmatpush1.msra.mxu0 %v335
  %3814 = vmatprep.subr.mxu0 %v340
  %3815 = vmatpush1.msra.mxu0 %v339
  %3816 = vmatprep.subr.mxu0 %v344
  %3817 = vmatpush1.msra.mxu0 %v343
  %3818 = vmatprep.subr.mxu0 %v348
  %3819 = vmatpush1.msra.mxu0 %v347
  %3820 = vmatprep.subr.mxu0 %v352
  %3821 = vmatpush1.msra.mxu0 %v351
  %3822 = vmatprep.subr.mxu0 %v356
  %3823 = vmatpush1.msra.mxu0 %v355
  %3824 = vmatprep.subr.mxu0 %v360
  %3825 = vmatpush1.msra.mxu0 %v359
  %3826 = vmatprep.subr.mxu0 %v364
  %3827 = vmatpush1.msra.mxu0 %v363
  %3828 = vmatprep.subr.mxu0 %v368
  %3829 = vmatpush1.msra.mxu0 %v367
  %3830 = vmatprep.subr.mxu0 %v372
  %3831 = vmatpush1.msra.mxu0 %v371
  %3832 = vmatprep.subr.mxu0 %v376
  %3833 = vmatpush1.msra.mxu0 %v375
  %3834 = vmatprep.subr.mxu0 %v380
  %3835 = vmatpush1.msra.mxu0 %v379
  %3836 = vmatprep.subr.mxu0 %v384
  %3837 = vmatpush1.msra.mxu0 %v383
  %3838 = vmatprep.subr.mxu0 %v388
  %3839 = vmatpush1.msra.mxu0 %v387
  %3840 = vmatprep.subr.mxu0 %v392
  %3841 = vmatpush1.msra.mxu0 %v391
  %3842 = vmatprep.subr.mxu0 0.0
  %3843 = vmatpush1.msra.mxu0 0.0
  %3844 = vmatprep.subr.mxu0 0.0
  %3845 = vmatpush1.msra.mxu0 0.0
  %3846 = vmatprep.subr.mxu0 0.0
  %3847 = vmatpush1.msra.mxu0 0.0
  %3848 = vmatprep.subr.mxu0 0.0
  %3849 = vmatpush1.msra.mxu0 0.0
  %3850 = vmatprep.subr.mxu0 0.0
  %3851 = vmatpush1.msra.mxu0 0.0
  %3852 = vmatprep.subr.mxu0 0.0
  %3853 = vmatpush1.msra.mxu0 0.0
  %3854 = vmatprep.subr.mxu0 0.0
  %3855 = vmatpush1.msra.mxu0 0.0
  %3856 = vmatprep.subr.mxu0 0.0
  %3857 = vmatpush1.msra.mxu0 0.0
  %3858 = vmatprep.subr.mxu0 0.0
  %3859 = vmatpush1.msra.mxu0 0.0
  %3860 = vmatprep.subr.mxu0 0.0
  %3861 = vmatpush1.msra.mxu0 0.0
  %3862 = vmatprep.subr.mxu0 0.0
  %3863 = vmatpush1.msra.mxu0 0.0
  %3864 = vmatprep.subr.mxu0 0.0
  %3865 = vmatpush1.msra.mxu0 0.0
  %3866 = vmatprep.subr.mxu0 0.0
  %3867 = vmatpush1.msra.mxu0 0.0
  %3868 = vmatprep.subr.mxu0 0.0
  %3869 = vmatpush1.msra.mxu0 0.0
  %3870 = vmatprep.subr.mxu0 0.0
  %3871 = vmatpush1.msra.mxu0 0.0
  %3872 = vmatprep.subr.mxu0 0.0
  %3873 = vmatpush1.msra.mxu0 0.0
  %3874 = vmatprep.mubr.f32.mxu0 0.0
  %3875 = vmatmul.mubr.f32.gmra.mrb[0].mxu0 %v3569
  %v3876 = vpop.f32.mrb[0].mxu0
  %v3877 = vadd.f32 0.0, %v3876
  %v3878 = vpop.f32.mrb[0].mxu0
  %v3879 = vadd.f32 0.0, %v3878
  %3880 = vdwg.mxu0
  %3881 = vmatprep.subr.mxu0 %v266
  %3882 = vmatpush1.msra.mxu0 %v265
  %3883 = vmatprep.subr.mxu0 %v270
  %3884 = vmatpush1.msra.mxu0 %v269
  %3885 = vmatprep.subr.mxu0 %v274
  %3886 = vmatpush1.msra.mxu0 %v273
  %3887 = vmatprep.subr.mxu0 %v278
  %3888 = vmatpush1.msra.mxu0 %v277
  %3889 = vmatprep.subr.mxu0 %v282
  %3890 = vmatpush1.msra.mxu0 %v281
  %3891 = vmatprep.subr.mxu0 %v286
  %3892 = vmatpush1.msra.mxu0 %v285
  %3893 = vmatprep.subr.mxu0 %v290
  %3894 = vmatpush1.msra.mxu0 %v289
  %3895 = vmatprep.subr.mxu0 %v294
  %3896 = vmatpush1.msra.mxu0 %v293
  %3897 = vmatprep.subr.mxu0 %v298
  %3898 = vmatpush1.msra.mxu0 %v297
  %3899 = vmatprep.subr.mxu0 %v302
  %3900 = vmatpush1.msra.mxu0 %v301
  %3901 = vmatprep.subr.mxu0 %v306
  %3902 = vmatpush1.msra.mxu0 %v305
  %3903 = vmatprep.subr.mxu0 %v310
  %3904 = vmatpush1.msra.mxu0 %v309
  %3905 = vmatprep.subr.mxu0 %v314
  %3906 = vmatpush1.msra.mxu0 %v313
  %3907 = vmatprep.subr.mxu0 %v318
  %3908 = vmatpush1.msra.mxu0 %v317
  %3909 = vmatprep.subr.mxu0 %v322
  %3910 = vmatpush1.msra.mxu0 %v321
  %3911 = vmatprep.subr.mxu0 %v326
  %3912 = vmatpush1.msra.mxu0 %v325
  %3913 = vmatprep.subr.mxu0 0.0
  %3914 = vmatpush1.msra.mxu0 0.0
  %3915 = vmatprep.subr.mxu0 0.0
  %3916 = vmatpush1.msra.mxu0 0.0
  %3917 = vmatprep.subr.mxu0 0.0
  %3918 = vmatpush1.msra.mxu0 0.0
  %3919 = vmatprep.subr.mxu0 0.0
  %3920 = vmatpush1.msra.mxu0 0.0
  %3921 = vmatprep.subr.mxu0 0.0
  %3922 = vmatpush1.msra.mxu0 0.0
  %3923 = vmatprep.subr.mxu0 0.0
  %3924 = vmatpush1.msra.mxu0 0.0
  %3925 = vmatprep.subr.mxu0 0.0
  %3926 = vmatpush1.msra.mxu0 0.0
  %3927 = vmatprep.subr.mxu0 0.0
  %3928 = vmatpush1.msra.mxu0 0.0
  %3929 = vmatprep.subr.mxu0 0.0
  %3930 = vmatpush1.msra.mxu0 0.0
  %3931 = vmatprep.subr.mxu0 0.0
  %3932 = vmatpush1.msra.mxu0 0.0
  %3933 = vmatprep.subr.mxu0 0.0
  %3934 = vmatpush1.msra.mxu0 0.0
  %3935 = vmatprep.subr.mxu0 0.0
  %3936 = vmatpush1.msra.mxu0 0.0
  %3937 = vmatprep.subr.mxu0 0.0
  %3938 = vmatpush1.msra.mxu0 0.0
  %3939 = vmatprep.subr.mxu0 0.0
  %3940 = vmatpush1.msra.mxu0 0.0
  %3941 = vmatprep.subr.mxu0 0.0
  %3942 = vmatpush1.msra.mxu0 0.0
  %3943 = vmatprep.subr.mxu0 0.0
  %3944 = vmatpush1.msra.mxu0 0.0
  %3945 = vmatprep.mubr.f32.mxu0 0.0
  %3946 = vmatmul.mubr.f32.gmra.mrb[0].mxu0 %v3738
  %v3947 = vpop.f32.mrb[0].mxu0
  %v3948 = vadd.f32 %v3806, %v3947
  %v3949 = vpop.f32.mrb[0].mxu0
  %v3950 = vadd.f32 %v3808, %v3949
  %3951 = vdwg.mxu0
  %3952 = vmatprep.subr.mxu0 %v268
  %3953 = vmatpush1.msra.mxu0 %v267
  %3954 = vmatprep.subr.mxu0 %v272
  %3955 = vmatpush1.msra.mxu0 %v271
  %3956 = vmatprep.subr.mxu0 %v276
  %3957 = vmatpush1.msra.mxu0 %v275
  %3958 = vmatprep.subr.mxu0 %v280
  %3959 = vmatpush1.msra.mxu0 %v279
  %3960 = vmatprep.subr.mxu0 %v284
  %3961 = vmatpush1.msra.mxu0 %v283
  %3962 = vmatprep.subr.mxu0 %v288
  %3963 = vmatpush1.msra.mxu0 %v287
  %3964 = vmatprep.subr.mxu0 %v292
  %3965 = vmatpush1.msra.mxu0 %v291
  %3966 = vmatprep.subr.mxu0 %v296
  %3967 = vmatpush1.msra.mxu0 %v295
  %3968 = vmatprep.subr.mxu0 %v300
  %3969 = vmatpush1.msra.mxu0 %v299
  %3970 = vmatprep.subr.mxu0 %v304
  %3971 = vmatpush1.msra.mxu0 %v303
  %3972 = vmatprep.subr.mxu0 %v308
  %3973 = vmatpush1.msra.mxu0 %v307
  %3974 = vmatprep.subr.mxu0 %v312
  %3975 = vmatpush1.msra.mxu0 %v311
  %3976 = vmatprep.subr.mxu0 %v316
  %3977 = vmatpush1.msra.mxu0 %v315
  %3978 = vmatprep.subr.mxu0 %v320
  %3979 = vmatpush1.msra.mxu0 %v319
  %3980 = vmatprep.subr.mxu0 %v324
  %3981 = vmatpush1.msra.mxu0 %v323
  %3982 = vmatprep.subr.mxu0 %v328
  %3983 = vmatpush1.msra.mxu0 %v327
  %3984 = vmatprep.subr.mxu0 0.0
  %3985 = vmatpush1.msra.mxu0 0.0
  %3986 = vmatprep.subr.mxu0 0.0
  %3987 = vmatpush1.msra.mxu0 0.0
  %3988 = vmatprep.subr.mxu0 0.0
  %3989 = vmatpush1.msra.mxu0 0.0
  %3990 = vmatprep.subr.mxu0 0.0
  %3991 = vmatpush1.msra.mxu0 0.0
  %3992 = vmatprep.subr.mxu0 0.0
  %3993 = vmatpush1.msra.mxu0 0.0
  %3994 = vmatprep.subr.mxu0 0.0
  %3995 = vmatpush1.msra.mxu0 0.0
  %3996 = vmatprep.subr.mxu0 0.0
  %3997 = vmatpush1.msra.mxu0 0.0
  %3998 = vmatprep.subr.mxu0 0.0
  %3999 = vmatpush1.msra.mxu0 0.0
  %4000 = vmatprep.subr.mxu0 0.0
  %4001 = vmatpush1.msra.mxu0 0.0
  %4002 = vmatprep.subr.mxu0 0.0
  %4003 = vmatpush1.msra.mxu0 0.0
  %4004 = vmatprep.subr.mxu0 0.0
  %4005 = vmatpush1.msra.mxu0 0.0
  %4006 = vmatprep.subr.mxu0 0.0
  %4007 = vmatpush1.msra.mxu0 0.0
  %4008 = vmatprep.subr.mxu0 0.0
  %4009 = vmatpush1.msra.mxu0 0.0
  %4010 = vmatprep.subr.mxu0 0.0
  %4011 = vmatpush1.msra.mxu0 0.0
  %4012 = vmatprep.subr.mxu0 0.0
  %4013 = vmatpush1.msra.mxu0 0.0
  %4014 = vmatprep.subr.mxu0 0.0
  %4015 = vmatpush1.msra.mxu0 0.0
  %4016 = vmatprep.mubr.f32.mxu0 0.0
  %4017 = vmatmul.mubr.f32.gmra.mrb[0].mxu0 %v3738
  %v4018 = vpop.f32.mrb[0].mxu0
  %v4019 = vadd.f32 %v3877, %v4018
  %v4020 = vpop.f32.mrb[0].mxu0
  %v4021 = vadd.f32 %v3879, %v4020
  %4022 = vdwg.mxu0
  %v4023 = vadd.f32 %v3948, %v681
  %v4024 = vadd.f32 %v3950, %v685
  %v4025 = vadd.f32 %v4019, %v689
  %v4026 = vadd.f32 %v4021, %v693
  %v4027 = vmul.f32 %v4023, 0.5
  %v4028 = vmul.f32 %v4024, 0.5
  %v4029 = vmul.f32 %v4025, 0.5
  %v4030 = vtanh.pop %v4027
  %v4031 = vtanh.pop %v4028
  %v4032 = vtanh.pop %v4029
  %v4033 = vmul.f32 %v4030, 0.5
  %v4034 = vmul.f32 %v4031, 0.5
  %v4035 = vmul.f32 %v4032, 0.5
  %v4036 = vadd.f32 %v4033, 0.5
  %v4037 = vadd.f32 %v4034, 0.5
  %v4038 = vadd.f32 %v4035, 0.5
  %v4039 = vtanh.pop %v4026
  %v4040 = vmul.f32 %v4037, %v3567
  %v4041 = vmul.f32 %v4036, %v4039
  %v4042 = vadd.f32 %v4040, %v4041
  %v4043 = vtanh.pop %v4042
  %v4044 = vmul.f32 %v4038, %v4043
  %4045 = vst [vmem:[#allocation2] sm:$0xff] %v3738
  %4046 = vst [vmem:[#allocation3] sm:$0xff] %v3736
  %4047 = vst [vmem:[#allocation4] sm:$0xff] %v4044
  %4048 = vst [vmem:[#allocation5] sm:$0xff] %v4042
  // Predicated region
  $region26: #{encoder_forward.3} parent=0 // pred_check
    %p4049 = pneg %p20
  $region27: #{encoder_forward.3} parent=0 // pred_check_branch
    %4051 = sbr.rel (%p4049) target = $region29
  $region28: #{encoder_forward.3} parent=0 // pred_region
    %4052 = vst [vmem:[%s5] sm:$0xff] %v4044
  $region29: #{encoder_forward.3} parent=0 // pred_fallthru
    _
  // Predicated region
  $region30: #{encoder_forward.3} parent=0 // pred_check
    _
  $region31: #{encoder_forward.3} parent=0 // pred_check_branch
    %4054 = sbr.rel (0) target = $region33
  $region32: #{encoder_forward.3} parent=0 // pred_region
    _
  $region33: #{encoder_forward.3} parent=0 // pred_fallthru
    _
  // Predicated region
  $region34: #{encoder_forward.3} parent=0 // pred_check
    _
  $region35: #{encoder_forward.3} parent=0 // pred_check_branch
    %4056 = sbr.rel (0) target = $region37
  $region36: #{encoder_forward.3} parent=0 // pred_region
    _
  $region37: #{encoder_forward.3} parent=0 // pred_fallthru
    _

</llo_original>
